<compile_context>
chip_gen: v5e
topology: v5e:2x2
jax: 0.10.0
libtpu: 0.0.40
codegen_flags: <defaults>
</compile_context>

<pallas_src>
import functools
import math

import jax
import jax.numpy as jnp
from jax.experimental import pallas as pl
from jax.experimental.pallas import tpu as pltpu


def _round_up(x, m):
    return ((x + m - 1) // m) * m


def _pick_tile(total, max_lanes=2048):
    """Largest multiple of 128 that divides `total` and is <= max_lanes."""
    if total <= max_lanes:
        return total
    m = total // 128
    best = 1
    for d in range(1, max_lanes // 128 + 1):
        if m % d == 0:
            best = d
    return 128 * best


def _default_compute_dtype():
    """bf16 MXU operands by default on v5e (its MXU has no native f32 path)."""
    try:
        kind = jax.devices()[0].device_kind.lower()
    except Exception:
        return jnp.float32
    if "v5 lite" in kind or "v5e" in kind or "v5litepod" in kind:
        return jnp.bfloat16
    return jnp.float32


def _conv2d_glu_kernel(x_ref, *refs, K, D, C, Wp, TL, nt, merged):
    """Fused dilated 'same' Conv2d (+bias) + GLU for one batch element.

    x_ref : (1, C, Lin)  zero-padded input, spatial flattened with row stride Wp.
    merged refs: w (K, 2C, K*C), b (2C, 1), o (1, C, Lout),
                 rhs scratch (K*C, TL), acc scratch (2C, TL) f32.
    split  refs: wo/wg (K, C, K*C), bo/bg (C, 1), o (1, C, Lout),
                 rhs scratch (K*C, TL), acc_o/acc_g scratch (C, TL) f32.
    """
    if merged:
        w_ref, b_ref, o_ref, rhs_ref, acc_ref = refs
        lhs_refs, acc_refs = (w_ref,), (acc_ref,)
    else:
        wo_ref, wg_ref, bo_ref, bg_ref, o_ref, rhs_ref, ao_ref, ag_ref = refs
        lhs_refs, acc_refs = (wo_ref, wg_ref), (ao_ref, ag_ref)

    for t in range(nt):                       # static tile loop over output lanes
        off = t * TL
        for kh in range(K):
            base = off + kh * D * Wp
            # Per-kh partial im2col: all kw taps of this kernel row; every tap
            # is a pure flat shift of the padded image (static offsets, loads
            # straight from the input ref -- the full image is never pulled
            # into vregs).
            for kw in range(K):
                rhs_ref[kw * C:(kw + 1) * C, :] = x_ref[0, :, pl.ds(base + kw * D, TL)]
            rhs = rhs_ref[...]                # (K*C, TL)
            # One MXU contraction per GLU half (or one merged (2C, .) matmul),
            # accumulated in f32 across the K kernel rows.
            for lhs_ref, a_ref in zip(lhs_refs, acc_refs):
                part = jnp.dot(lhs_ref[kh], rhs, preferred_element_type=jnp.float32)
                if kh == 0:
                    a_ref[...] = part
                else:
                    a_ref[...] += part
        # GLU epilogue in f32 (sigmoid on the EUP); lane-dense 128-aligned store.
        if merged:
            acc = acc_ref[...] + b_ref[...]                 # (2C, TL)
            out = acc[:C] * jax.nn.sigmoid(acc[C:])         # sublane-aligned split
        else:
            out = ((ao_ref[...] + bo_ref[...])
                   * jax.nn.sigmoid(ag_ref[...] + bg_ref[...]))
        o_ref[0, :, pl.ds(off, TL)] = out.astype(o_ref.dtype)


def conv2d_glu(x, w, b, *, kernel_size, dilation, compute_dtype=None,
               tile_lanes=None):
    """GLU(Conv2d(x)): x (N, C, H, W), w (2C, C, K, K), b (2C,) -> (N, C, H, W)."""
    N, C, H, W = x.shape
    K, D = kernel_size, dilation
    p = (K + (K - 1) * (D - 1)) // 2            # covD's padding argument ("same")

    if compute_dtype is None:
        compute_dtype = _default_compute_dtype()

    # Row stride of the flattened padded image.  Large images: Wp % 128 == 0 so
    # the kh*D*Wp part of every tap shift is lane aligned.  Small images: the
    # minimal padding that still makes the output slab H*Wp a multiple of 128.
    if W >= 100:
        Wp = _round_up(W + 2 * p, 128)
    else:
        step = 128 // math.gcd(H, 128)
        Wp = _round_up(W + 2 * p, step)
    Lout = H * Wp
    assert Lout % 128 == 0

    TL = _pick_tile(Lout) if tile_lanes is None else tile_lanes
    assert TL % 128 == 0 and Lout % TL == 0
    nt = Lout // TL

    # Enough slack rows that every tap slice stays inside the padded block
    # (Pallas does no bounds check on VMEM refs -- review correctness concern).
    shift_max = (K - 1) * D * Wp + (K - 1) * D
    need = Lout + shift_max                     # exclusive upper read bound
    rows = max(H + 2 * p, -(-need // Wp))
    Lin = rows * Wp
    assert shift_max + Lout <= Lin and Wp >= W + 2 * p and rows >= H + p

    x_pad = jnp.pad(x, ((0, 0), (0, 0), (p, rows - H - p), (p, Wp - W - p)))
    x_flat = x_pad.reshape(N, C, Lin)

    # Per-kh weight blocks: w_r[kh, o, kw*C + c] = w[o, c, kh, kw].
    w_r = jnp.transpose(w, (2, 0, 3, 1)).reshape(K, 2 * C, K * C)

    if compute_dtype != jnp.float32:            # bf16 operands for the MXU
        x_flat = x_flat.astype(compute_dtype)
        w_r = w_r.astype(compute_dtype)

    merged = (C % 8 == 0)        # sublane-aligned GLU split of the f32 accumulator

    op = x_flat.dtype.itemsize
    cost = pl.CostEstimate(
        flops=2 * N * (2 * C) * (K * K * C) * Lout,
        transcendentals=N * C * Lout,
        bytes_accessed=(N * C * Lin + K * (2 * C) * (K * C)) * op
                       + 2 * C * 4 + N * C * Lout * x.dtype.itemsize)

    kernel = functools.partial(_conv2d_glu_kernel, K=K, D=D, C=C, Wp=Wp,
                               TL=TL, nt=nt, merged=merged)
    common = dict(
        out_shape=jax.ShapeDtypeStruct((N, C, Lout), x.dtype),
        grid=(N,),
        out_specs=pl.BlockSpec((1, C, Lout), lambda n: (n, 0, 0)),
        compiler_params=pltpu.CompilerParams(
            dimension_semantics=("parallel",),
            vmem_limit_bytes=48 * 1024 * 1024),   # ~75% of v7x's 64 MiB
        cost_estimate=cost,
    )
    x_spec = pl.BlockSpec((1, C, Lin), lambda n: (n, 0, 0))
    b32 = b.astype(jnp.float32)

    if merged:
        y_flat = pl.pallas_call(
            kernel,
            in_specs=[x_spec,
                      pl.BlockSpec((K, 2 * C, K * C), lambda n: (0, 0, 0)),
                      pl.BlockSpec((2 * C, 1), lambda n: (0, 0))],
            scratch_shapes=[pltpu.VMEM((K * C, TL), x_flat.dtype),
                            pltpu.VMEM((2 * C, TL), jnp.float32)],
            **common,
        )(x_flat, w_r, b32.reshape(2 * C, 1))
    else:
        y_flat = pl.pallas_call(
            kernel,
            in_specs=[x_spec,
                      pl.BlockSpec((K, C, K * C), lambda n: (0, 0, 0)),
                      pl.BlockSpec((K, C, K * C), lambda n: (0, 0, 0)),
                      pl.BlockSpec((C, 1), lambda n: (0, 0)),
                      pl.BlockSpec((C, 1), lambda n: (0, 0))],
            scratch_shapes=[pltpu.VMEM((K * C, TL), x_flat.dtype),
                            pltpu.VMEM((C, TL), jnp.float32),
                            pltpu.VMEM((C, TL), jnp.float32)],
            **common,
        )(x_flat, w_r[:, :C], w_r[:, C:],
          b32[:C].reshape(C, 1), b32[C:].reshape(C, 1))

    # Layout plumbing only: lane-dense (H, Wp) slab -> valid (H, W) window.
    return y_flat.reshape(N, C, H, Wp)[:, :, :, :W]


def switch_norm_2d(x, *, gamma, beta, mean_w, var_w, eps=1e-5):
    # TODO(synk): SwitchNorm2d is not defined in the provided source; this follows
    # the canonical switchable-norm reference (IN/LN/BN blend, training-mode batch
    # statistics, default params).  Its cross-batch/global reductions do not map
    # onto the per-sample grid of the fused conv kernel, so it stays in plain JAX.
    N, C, H, W = x.shape
    xf = x.reshape(N, C, H * W)
    mean_in = jnp.mean(xf, axis=-1, keepdims=True)              # (N, C, 1)
    var_in = jnp.var(xf, axis=-1, keepdims=True, ddof=1)        # torch .var() default
    mean_ln = jnp.mean(mean_in, axis=1, keepdims=True)          # (N, 1, 1)
    temp = var_in + mean_in ** 2
    var_ln = jnp.mean(temp, axis=1, keepdims=True) - mean_ln ** 2
    mean_bn = jnp.mean(mean_in, axis=0, keepdims=True)          # (1, C, 1)
    var_bn = jnp.mean(temp, axis=0, keepdims=True) - mean_bn ** 2
    mw = jax.nn.softmax(mean_w)
    vw = jax.nn.softmax(var_w)
    mean = mw[0] * mean_in + mw[1] * mean_ln + mw[2] * mean_bn
    var = vw[0] * var_in + vw[1] * var_ln + vw[2] * var_bn
    xf = (xf - mean) / jnp.sqrt(var + eps)
    return xf.reshape(N, C, H, W) * gamma.reshape(1, C, 1, 1) + beta.reshape(1, C, 1, 1)


def covd_forward(x, params, *, dilation, compute_dtype=None, tile_lanes=None):
    """Mirrors covD.forward: x = x + n1(GLU(C1(x))); x = x + n2(GLU(C2(x))).

    (C3/C4/n3/n4 exist in covD.__init__ but are never used in forward.)
    """
    for i, k_size in ((1, 3), (2, 5)):
        w, b = params[f"conv{i}"]
        g = conv2d_glu(x, w, b, kernel_size=k_size, dilation=dilation,
                       compute_dtype=compute_dtype, tile_lanes=tile_lanes)
        x = x + switch_norm_2d(g, **params[f"norm{i}"])
    return x


# ----------------------- pure-JAX reference (lax conv) -----------------------

def _conv2d_glu_ref(x, w, b, *, kernel_size, dilation):
    p = (kernel_size + (kernel_size - 1) * (dilation - 1)) // 2
    y = jax.lax.conv_general_dilated(
        x, w, window_strides=(1, 1), padding=[(p, p), (p, p)],
        rhs_dilation=(dilation, dilation),
        dimension_numbers=("NCHW", "OIHW", "NCHW"),
        precision=jax.lax.Precision.HIGHEST)
    y = y + b.reshape(1, -1, 1, 1)
    out, gate = jnp.split(y, 2, axis=1)
    return out * jax.nn.sigmoid(gate)


def covd_forward_ref(x, params, *, dilation):
    for i, k_size in ((1, 3), (2, 5)):
        w, b = params[f"conv{i}"]
        g = _conv2d_glu_ref(x, w, b, kernel_size=k_size, dilation=dilation)
        x = x + switch_norm_2d(g, **params[f"norm{i}"])
    return x


def init_params(key, C):
    """Conv2d-style init (uniform +-1/sqrt(fan_in)); default SwitchNorm2d params."""
    params = {}
    for i, k_size in ((1, 3), (2, 5)):
        key, kw, kb = jax.random.split(key, 3)
        bound = 1.0 / math.sqrt(C * k_size * k_size)
        params[f"conv{i}"] = (
            jax.random.uniform(kw, (2 * C, C, k_size, k_size), jnp.float32,
                               -bound, bound),
            jax.random.uniform(kb, (2 * C,), jnp.float32, -bound, bound))
        params[f"norm{i}"] = dict(
            gamma=jnp.ones((C,), jnp.float32), beta=jnp.zeros((C,), jnp.float32),
            mean_w=jnp.ones((3,), jnp.float32), var_w=jnp.ones((3,), jnp.float32))
    return params


if __name__ == "__main__":
    key = jax.random.PRNGKey(0)
    N, H, W, D = 2, 16, 16, 2
    fwd = jax.jit(covd_forward,
                  static_argnames=("dilation", "compute_dtype", "tile_lanes"))

    # 1) C=4 (tiny / unaligned channels -> split GLU path), f32, and an explicit
    #    128-lane output tile so the in-kernel Lout tiling is exercised (3 tiles).
    C = 4
    kx, kp = jax.random.split(key)
    x = jax.random.normal(kx, (N, C, H, W), jnp.float32)
    params = init_params(kp, C)
    y = jax.block_until_ready(
        fwd(x, params, dilation=D, compute_dtype=jnp.float32, tile_lanes=128))
    y_ref = covd_forward_ref(x, params, dilation=D)
    assert y.shape == (N, C, H, W)
    assert jnp.allclose(y, y_ref, atol=1e-3, rtol=1e-3), "f32 split-path mismatch"

    # 2) Same inputs with bf16 MXU operands (the v5e default), auto tile size.
    y_bf16 = jax.block_until_ready(
        fwd(x, params, dilation=D, compute_dtype=jnp.bfloat16))
    assert jnp.allclose(y_bf16, y_ref, atol=1e-1, rtol=1e-1), "bf16 mismatch"

    # 3) C=8 (sublane-aligned channels -> merged single-matmul GLU path), f32.
    C = 8
    kx2, kp2 = jax.random.split(kp)
    x8 = jax.random.normal(kx2, (N, C, H, W), jnp.float32)
    params8 = init_params(kp2, C)
    y8 = jax.block_until_ready(
        fwd(x8, params8, dilation=D, compute_dtype=jnp.float32))
    y8_ref = covd_forward_ref(x8, params8, dilation=D)
    assert jnp.allclose(y8, y8_ref, atol=1e-3, rtol=1e-3), "f32 merged-path mismatch"

    print("KERNEL_OK")
</pallas_src>

<mosaic_0001>
module attributes {stable_mosaic.version = 11 : i64} {
  func.func @_conv2d_glu_kernel(%arg0: i32, %arg1: memref<1x4x504xf32, #tpu.memory_space<vmem>>, %arg2: memref<3x4x12xf32, #tpu.memory_space<vmem>>, %arg3: memref<3x4x12xf32, #tpu.memory_space<vmem>>, %arg4: memref<4x1xf32, #tpu.memory_space<vmem>>, %arg5: memref<4x1xf32, #tpu.memory_space<vmem>>, %arg6: memref<1x4x384xf32, #tpu.memory_space<vmem>>, %arg7: memref<12x128xf32, #tpu.memory_space<vmem>>, %arg8: memref<4x128xf32, #tpu.memory_space<vmem>>, %arg9: memref<4x128xf32, #tpu.memory_space<vmem>>) attributes {dimension_semantics = [#tpu.dimension_semantics<parallel>], iteration_bounds = array<i64: 2>, scalar_prefetch = 0 : i64, scratch_operands = 3 : i64, tpu.core_type = #tpu.core_type<tc>, window_params = [{transform_indices = @transform_0, window_bounds = array<i64: 1, 4, 504>}, {pipeline_mode = #tpu.pipeline_mode<synchronous>, transform_indices = @transform_1, window_bounds = array<i64: 3, 4, 12>}, {pipeline_mode = #tpu.pipeline_mode<synchronous>, transform_indices = @transform_2, window_bounds = array<i64: 3, 4, 12>}, {pipeline_mode = #tpu.pipeline_mode<synchronous>, transform_indices = @transform_3, window_bounds = array<i64: 4, 1>}, {pipeline_mode = #tpu.pipeline_mode<synchronous>, transform_indices = @transform_4, window_bounds = array<i64: 4, 1>}, {transform_indices = @transform_5, window_bounds = array<i64: 1, 4, 384>}]} {
    %c0 = arith.constant 0 : index
    %c0_0 = arith.constant 0 : index
    %c0_1 = arith.constant 0 : index
    %0 = vector.load %arg1[%c0, %c0_0, %c0_1] : memref<1x4x504xf32, #tpu.memory_space<vmem>>, vector<1x4x128xf32>
    %1 = vector.shape_cast %0 : vector<1x4x128xf32> to vector<4x128xf32>
    %c0_2 = arith.constant 0 : index
    %c0_3 = arith.constant 0 : index
    %2 = vector.load %arg7[%c0_2, %c0_3] : memref<12x128xf32, #tpu.memory_space<vmem>>, vector<4x128xf32>
    tpu.vector_store %arg7[%c0_2, %c0_3], %1 {strides = array<i32>} : memref<12x128xf32, #tpu.memory_space<vmem>>, vector<4x128xf32>,
    %c0_4 = arith.constant 0 : index
    %c0_5 = arith.constant 0 : index
    %c2 = arith.constant 2 : index
    %3 = vector.load %arg1[%c0_4, %c0_5, %c2] : memref<1x4x504xf32, #tpu.memory_space<vmem>>, vector<1x4x128xf32>
    %4 = vector.shape_cast %3 : vector<1x4x128xf32> to vector<4x128xf32>
    %c4 = arith.constant 4 : index
    %c0_6 = arith.constant 0 : index
    %5 = vector.load %arg7[%c4, %c0_6] : memref<12x128xf32, #tpu.memory_space<vmem>>, vector<4x128xf32>
    tpu.vector_store %arg7[%c4, %c0_6], %4 {strides = array<i32>} : memref<12x128xf32, #tpu.memory_space<vmem>>, vector<4x128xf32>,
    %c0_7 = arith.constant 0 : index
    %c0_8 = arith.constant 0 : index
    %c4_9 = arith.constant 4 : index
    %6 = vector.load %arg1[%c0_7, %c0_8, %c4_9] : memref<1x4x504xf32, #tpu.memory_space<vmem>>, vector<1x4x128xf32>
    %7 = vector.shape_cast %6 : vector<1x4x128xf32> to vector<4x128xf32>
    %c8 = arith.constant 8 : index
    %c0_10 = arith.constant 0 : index
    %8 = vector.load %arg7[%c8, %c0_10] : memref<12x128xf32, #tpu.memory_space<vmem>>, vector<4x128xf32>
    tpu.vector_store %arg7[%c8, %c0_10], %7 {strides = array<i32>} : memref<12x128xf32, #tpu.memory_space<vmem>>, vector<4x128xf32>,
    %c0_11 = arith.constant 0 : index
    %c0_12 = arith.constant 0 : index
    %9 = vector.load %arg7[%c0_11, %c0_12] : memref<12x128xf32, #tpu.memory_space<vmem>>, vector<12x128xf32>
    %c0_13 = arith.constant 0 : index
    %c0_14 = arith.constant 0 : index
    %c0_15 = arith.constant 0 : index
    %10 = vector.load %arg2[%c0_13, %c0_14, %c0_15] : memref<3x4x12xf32, #tpu.memory_space<vmem>>, vector<1x4x12xf32>
    %11 = vector.shape_cast %10 : vector<1x4x12xf32> to vector<4x12xf32>
    %cst = arith.constant dense<0.000000e+00> : vector<4x128xf32>
    %12 = tpu.matmul %11, %9, %cst {dimension_numbers = #tpu.dot_dimension_numbers<[1], [0], [0], [1], [0, 0, 1, 1], [], []>} : vector<4x12xf32>, vector<12x128xf32>, vector<4x128xf32> -> vector<4x128xf32>
    %c0_16 = arith.constant 0 : index
    %c0_17 = arith.constant 0 : index
    %13 = vector.load %arg8[%c0_16, %c0_17] : memref<4x128xf32, #tpu.memory_space<vmem>>, vector<4x128xf32>
    tpu.vector_store %arg8[%c0_16, %c0_17], %12 {strides = array<i32>} : memref<4x128xf32, #tpu.memory_space<vmem>>, vector<4x128xf32>,
    %c0_18 = arith.constant 0 : index
    %c0_19 = arith.constant 0 : index
    %c0_20 = arith.constant 0 : index
    %14 = vector.load %arg3[%c0_18, %c0_19, %c0_20] : memref<3x4x12xf32, #tpu.memory_space<vmem>>, vector<1x4x12xf32>
    %15 = vector.shape_cast %14 : vector<1x4x12xf32> to vector<4x12xf32>
    %cst_21 = arith.constant dense<0.000000e+00> : vector<4x128xf32>
    %16 = tpu.matmul %15, %9, %cst_21 {dimension_numbers = #tpu.dot_dimension_numbers<[1], [0], [0], [1], [0, 0, 1, 1], [], []>} : vector<4x12xf32>, vector<12x128xf32>, vector<4x128xf32> -> vector<4x128xf32>
    %c0_22 = arith.constant 0 : index
    %c0_23 = arith.constant 0 : index
    %17 = vector.load %arg9[%c0_22, %c0_23] : memref<4x128xf32, #tpu.memory_space<vmem>>, vector<4x128xf32>
    tpu.vector_store %arg9[%c0_22, %c0_23], %16 {strides = array<i32>} : memref<4x128xf32, #tpu.memory_space<vmem>>, vector<4x128xf32>,
    %c0_24 = arith.constant 0 : index
    %c0_25 = arith.constant 0 : index
    %c48 = arith.constant 48 : index
    %18 = vector.load %arg1[%c0_24, %c0_25, %c48] : memref<1x4x504xf32, #tpu.memory_space<vmem>>, vector<1x4x128xf32>
    %19 = vector.shape_cast %18 : vector<1x4x128xf32> to vector<4x128xf32>
    %c0_26 = arith.constant 0 : index
    %c0_27 = arith.constant 0 : index
    %20 = vector.load %arg7[%c0_26, %c0_27] : memref<12x128xf32, #tpu.memory_space<vmem>>, vector<4x128xf32>
    tpu.vector_store %arg7[%c0_26, %c0_27], %19 {strides = array<i32>} : memref<12x128xf32, #tpu.memory_space<vmem>>, vector<4x128xf32>,
    %c0_28 = arith.constant 0 : index
    %c0_29 = arith.constant 0 : index
    %c50 = arith.constant 50 : index
    %21 = vector.load %arg1[%c0_28, %c0_29, %c50] : memref<1x4x504xf32, #tpu.memory_space<vmem>>, vector<1x4x128xf32>
    %22 = vector.shape_cast %21 : vector<1x4x128xf32> to vector<4x128xf32>
    %c4_30 = arith.constant 4 : index
    %c0_31 = arith.constant 0 : index
    %23 = vector.load %arg7[%c4_30, %c0_31] : memref<12x128xf32, #tpu.memory_space<vmem>>, vector<4x128xf32>
    tpu.vector_store %arg7[%c4_30, %c0_31], %22 {strides = array<i32>} : memref<12x128xf32, #tpu.memory_space<vmem>>, vector<4x128xf32>,
    %c0_32 = arith.constant 0 : index
    %c0_33 = arith.constant 0 : index
    %c52 = arith.constant 52 : index
    %24 = vector.load %arg1[%c0_32, %c0_33, %c52] : memref<1x4x504xf32, #tpu.memory_space<vmem>>, vector<1x4x128xf32>
    %25 = vector.shape_cast %24 : vector<1x4x128xf32> to vector<4x128xf32>
    %c8_34 = arith.constant 8 : index
    %c0_35 = arith.constant 0 : index
    %26 = vector.load %arg7[%c8_34, %c0_35] : memref<12x128xf32, #tpu.memory_space<vmem>>, vector<4x128xf32>
    tpu.vector_store %arg7[%c8_34, %c0_35], %25 {strides = array<i32>} : memref<12x128xf32, #tpu.memory_space<vmem>>, vector<4x128xf32>,
    %c0_36 = arith.constant 0 : index
    %c0_37 = arith.constant 0 : index
    %27 = vector.load %arg7[%c0_36, %c0_37] : memref<12x128xf32, #tpu.memory_space<vmem>>, vector<12x128xf32>
    %c1 = arith.constant 1 : index
    %c0_38 = arith.constant 0 : index
    %c0_39 = arith.constant 0 : index
    %28 = vector.load %arg2[%c1, %c0_38, %c0_39] : memref<3x4x12xf32, #tpu.memory_space<vmem>>, vector<1x4x12xf32>
    %29 = vector.shape_cast %28 : vector<1x4x12xf32> to vector<4x12xf32>
    %cst_40 = arith.constant dense<0.000000e+00> : vector<4x128xf32>
    %30 = tpu.matmul %29, %27, %cst_40 {dimension_numbers = #tpu.dot_dimension_numbers<[1], [0], [0], [1], [0, 0, 1, 1], [], []>} : vector<4x12xf32>, vector<12x128xf32>, vector<4x128xf32> -> vector<4x128xf32>
    %c0_41 = arith.constant 0 : index
    %c0_42 = arith.constant 0 : index
    %31 = vector.load %arg8[%c0_41, %c0_42] : memref<4x128xf32, #tpu.memory_space<vmem>>, vector<4x128xf32>
    %32 = arith.addf %31, %30 : vector<4x128xf32>
    %c0_43 = arith.constant 0 : index
    %c0_44 = arith.constant 0 : index
    %33 = vector.load %arg8[%c0_43, %c0_44] : memref<4x128xf32, #tpu.memory_space<vmem>>, vector<4x128xf32>
    tpu.vector_store %arg8[%c0_43, %c0_44], %32 {strides = array<i32>} : memref<4x128xf32, #tpu.memory_space<vmem>>, vector<4x128xf32>,
    %c1_45 = arith.constant 1 : index
    %c0_46 = arith.constant 0 : index
    %c0_47 = arith.constant 0 : index
    %34 = vector.load %arg3[%c1_45, %c0_46, %c0_47] : memref<3x4x12xf32, #tpu.memory_space<vmem>>, vector<1x4x12xf32>
    %35 = vector.shape_cast %34 : vector<1x4x12xf32> to vector<4x12xf32>
    %cst_48 = arith.constant dense<0.000000e+00> : vector<4x128xf32>
    %36 = tpu.matmul %35, %27, %cst_48 {dimension_numbers = #tpu.dot_dimension_numbers<[1], [0], [0], [1], [0, 0, 1, 1], [], []>} : vector<4x12xf32>, vector<12x128xf32>, vector<4x128xf32> -> vector<4x128xf32>
    %c0_49 = arith.constant 0 : index
    %c0_50 = arith.constant 0 : index
    %37 = vector.load %arg9[%c0_49, %c0_50] : memref<4x128xf32, #tpu.memory_space<vmem>>, vector<4x128xf32>
    %38 = arith.addf %37, %36 : vector<4x128xf32>
    %c0_51 = arith.constant 0 : index
    %c0_52 = arith.constant 0 : index
    %39 = vector.load %arg9[%c0_51, %c0_52] : memref<4x128xf32, #tpu.memory_space<vmem>>, vector<4x128xf32>
    tpu.vector_store %arg9[%c0_51, %c0_52], %38 {strides = array<i32>} : memref<4x128xf32, #tpu.memory_space<vmem>>, vector<4x128xf32>,
    %c0_53 = arith.constant 0 : index
    %c0_54 = arith.constant 0 : index
    %c96 = arith.constant 96 : index
    %40 = vector.load %arg1[%c0_53, %c0_54, %c96] : memref<1x4x504xf32, #tpu.memory_space<vmem>>, vector<1x4x128xf32>
    %41 = vector.shape_cast %40 : vector<1x4x128xf32> to vector<4x128xf32>
    %c0_55 = arith.constant 0 : index
    %c0_56 = arith.constant 0 : index
    %42 = vector.load %arg7[%c0_55, %c0_56] : memref<12x128xf32, #tpu.memory_space<vmem>>, vector<4x128xf32>
    tpu.vector_store %arg7[%c0_55, %c0_56], %41 {strides = array<i32>} : memref<12x128xf32, #tpu.memory_space<vmem>>, vector<4x128xf32>,
    %c0_57 = arith.constant 0 : index
    %c0_58 = arith.constant 0 : index
    %c98 = arith.constant 98 : index
    %43 = vector.load %arg1[%c0_57, %c0_58, %c98] : memref<1x4x504xf32, #tpu.memory_space<vmem>>, vector<1x4x128xf32>
    %44 = vector.shape_cast %43 : vector<1x4x128xf32> to vector<4x128xf32>
    %c4_59 = arith.constant 4 : index
    %c0_60 = arith.constant 0 : index
    %45 = vector.load %arg7[%c4_59, %c0_60] : memref<12x128xf32, #tpu.memory_space<vmem>>, vector<4x128xf32>
    tpu.vector_store %arg7[%c4_59, %c0_60], %44 {strides = array<i32>} : memref<12x128xf32, #tpu.memory_space<vmem>>, vector<4x128xf32>,
    %c0_61 = arith.constant 0 : index
    %c0_62 = arith.constant 0 : index
    %c100 = arith.constant 100 : index
    %46 = vector.load %arg1[%c0_61, %c0_62, %c100] : memref<1x4x504xf32, #tpu.memory_space<vmem>>, vector<1x4x128xf32>
    %47 = vector.shape_cast %46 : vector<1x4x128xf32> to vector<4x128xf32>
    %c8_63 = arith.constant 8 : index
    %c0_64 = arith.constant 0 : index
    %48 = vector.load %arg7[%c8_63, %c0_64] : memref<12x128xf32, #tpu.memory_space<vmem>>, vector<4x128xf32>
    tpu.vector_store %arg7[%c8_63, %c0_64], %47 {strides = array<i32>} : memref<12x128xf32, #tpu.memory_space<vmem>>, vector<4x128xf32>,
    %c0_65 = arith.constant 0 : index
    %c0_66 = arith.constant 0 : index
    %49 = vector.load %arg7[%c0_65, %c0_66] : memref<12x128xf32, #tpu.memory_space<vmem>>, vector<12x128xf32>
    %c2_67 = arith.constant 2 : index
    %c0_68 = arith.constant 0 : index
    %c0_69 = arith.constant 0 : index
    %50 = vector.load %arg2[%c2_67, %c0_68, %c0_69] : memref<3x4x12xf32, #tpu.memory_space<vmem>>, vector<1x4x12xf32>
    %51 = vector.shape_cast %50 : vector<1x4x12xf32> to vector<4x12xf32>
    %cst_70 = arith.constant dense<0.000000e+00> : vector<4x128xf32>
    %52 = tpu.matmul %51, %49, %cst_70 {dimension_numbers = #tpu.dot_dimension_numbers<[1], [0], [0], [1], [0, 0, 1, 1], [], []>} : vector<4x12xf32>, vector<12x128xf32>, vector<4x128xf32> -> vector<4x128xf32>
    %c0_71 = arith.constant 0 : index
    %c0_72 = arith.constant 0 : index
    %53 = vector.load %arg8[%c0_71, %c0_72] : memref<4x128xf32, #tpu.memory_space<vmem>>, vector<4x128xf32>
    %54 = arith.addf %53, %52 : vector<4x128xf32>
    %c0_73 = arith.constant 0 : index
    %c0_74 = arith.constant 0 : index
    %55 = vector.load %arg8[%c0_73, %c0_74] : memref<4x128xf32, #tpu.memory_space<vmem>>, vector<4x128xf32>
    tpu.vector_store %arg8[%c0_73, %c0_74], %54 {strides = array<i32>} : memref<4x128xf32, #tpu.memory_space<vmem>>, vector<4x128xf32>,
    %c2_75 = arith.constant 2 : index
    %c0_76 = arith.constant 0 : index
    %c0_77 = arith.constant 0 : index
    %56 = vector.load %arg3[%c2_75, %c0_76, %c0_77] : memref<3x4x12xf32, #tpu.memory_space<vmem>>, vector<1x4x12xf32>
    %57 = vector.shape_cast %56 : vector<1x4x12xf32> to vector<4x12xf32>
    %cst_78 = arith.constant dense<0.000000e+00> : vector<4x128xf32>
    %58 = tpu.matmul %57, %49, %cst_78 {dimension_numbers = #tpu.dot_dimension_numbers<[1], [0], [0], [1], [0, 0, 1, 1], [], []>} : vector<4x12xf32>, vector<12x128xf32>, vector<4x128xf32> -> vector<4x128xf32>
    %c0_79 = arith.constant 0 : index
    %c0_80 = arith.constant 0 : index
    %59 = vector.load %arg9[%c0_79, %c0_80] : memref<4x128xf32, #tpu.memory_space<vmem>>, vector<4x128xf32>
    %60 = arith.addf %59, %58 : vector<4x128xf32>
    %c0_81 = arith.constant 0 : index
    %c0_82 = arith.constant 0 : index
    %61 = vector.load %arg9[%c0_81, %c0_82] : memref<4x128xf32, #tpu.memory_space<vmem>>, vector<4x128xf32>
    tpu.vector_store %arg9[%c0_81, %c0_82], %60 {strides = array<i32>} : memref<4x128xf32, #tpu.memory_space<vmem>>, vector<4x128xf32>,
    %c0_83 = arith.constant 0 : index
    %c0_84 = arith.constant 0 : index
    %62 = vector.load %arg8[%c0_83, %c0_84] : memref<4x128xf32, #tpu.memory_space<vmem>>, vector<4x128xf32>
    %c0_85 = arith.constant 0 : index
    %c0_86 = arith.constant 0 : index
    %63 = vector.load %arg4[%c0_85, %c0_86] : memref<4x1xf32, #tpu.memory_space<vmem>>, vector<4x1xf32>
    %64 = vector.broadcast %63 : vector<4x1xf32> to vector<4x128xf32>
    %65 = arith.addf %62, %64 : vector<4x128xf32>
    %c0_87 = arith.constant 0 : index
    %c0_88 = arith.constant 0 : index
    %66 = vector.load %arg9[%c0_87, %c0_88] : memref<4x128xf32, #tpu.memory_space<vmem>>, vector<4x128xf32>
    %c0_89 = arith.constant 0 : index
    %c0_90 = arith.constant 0 : index
    %67 = vector.load %arg5[%c0_89, %c0_90] : memref<4x1xf32, #tpu.memory_space<vmem>>, vector<4x1xf32>
    %68 = vector.broadcast %67 : vector<4x1xf32> to vector<4x128xf32>
    %69 = arith.addf %66, %68 : vector<4x128xf32>
    %70 = arith.negf %69 : vector<4x128xf32>
    %71 = math.exp %70 : vector<4x128xf32>
    %cst_91 = arith.constant 1.000000e+00 : f32
    %72 = vector.broadcast %cst_91 : f32 to vector<4x128xf32>
    %73 = arith.addf %72, %71 : vector<4x128xf32>
    %74 = arith.divf %72, %73 : vector<4x128xf32>
    %75 = arith.mulf %65, %74 : vector<4x128xf32>
    %c0_92 = arith.constant 0 : index
    %c0_93 = arith.constant 0 : index
    %c0_94 = arith.constant 0 : index
    %76 = vector.load %arg6[%c0_92, %c0_93, %c0_94] : memref<1x4x384xf32, #tpu.memory_space<vmem>>, vector<1x4x128xf32>
    %77 = vector.shape_cast %76 : vector<1x4x128xf32> to vector<4x128xf32>
    %78 = vector.shape_cast %75 : vector<4x128xf32> to vector<1x4x128xf32>
    tpu.vector_store %arg6[%c0_92, %c0_93, %c0_94], %78 {strides = array<i32>} : memref<1x4x384xf32, #tpu.memory_space<vmem>>, vector<1x4x128xf32>,
    %c0_95 = arith.constant 0 : index
    %c0_96 = arith.constant 0 : index
    %c128 = arith.constant 128 : index
    %79 = vector.load %arg1[%c0_95, %c0_96, %c128] : memref<1x4x504xf32, #tpu.memory_space<vmem>>, vector<1x4x128xf32>
    %80 = vector.shape_cast %79 : vector<1x4x128xf32> to vector<4x128xf32>
    %c0_97 = arith.constant 0 : index
    %c0_98 = arith.constant 0 : index
    %81 = vector.load %arg7[%c0_97, %c0_98] : memref<12x128xf32, #tpu.memory_space<vmem>>, vector<4x128xf32>
    tpu.vector_store %arg7[%c0_97, %c0_98], %80 {strides = array<i32>} : memref<12x128xf32, #tpu.memory_space<vmem>>, vector<4x128xf32>,
    %c0_99 = arith.constant 0 : index
    %c0_100 = arith.constant 0 : index
    %c130 = arith.constant 130 : index
    %82 = vector.load %arg1[%c0_99, %c0_100, %c130] : memref<1x4x504xf32, #tpu.memory_space<vmem>>, vector<1x4x128xf32>
    %83 = vector.shape_cast %82 : vector<1x4x128xf32> to vector<4x128xf32>
    %c4_101 = arith.constant 4 : index
    %c0_102 = arith.constant 0 : index
    %84 = vector.load %arg7[%c4_101, %c0_102] : memref<12x128xf32, #tpu.memory_space<vmem>>, vector<4x128xf32>
    tpu.vector_store %arg7[%c4_101, %c0_102], %83 {strides = array<i32>} : memref<12x128xf32, #tpu.memory_space<vmem>>, vector<4x128xf32>,
    %c0_103 = arith.constant 0 : index
    %c0_104 = arith.constant 0 : index
    %c132 = arith.constant 132 : index
    %85 = vector.load %arg1[%c0_103, %c0_104, %c132] : memref<1x4x504xf32, #tpu.memory_space<vmem>>, vector<1x4x128xf32>
    %86 = vector.shape_cast %85 : vector<1x4x128xf32> to vector<4x128xf32>
    %c8_105 = arith.constant 8 : index
    %c0_106 = arith.constant 0 : index
    %87 = vector.load %arg7[%c8_105, %c0_106] : memref<12x128xf32, #tpu.memory_space<vmem>>, vector<4x128xf32>
    tpu.vector_store %arg7[%c8_105, %c0_106], %86 {strides = array<i32>} : memref<12x128xf32, #tpu.memory_space<vmem>>, vector<4x128xf32>,
    %c0_107 = arith.constant 0 : index
    %c0_108 = arith.constant 0 : index
    %88 = vector.load %arg7[%c0_107, %c0_108] : memref<12x128xf32, #tpu.memory_space<vmem>>, vector<12x128xf32>
    %c0_109 = arith.constant 0 : index
    %c0_110 = arith.constant 0 : index
    %c0_111 = arith.constant 0 : index
    %89 = vector.load %arg2[%c0_109, %c0_110, %c0_111] : memref<3x4x12xf32, #tpu.memory_space<vmem>>, vector<1x4x12xf32>
    %90 = vector.shape_cast %89 : vector<1x4x12xf32> to vector<4x12xf32>
    %cst_112 = arith.constant dense<0.000000e+00> : vector<4x128xf32>
    %91 = tpu.matmul %90, %88, %cst_112 {dimension_numbers = #tpu.dot_dimension_numbers<[1], [0], [0], [1], [0, 0, 1, 1], [], []>} : vector<4x12xf32>, vector<12x128xf32>, vector<4x128xf32> -> vector<4x128xf32>
    %c0_113 = arith.constant 0 : index
    %c0_114 = arith.constant 0 : index
    %92 = vector.load %arg8[%c0_113, %c0_114] : memref<4x128xf32, #tpu.memory_space<vmem>>, vector<4x128xf32>
    tpu.vector_store %arg8[%c0_113, %c0_114], %91 {strides = array<i32>} : memref<4x128xf32, #tpu.memory_space<vmem>>, vector<4x128xf32>,
    %c0_115 = arith.constant 0 : index
    %c0_116 = arith.constant 0 : index
    %c0_117 = arith.constant 0 : index
    %93 = vector.load %arg3[%c0_115, %c0_116, %c0_117] : memref<3x4x12xf32, #tpu.memory_space<vmem>>, vector<1x4x12xf32>
    %94 = vector.shape_cast %93 : vector<1x4x12xf32> to vector<4x12xf32>
    %cst_118 = arith.constant dense<0.000000e+00> : vector<4x128xf32>
    %95 = tpu.matmul %94, %88, %cst_118 {dimension_numbers = #tpu.dot_dimension_numbers<[1], [0], [0], [1], [0, 0, 1, 1], [], []>} : vector<4x12xf32>, vector<12x128xf32>, vector<4x128xf32> -> vector<4x128xf32>
    %c0_119 = arith.constant 0 : index
    %c0_120 = arith.constant 0 : index
    %96 = vector.load %arg9[%c0_119, %c0_120] : memref<4x128xf32, #tpu.memory_space<vmem>>, vector<4x128xf32>
    tpu.vector_store %arg9[%c0_119, %c0_120], %95 {strides = array<i32>} : memref<4x128xf32, #tpu.memory_space<vmem>>, vector<4x128xf32>,
    %c0_121 = arith.constant 0 : index
    %c0_122 = arith.constant 0 : index
    %c176 = arith.constant 176 : index
    %97 = vector.load %arg1[%c0_121, %c0_122, %c176] : memref<1x4x504xf32, #tpu.memory_space<vmem>>, vector<1x4x128xf32>
    %98 = vector.shape_cast %97 : vector<1x4x128xf32> to vector<4x128xf32>
    %c0_123 = arith.constant 0 : index
    %c0_124 = arith.constant 0 : index
    %99 = vector.load %arg7[%c0_123, %c0_124] : memref<12x128xf32, #tpu.memory_space<vmem>>, vector<4x128xf32>
    tpu.vector_store %arg7[%c0_123, %c0_124], %98 {strides = array<i32>} : memref<12x128xf32, #tpu.memory_space<vmem>>, vector<4x128xf32>,
    %c0_125 = arith.constant 0 : index
    %c0_126 = arith.constant 0 : index
    %c178 = arith.constant 178 : index
    %100 = vector.load %arg1[%c0_125, %c0_126, %c178] : memref<1x4x504xf32, #tpu.memory_space<vmem>>, vector<1x4x128xf32>
    %101 = vector.shape_cast %100 : vector<1x4x128xf32> to vector<4x128xf32>
    %c4_127 = arith.constant 4 : index
    %c0_128 = arith.constant 0 : index
    %102 = vector.load %arg7[%c4_127, %c0_128] : memref<12x128xf32, #tpu.memory_space<vmem>>, vector<4x128xf32>
    tpu.vector_store %arg7[%c4_127, %c0_128], %101 {strides = array<i32>} : memref<12x128xf32, #tpu.memory_space<vmem>>, vector<4x128xf32>,
    %c0_129 = arith.constant 0 : index
    %c0_130 = arith.constant 0 : index
    %c180 = arith.constant 180 : index
    %103 = vector.load %arg1[%c0_129, %c0_130, %c180] : memref<1x4x504xf32, #tpu.memory_space<vmem>>, vector<1x4x128xf32>
    %104 = vector.shape_cast %103 : vector<1x4x128xf32> to vector<4x128xf32>
    %c8_131 = arith.constant 8 : index
    %c0_132 = arith.constant 0 : index
    %105 = vector.load %arg7[%c8_131, %c0_132] : memref<12x128xf32, #tpu.memory_space<vmem>>, vector<4x128xf32>
    tpu.vector_store %arg7[%c8_131, %c0_132], %104 {strides = array<i32>} : memref<12x128xf32, #tpu.memory_space<vmem>>, vector<4x128xf32>,
    %c0_133 = arith.constant 0 : index
    %c0_134 = arith.constant 0 : index
    %106 = vector.load %arg7[%c0_133, %c0_134] : memref<12x128xf32, #tpu.memory_space<vmem>>, vector<12x128xf32>
    %c1_135 = arith.constant 1 : index
    %c0_136 = arith.constant 0 : index
    %c0_137 = arith.constant 0 : index
    %107 = vector.load %arg2[%c1_135, %c0_136, %c0_137] : memref<3x4x12xf32, #tpu.memory_space<vmem>>, vector<1x4x12xf32>
    %108 = vector.shape_cast %107 : vector<1x4x12xf32> to vector<4x12xf32>
    %cst_138 = arith.constant dense<0.000000e+00> : vector<4x128xf32>
    %109 = tpu.matmul %108, %106, %cst_138 {dimension_numbers = #tpu.dot_dimension_numbers<[1], [0], [0], [1], [0, 0, 1, 1], [], []>} : vector<4x12xf32>, vector<12x128xf32>, vector<4x128xf32> -> vector<4x128xf32>
    %c0_139 = arith.constant 0 : index
    %c0_140 = arith.constant 0 : index
    %110 = vector.load %arg8[%c0_139, %c0_140] : memref<4x128xf32, #tpu.memory_space<vmem>>, vector<4x128xf32>
    %111 = arith.addf %110, %109 : vector<4x128xf32>
    %c0_141 = arith.constant 0 : index
    %c0_142 = arith.constant 0 : index
    %112 = vector.load %arg8[%c0_141, %c0_142] : memref<4x128xf32, #tpu.memory_space<vmem>>, vector<4x128xf32>
    tpu.vector_store %arg8[%c0_141, %c0_142], %111 {strides = array<i32>} : memref<4x128xf32, #tpu.memory_space<vmem>>, vector<4x128xf32>,
    %c1_143 = arith.constant 1 : index
    %c0_144 = arith.constant 0 : index
    %c0_145 = arith.constant 0 : index
    %113 = vector.load %arg3[%c1_143, %c0_144, %c0_145] : memref<3x4x12xf32, #tpu.memory_space<vmem>>, vector<1x4x12xf32>
    %114 = vector.shape_cast %113 : vector<1x4x12xf32> to vector<4x12xf32>
    %cst_146 = arith.constant dense<0.000000e+00> : vector<4x128xf32>
    %115 = tpu.matmul %114, %106, %cst_146 {dimension_numbers = #tpu.dot_dimension_numbers<[1], [0], [0], [1], [0, 0, 1, 1], [], []>} : vector<4x12xf32>, vector<12x128xf32>, vector<4x128xf32> -> vector<4x128xf32>
    %c0_147 = arith.constant 0 : index
    %c0_148 = arith.constant 0 : index
    %116 = vector.load %arg9[%c0_147, %c0_148] : memref<4x128xf32, #tpu.memory_space<vmem>>, vector<4x128xf32>
    %117 = arith.addf %116, %115 : vector<4x128xf32>
    %c0_149 = arith.constant 0 : index
    %c0_150 = arith.constant 0 : index
    %118 = vector.load %arg9[%c0_149, %c0_150] : memref<4x128xf32, #tpu.memory_space<vmem>>, vector<4x128xf32>
    tpu.vector_store %arg9[%c0_149, %c0_150], %117 {strides = array<i32>} : memref<4x128xf32, #tpu.memory_space<vmem>>, vector<4x128xf32>,
    %c0_151 = arith.constant 0 : index
    %c0_152 = arith.constant 0 : index
    %c224 = arith.constant 224 : index
    %119 = vector.load %arg1[%c0_151, %c0_152, %c224] : memref<1x4x504xf32, #tpu.memory_space<vmem>>, vector<1x4x128xf32>
    %120 = vector.shape_cast %119 : vector<1x4x128xf32> to vector<4x128xf32>
    %c0_153 = arith.constant 0 : index
    %c0_154 = arith.constant 0 : index
    %121 = vector.load %arg7[%c0_153, %c0_154] : memref<12x128xf32, #tpu.memory_space<vmem>>, vector<4x128xf32>
    tpu.vector_store %arg7[%c0_153, %c0_154], %120 {strides = array<i32>} : memref<12x128xf32, #tpu.memory_space<vmem>>, vector<4x128xf32>,
    %c0_155 = arith.constant 0 : index
    %c0_156 = arith.constant 0 : index
    %c226 = arith.constant 226 : index
    %122 = vector.load %arg1[%c0_155, %c0_156, %c226] : memref<1x4x504xf32, #tpu.memory_space<vmem>>, vector<1x4x128xf32>
    %123 = vector.shape_cast %122 : vector<1x4x128xf32> to vector<4x128xf32>
    %c4_157 = arith.constant 4 : index
    %c0_158 = arith.constant 0 : index
    %124 = vector.load %arg7[%c4_157, %c0_158] : memref<12x128xf32, #tpu.memory_space<vmem>>, vector<4x128xf32>
    tpu.vector_store %arg7[%c4_157, %c0_158], %123 {strides = array<i32>} : memref<12x128xf32, #tpu.memory_space<vmem>>, vector<4x128xf32>,
    %c0_159 = arith.constant 0 : index
    %c0_160 = arith.constant 0 : index
    %c228 = arith.constant 228 : index
    %125 = vector.load %arg1[%c0_159, %c0_160, %c228] : memref<1x4x504xf32, #tpu.memory_space<vmem>>, vector<1x4x128xf32>
    %126 = vector.shape_cast %125 : vector<1x4x128xf32> to vector<4x128xf32>
    %c8_161 = arith.constant 8 : index
    %c0_162 = arith.constant 0 : index
    %127 = vector.load %arg7[%c8_161, %c0_162] : memref<12x128xf32, #tpu.memory_space<vmem>>, vector<4x128xf32>
    tpu.vector_store %arg7[%c8_161, %c0_162], %126 {strides = array<i32>} : memref<12x128xf32, #tpu.memory_space<vmem>>, vector<4x128xf32>,
    %c0_163 = arith.constant 0 : index
    %c0_164 = arith.constant 0 : index
    %128 = vector.load %arg7[%c0_163, %c0_164] : memref<12x128xf32, #tpu.memory_space<vmem>>, vector<12x128xf32>
    %c2_165 = arith.constant 2 : index
    %c0_166 = arith.constant 0 : index
    %c0_167 = arith.constant 0 : index
    %129 = vector.load %arg2[%c2_165, %c0_166, %c0_167] : memref<3x4x12xf32, #tpu.memory_space<vmem>>, vector<1x4x12xf32>
    %130 = vector.shape_cast %129 : vector<1x4x12xf32> to vector<4x12xf32>
    %cst_168 = arith.constant dense<0.000000e+00> : vector<4x128xf32>
    %131 = tpu.matmul %130, %128, %cst_168 {dimension_numbers = #tpu.dot_dimension_numbers<[1], [0], [0], [1], [0, 0, 1, 1], [], []>} : vector<4x12xf32>, vector<12x128xf32>, vector<4x128xf32> -> vector<4x128xf32>
    %c0_169 = arith.constant 0 : index
    %c0_170 = arith.constant 0 : index
    %132 = vector.load %arg8[%c0_169, %c0_170] : memref<4x128xf32, #tpu.memory_space<vmem>>, vector<4x128xf32>
    %133 = arith.addf %132, %131 : vector<4x128xf32>
    %c0_171 = arith.constant 0 : index
    %c0_172 = arith.constant 0 : index
    %134 = vector.load %arg8[%c0_171, %c0_172] : memref<4x128xf32, #tpu.memory_space<vmem>>, vector<4x128xf32>
    tpu.vector_store %arg8[%c0_171, %c0_172], %133 {strides = array<i32>} : memref<4x128xf32, #tpu.memory_space<vmem>>, vector<4x128xf32>,
    %c2_173 = arith.constant 2 : index
    %c0_174 = arith.constant 0 : index
    %c0_175 = arith.constant 0 : index
    %135 = vector.load %arg3[%c2_173, %c0_174, %c0_175] : memref<3x4x12xf32, #tpu.memory_space<vmem>>, vector<1x4x12xf32>
    %136 = vector.shape_cast %135 : vector<1x4x12xf32> to vector<4x12xf32>
    %cst_176 = arith.constant dense<0.000000e+00> : vector<4x128xf32>
    %137 = tpu.matmul %136, %128, %cst_176 {dimension_numbers = #tpu.dot_dimension_numbers<[1], [0], [0], [1], [0, 0, 1, 1], [], []>} : vector<4x12xf32>, vector<12x128xf32>, vector<4x128xf32> -> vector<4x128xf32>
    %c0_177 = arith.constant 0 : index
    %c0_178 = arith.constant 0 : index
    %138 = vector.load %arg9[%c0_177, %c0_178] : memref<4x128xf32, #tpu.memory_space<vmem>>, vector<4x128xf32>
    %139 = arith.addf %138, %137 : vector<4x128xf32>
    %c0_179 = arith.constant 0 : index
    %c0_180 = arith.constant 0 : index
    %140 = vector.load %arg9[%c0_179, %c0_180] : memref<4x128xf32, #tpu.memory_space<vmem>>, vector<4x128xf32>
    tpu.vector_store %arg9[%c0_179, %c0_180], %139 {strides = array<i32>} : memref<4x128xf32, #tpu.memory_space<vmem>>, vector<4x128xf32>,
    %c0_181 = arith.constant 0 : index
    %c0_182 = arith.constant 0 : index
    %141 = vector.load %arg8[%c0_181, %c0_182] : memref<4x128xf32, #tpu.memory_space<vmem>>, vector<4x128xf32>
    %c0_183 = arith.constant 0 : index
    %c0_184 = arith.constant 0 : index
    %142 = vector.load %arg4[%c0_183, %c0_184] : memref<4x1xf32, #tpu.memory_space<vmem>>, vector<4x1xf32>
    %143 = vector.broadcast %142 : vector<4x1xf32> to vector<4x128xf32>
    %144 = arith.addf %141, %143 : vector<4x128xf32>
    %c0_185 = arith.constant 0 : index
    %c0_186 = arith.constant 0 : index
    %145 = vector.load %arg9[%c0_185, %c0_186] : memref<4x128xf32, #tpu.memory_space<vmem>>, vector<4x128xf32>
    %c0_187 = arith.constant 0 : index
    %c0_188 = arith.constant 0 : index
    %146 = vector.load %arg5[%c0_187, %c0_188] : memref<4x1xf32, #tpu.memory_space<vmem>>, vector<4x1xf32>
    %147 = vector.broadcast %146 : vector<4x1xf32> to vector<4x128xf32>
    %148 = arith.addf %145, %147 : vector<4x128xf32>
    %149 = arith.negf %148 : vector<4x128xf32>
    %150 = math.exp %149 : vector<4x128xf32>
    %cst_189 = arith.constant 1.000000e+00 : f32
    %151 = vector.broadcast %cst_189 : f32 to vector<4x128xf32>
    %152 = arith.addf %151, %150 : vector<4x128xf32>
    %153 = arith.divf %151, %152 : vector<4x128xf32>
    %154 = arith.mulf %144, %153 : vector<4x128xf32>
    %c0_190 = arith.constant 0 : index
    %c0_191 = arith.constant 0 : index
    %c128_192 = arith.constant 128 : index
    %155 = vector.load %arg6[%c0_190, %c0_191, %c128_192] : memref<1x4x384xf32, #tpu.memory_space<vmem>>, vector<1x4x128xf32>
    %156 = vector.shape_cast %155 : vector<1x4x128xf32> to vector<4x128xf32>
    %157 = vector.shape_cast %154 : vector<4x128xf32> to vector<1x4x128xf32>
    tpu.vector_store %arg6[%c0_190, %c0_191, %c128_192], %157 {strides = array<i32>} : memref<1x4x384xf32, #tpu.memory_space<vmem>>, vector<1x4x128xf32>,
    %c0_193 = arith.constant 0 : index
    %c0_194 = arith.constant 0 : index
    %c256 = arith.constant 256 : index
    %158 = vector.load %arg1[%c0_193, %c0_194, %c256] : memref<1x4x504xf32, #tpu.memory_space<vmem>>, vector<1x4x128xf32>
    %159 = vector.shape_cast %158 : vector<1x4x128xf32> to vector<4x128xf32>
    %c0_195 = arith.constant 0 : index
    %c0_196 = arith.constant 0 : index
    %160 = vector.load %arg7[%c0_195, %c0_196] : memref<12x128xf32, #tpu.memory_space<vmem>>, vector<4x128xf32>
    tpu.vector_store %arg7[%c0_195, %c0_196], %159 {strides = array<i32>} : memref<12x128xf32, #tpu.memory_space<vmem>>, vector<4x128xf32>,
    %c0_197 = arith.constant 0 : index
    %c0_198 = arith.constant 0 : index
    %c258 = arith.constant 258 : index
    %161 = vector.load %arg1[%c0_197, %c0_198, %c258] : memref<1x4x504xf32, #tpu.memory_space<vmem>>, vector<1x4x128xf32>
    %162 = vector.shape_cast %161 : vector<1x4x128xf32> to vector<4x128xf32>
    %c4_199 = arith.constant 4 : index
    %c0_200 = arith.constant 0 : index
    %163 = vector.load %arg7[%c4_199, %c0_200] : memref<12x128xf32, #tpu.memory_space<vmem>>, vector<4x128xf32>
    tpu.vector_store %arg7[%c4_199, %c0_200], %162 {strides = array<i32>} : memref<12x128xf32, #tpu.memory_space<vmem>>, vector<4x128xf32>,
    %c0_201 = arith.constant 0 : index
    %c0_202 = arith.constant 0 : index
    %c260 = arith.constant 260 : index
    %164 = vector.load %arg1[%c0_201, %c0_202, %c260] : memref<1x4x504xf32, #tpu.memory_space<vmem>>, vector<1x4x128xf32>
    %165 = vector.shape_cast %164 : vector<1x4x128xf32> to vector<4x128xf32>
    %c8_203 = arith.constant 8 : index
    %c0_204 = arith.constant 0 : index
    %166 = vector.load %arg7[%c8_203, %c0_204] : memref<12x128xf32, #tpu.memory_space<vmem>>, vector<4x128xf32>
    tpu.vector_store %arg7[%c8_203, %c0_204], %165 {strides = array<i32>} : memref<12x128xf32, #tpu.memory_space<vmem>>, vector<4x128xf32>,
    %c0_205 = arith.constant 0 : index
    %c0_206 = arith.constant 0 : index
    %167 = vector.load %arg7[%c0_205, %c0_206] : memref<12x128xf32, #tpu.memory_space<vmem>>, vector<12x128xf32>
    %c0_207 = arith.constant 0 : index
    %c0_208 = arith.constant 0 : index
    %c0_209 = arith.constant 0 : index
    %168 = vector.load %arg2[%c0_207, %c0_208, %c0_209] : memref<3x4x12xf32, #tpu.memory_space<vmem>>, vector<1x4x12xf32>
    %169 = vector.shape_cast %168 : vector<1x4x12xf32> to vector<4x12xf32>
    %cst_210 = arith.constant dense<0.000000e+00> : vector<4x128xf32>
    %170 = tpu.matmul %169, %167, %cst_210 {dimension_numbers = #tpu.dot_dimension_numbers<[1], [0], [0], [1], [0, 0, 1, 1], [], []>} : vector<4x12xf32>, vector<12x128xf32>, vector<4x128xf32> -> vector<4x128xf32>
    %c0_211 = arith.constant 0 : index
    %c0_212 = arith.constant 0 : index
    %171 = vector.load %arg8[%c0_211, %c0_212] : memref<4x128xf32, #tpu.memory_space<vmem>>, vector<4x128xf32>
    tpu.vector_store %arg8[%c0_211, %c0_212], %170 {strides = array<i32>} : memref<4x128xf32, #tpu.memory_space<vmem>>, vector<4x128xf32>,
    %c0_213 = arith.constant 0 : index
    %c0_214 = arith.constant 0 : index
    %c0_215 = arith.constant 0 : index
    %172 = vector.load %arg3[%c0_213, %c0_214, %c0_215] : memref<3x4x12xf32, #tpu.memory_space<vmem>>, vector<1x4x12xf32>
    %173 = vector.shape_cast %172 : vector<1x4x12xf32> to vector<4x12xf32>
    %cst_216 = arith.constant dense<0.000000e+00> : vector<4x128xf32>
    %174 = tpu.matmul %173, %167, %cst_216 {dimension_numbers = #tpu.dot_dimension_numbers<[1], [0], [0], [1], [0, 0, 1, 1], [], []>} : vector<4x12xf32>, vector<12x128xf32>, vector<4x128xf32> -> vector<4x128xf32>
    %c0_217 = arith.constant 0 : index
    %c0_218 = arith.constant 0 : index
    %175 = vector.load %arg9[%c0_217, %c0_218] : memref<4x128xf32, #tpu.memory_space<vmem>>, vector<4x128xf32>
    tpu.vector_store %arg9[%c0_217, %c0_218], %174 {strides = array<i32>} : memref<4x128xf32, #tpu.memory_space<vmem>>, vector<4x128xf32>,
    %c0_219 = arith.constant 0 : index
    %c0_220 = arith.constant 0 : index
    %c304 = arith.constant 304 : index
    %176 = vector.load %arg1[%c0_219, %c0_220, %c304] : memref<1x4x504xf32, #tpu.memory_space<vmem>>, vector<1x4x128xf32>
    %177 = vector.shape_cast %176 : vector<1x4x128xf32> to vector<4x128xf32>
    %c0_221 = arith.constant 0 : index
    %c0_222 = arith.constant 0 : index
    %178 = vector.load %arg7[%c0_221, %c0_222] : memref<12x128xf32, #tpu.memory_space<vmem>>, vector<4x128xf32>
    tpu.vector_store %arg7[%c0_221, %c0_222], %177 {strides = array<i32>} : memref<12x128xf32, #tpu.memory_space<vmem>>, vector<4x128xf32>,
    %c0_223 = arith.constant 0 : index
    %c0_224 = arith.constant 0 : index
    %c306 = arith.constant 306 : index
    %179 = vector.load %arg1[%c0_223, %c0_224, %c306] : memref<1x4x504xf32, #tpu.memory_space<vmem>>, vector<1x4x128xf32>
    %180 = vector.shape_cast %179 : vector<1x4x128xf32> to vector<4x128xf32>
    %c4_225 = arith.constant 4 : index
    %c0_226 = arith.constant 0 : index
    %181 = vector.load %arg7[%c4_225, %c0_226] : memref<12x128xf32, #tpu.memory_space<vmem>>, vector<4x128xf32>
    tpu.vector_store %arg7[%c4_225, %c0_226], %180 {strides = array<i32>} : memref<12x128xf32, #tpu.memory_space<vmem>>, vector<4x128xf32>,
    %c0_227 = arith.constant 0 : index
    %c0_228 = arith.constant 0 : index
    %c308 = arith.constant 308 : index
    %182 = vector.load %arg1[%c0_227, %c0_228, %c308] : memref<1x4x504xf32, #tpu.memory_space<vmem>>, vector<1x4x128xf32>
    %183 = vector.shape_cast %182 : vector<1x4x128xf32> to vector<4x128xf32>
    %c8_229 = arith.constant 8 : index
    %c0_230 = arith.constant 0 : index
    %184 = vector.load %arg7[%c8_229, %c0_230] : memref<12x128xf32, #tpu.memory_space<vmem>>, vector<4x128xf32>
    tpu.vector_store %arg7[%c8_229, %c0_230], %183 {strides = array<i32>} : memref<12x128xf32, #tpu.memory_space<vmem>>, vector<4x128xf32>,
    %c0_231 = arith.constant 0 : index
    %c0_232 = arith.constant 0 : index
    %185 = vector.load %arg7[%c0_231, %c0_232] : memref<12x128xf32, #tpu.memory_space<vmem>>, vector<12x128xf32>
    %c1_233 = arith.constant 1 : index
    %c0_234 = arith.constant 0 : index
    %c0_235 = arith.constant 0 : index
    %186 = vector.load %arg2[%c1_233, %c0_234, %c0_235] : memref<3x4x12xf32, #tpu.memory_space<vmem>>, vector<1x4x12xf32>
    %187 = vector.shape_cast %186 : vector<1x4x12xf32> to vector<4x12xf32>
    %cst_236 = arith.constant dense<0.000000e+00> : vector<4x128xf32>
    %188 = tpu.matmul %187, %185, %cst_236 {dimension_numbers = #tpu.dot_dimension_numbers<[1], [0], [0], [1], [0, 0, 1, 1], [], []>} : vector<4x12xf32>, vector<12x128xf32>, vector<4x128xf32> -> vector<4x128xf32>
    %c0_237 = arith.constant 0 : index
    %c0_238 = arith.constant 0 : index
    %189 = vector.load %arg8[%c0_237, %c0_238] : memref<4x128xf32, #tpu.memory_space<vmem>>, vector<4x128xf32>
    %190 = arith.addf %189, %188 : vector<4x128xf32>
    %c0_239 = arith.constant 0 : index
    %c0_240 = arith.constant 0 : index
    %191 = vector.load %arg8[%c0_239, %c0_240] : memref<4x128xf32, #tpu.memory_space<vmem>>, vector<4x128xf32>
    tpu.vector_store %arg8[%c0_239, %c0_240], %190 {strides = array<i32>} : memref<4x128xf32, #tpu.memory_space<vmem>>, vector<4x128xf32>,
    %c1_241 = arith.constant 1 : index
    %c0_242 = arith.constant 0 : index
    %c0_243 = arith.constant 0 : index
    %192 = vector.load %arg3[%c1_241, %c0_242, %c0_243] : memref<3x4x12xf32, #tpu.memory_space<vmem>>, vector<1x4x12xf32>
    %193 = vector.shape_cast %192 : vector<1x4x12xf32> to vector<4x12xf32>
    %cst_244 = arith.constant dense<0.000000e+00> : vector<4x128xf32>
    %194 = tpu.matmul %193, %185, %cst_244 {dimension_numbers = #tpu.dot_dimension_numbers<[1], [0], [0], [1], [0, 0, 1, 1], [], []>} : vector<4x12xf32>, vector<12x128xf32>, vector<4x128xf32> -> vector<4x128xf32>
    %c0_245 = arith.constant 0 : index
    %c0_246 = arith.constant 0 : index
    %195 = vector.load %arg9[%c0_245, %c0_246] : memref<4x128xf32, #tpu.memory_space<vmem>>, vector<4x128xf32>
    %196 = arith.addf %195, %194 : vector<4x128xf32>
    %c0_247 = arith.constant 0 : index
    %c0_248 = arith.constant 0 : index
    %197 = vector.load %arg9[%c0_247, %c0_248] : memref<4x128xf32, #tpu.memory_space<vmem>>, vector<4x128xf32>
    tpu.vector_store %arg9[%c0_247, %c0_248], %196 {strides = array<i32>} : memref<4x128xf32, #tpu.memory_space<vmem>>, vector<4x128xf32>,
    %c0_249 = arith.constant 0 : index
    %c0_250 = arith.constant 0 : index
    %c352 = arith.constant 352 : index
    %198 = vector.load %arg1[%c0_249, %c0_250, %c352] : memref<1x4x504xf32, #tpu.memory_space<vmem>>, vector<1x4x128xf32>
    %199 = vector.shape_cast %198 : vector<1x4x128xf32> to vector<4x128xf32>
    %c0_251 = arith.constant 0 : index
    %c0_252 = arith.constant 0 : index
    %200 = vector.load %arg7[%c0_251, %c0_252] : memref<12x128xf32, #tpu.memory_space<vmem>>, vector<4x128xf32>
    tpu.vector_store %arg7[%c0_251, %c0_252], %199 {strides = array<i32>} : memref<12x128xf32, #tpu.memory_space<vmem>>, vector<4x128xf32>,
    %c0_253 = arith.constant 0 : index
    %c0_254 = arith.constant 0 : index
    %c354 = arith.constant 354 : index
    %201 = vector.load %arg1[%c0_253, %c0_254, %c354] : memref<1x4x504xf32, #tpu.memory_space<vmem>>, vector<1x4x128xf32>
    %202 = vector.shape_cast %201 : vector<1x4x128xf32> to vector<4x128xf32>
    %c4_255 = arith.constant 4 : index
    %c0_256 = arith.constant 0 : index
    %203 = vector.load %arg7[%c4_255, %c0_256] : memref<12x128xf32, #tpu.memory_space<vmem>>, vector<4x128xf32>
    tpu.vector_store %arg7[%c4_255, %c0_256], %202 {strides = array<i32>} : memref<12x128xf32, #tpu.memory_space<vmem>>, vector<4x128xf32>,
    %c0_257 = arith.constant 0 : index
    %c0_258 = arith.constant 0 : index
    %c356 = arith.constant 356 : index
    %204 = vector.load %arg1[%c0_257, %c0_258, %c356] : memref<1x4x504xf32, #tpu.memory_space<vmem>>, vector<1x4x128xf32>
    %205 = vector.shape_cast %204 : vector<1x4x128xf32> to vector<4x128xf32>
    %c8_259 = arith.constant 8 : index
    %c0_260 = arith.constant 0 : index
    %206 = vector.load %arg7[%c8_259, %c0_260] : memref<12x128xf32, #tpu.memory_space<vmem>>, vector<4x128xf32>
    tpu.vector_store %arg7[%c8_259, %c0_260], %205 {strides = array<i32>} : memref<12x128xf32, #tpu.memory_space<vmem>>, vector<4x128xf32>,
    %c0_261 = arith.constant 0 : index
    %c0_262 = arith.constant 0 : index
    %207 = vector.load %arg7[%c0_261, %c0_262] : memref<12x128xf32, #tpu.memory_space<vmem>>, vector<12x128xf32>
    %c2_263 = arith.constant 2 : index
    %c0_264 = arith.constant 0 : index
    %c0_265 = arith.constant 0 : index
    %208 = vector.load %arg2[%c2_263, %c0_264, %c0_265] : memref<3x4x12xf32, #tpu.memory_space<vmem>>, vector<1x4x12xf32>
    %209 = vector.shape_cast %208 : vector<1x4x12xf32> to vector<4x12xf32>
    %cst_266 = arith.constant dense<0.000000e+00> : vector<4x128xf32>
    %210 = tpu.matmul %209, %207, %cst_266 {dimension_numbers = #tpu.dot_dimension_numbers<[1], [0], [0], [1], [0, 0, 1, 1], [], []>} : vector<4x12xf32>, vector<12x128xf32>, vector<4x128xf32> -> vector<4x128xf32>
    %c0_267 = arith.constant 0 : index
    %c0_268 = arith.constant 0 : index
    %211 = vector.load %arg8[%c0_267, %c0_268] : memref<4x128xf32, #tpu.memory_space<vmem>>, vector<4x128xf32>
    %212 = arith.addf %211, %210 : vector<4x128xf32>
    %c0_269 = arith.constant 0 : index
    %c0_270 = arith.constant 0 : index
    %213 = vector.load %arg8[%c0_269, %c0_270] : memref<4x128xf32, #tpu.memory_space<vmem>>, vector<4x128xf32>
    tpu.vector_store %arg8[%c0_269, %c0_270], %212 {strides = array<i32>} : memref<4x128xf32, #tpu.memory_space<vmem>>, vector<4x128xf32>,
    %c2_271 = arith.constant 2 : index
    %c0_272 = arith.constant 0 : index
    %c0_273 = arith.constant 0 : index
    %214 = vector.load %arg3[%c2_271, %c0_272, %c0_273] : memref<3x4x12xf32, #tpu.memory_space<vmem>>, vector<1x4x12xf32>
    %215 = vector.shape_cast %214 : vector<1x4x12xf32> to vector<4x12xf32>
    %cst_274 = arith.constant dense<0.000000e+00> : vector<4x128xf32>
    %216 = tpu.matmul %215, %207, %cst_274 {dimension_numbers = #tpu.dot_dimension_numbers<[1], [0], [0], [1], [0, 0, 1, 1], [], []>} : vector<4x12xf32>, vector<12x128xf32>, vector<4x128xf32> -> vector<4x128xf32>
    %c0_275 = arith.constant 0 : index
    %c0_276 = arith.constant 0 : index
    %217 = vector.load %arg9[%c0_275, %c0_276] : memref<4x128xf32, #tpu.memory_space<vmem>>, vector<4x128xf32>
    %218 = arith.addf %217, %216 : vector<4x128xf32>
    %c0_277 = arith.constant 0 : index
    %c0_278 = arith.constant 0 : index
    %219 = vector.load %arg9[%c0_277, %c0_278] : memref<4x128xf32, #tpu.memory_space<vmem>>, vector<4x128xf32>
    tpu.vector_store %arg9[%c0_277, %c0_278], %218 {strides = array<i32>} : memref<4x128xf32, #tpu.memory_space<vmem>>, vector<4x128xf32>,
    %c0_279 = arith.constant 0 : index
    %c0_280 = arith.constant 0 : index
    %220 = vector.load %arg8[%c0_279, %c0_280] : memref<4x128xf32, #tpu.memory_space<vmem>>, vector<4x128xf32>
    %c0_281 = arith.constant 0 : index
    %c0_282 = arith.constant 0 : index
    %221 = vector.load %arg4[%c0_281, %c0_282] : memref<4x1xf32, #tpu.memory_space<vmem>>, vector<4x1xf32>
    %222 = vector.broadcast %221 : vector<4x1xf32> to vector<4x128xf32>
    %223 = arith.addf %220, %222 : vector<4x128xf32>
    %c0_283 = arith.constant 0 : index
    %c0_284 = arith.constant 0 : index
    %224 = vector.load %arg9[%c0_283, %c0_284] : memref<4x128xf32, #tpu.memory_space<vmem>>, vector<4x128xf32>
    %c0_285 = arith.constant 0 : index
    %c0_286 = arith.constant 0 : index
    %225 = vector.load %arg5[%c0_285, %c0_286] : memref<4x1xf32, #tpu.memory_space<vmem>>, vector<4x1xf32>
    %226 = vector.broadcast %225 : vector<4x1xf32> to vector<4x128xf32>
    %227 = arith.addf %224, %226 : vector<4x128xf32>
    %228 = arith.negf %227 : vector<4x128xf32>
    %229 = math.exp %228 : vector<4x128xf32>
    %cst_287 = arith.constant 1.000000e+00 : f32
    %230 = vector.broadcast %cst_287 : f32 to vector<4x128xf32>
    %231 = arith.addf %230, %229 : vector<4x128xf32>
    %232 = arith.divf %230, %231 : vector<4x128xf32>
    %233 = arith.mulf %223, %232 : vector<4x128xf32>
    %c0_288 = arith.constant 0 : index
    %c0_289 = arith.constant 0 : index
    %c256_290 = arith.constant 256 : index
    %234 = vector.load %arg6[%c0_288, %c0_289, %c256_290] : memref<1x4x384xf32, #tpu.memory_space<vmem>>, vector<1x4x128xf32>
    %235 = vector.shape_cast %234 : vector<1x4x128xf32> to vector<4x128xf32>
    %236 = vector.shape_cast %233 : vector<4x128xf32> to vector<1x4x128xf32>
    tpu.vector_store %arg6[%c0_288, %c0_289, %c256_290], %236 {strides = array<i32>} : memref<1x4x384xf32, #tpu.memory_space<vmem>>, vector<1x4x128xf32>,
    return
  }
  func.func @transform_0(%arg0: i32) -> (i32, i32, i32) {
    %c0_i32 = arith.constant 0 : i32
    %c0_i32_0 = arith.constant 0 : i32
    %c0_i32_1 = arith.constant 0 : i32
    return %arg0, %c0_i32, %c0_i32_0 : i32, i32, i32
  }
  func.func @transform_1(%arg0: i32) -> (i32, i32, i32) {
    %c0_i32 = arith.constant 0 : i32
    %c0_i32_0 = arith.constant 0 : i32
    %c0_i32_1 = arith.constant 0 : i32
    %c0_i32_2 = arith.constant 0 : i32
    return %c0_i32, %c0_i32_0, %c0_i32_1 : i32, i32, i32
  }
  func.func @transform_2(%arg0: i32) -> (i32, i32, i32) {
    %c0_i32 = arith.constant 0 : i32
    %c0_i32_0 = arith.constant 0 : i32
    %c0_i32_1 = arith.constant 0 : i32
    %c0_i32_2 = arith.constant 0 : i32
    return %c0_i32, %c0_i32_0, %c0_i32_1 : i32, i32, i32
  }
  func.func @transform_3(%arg0: i32) -> (i32, i32) {
    %c0_i32 = arith.constant 0 : i32
    %c0_i32_0 = arith.constant 0 : i32
    %c0_i32_1 = arith.constant 0 : i32
    return %c0_i32, %c0_i32_0 : i32, i32
  }
  func.func @transform_4(%arg0: i32) -> (i32, i32) {
    %c0_i32 = arith.constant 0 : i32
    %c0_i32_0 = arith.constant 0 : i32
    %c0_i32_1 = arith.constant 0 : i32
    return %c0_i32, %c0_i32_0 : i32, i32
  }
  func.func @transform_5(%arg0: i32) -> (i32, i32, i32) {
    %c0_i32 = arith.constant 0 : i32
    %c0_i32_0 = arith.constant 0 : i32
    %c0_i32_1 = arith.constant 0 : i32
    return %arg0, %c0_i32, %c0_i32_0 : i32, i32, i32
  }
}

module attributes {stable_mosaic.version = 11 : i64} {
  func.func @_conv2d_glu_kernel(%arg0: i32, %arg1: memref<1x4x600xf32, #tpu.memory_space<vmem>>, %arg2: memref<5x4x20xf32, #tpu.memory_space<vmem>>, %arg3: memref<5x4x20xf32, #tpu.memory_space<vmem>>, %arg4: memref<4x1xf32, #tpu.memory_space<vmem>>, %arg5: memref<4x1xf32, #tpu.memory_space<vmem>>, %arg6: memref<1x4x384xf32, #tpu.memory_space<vmem>>, %arg7: memref<20x128xf32, #tpu.memory_space<vmem>>, %arg8: memref<4x128xf32, #tpu.memory_space<vmem>>, %arg9: memref<4x128xf32, #tpu.memory_space<vmem>>) attributes {dimension_semantics = [#tpu.dimension_semantics<parallel>], iteration_bounds = array<i64: 2>, scalar_prefetch = 0 : i64, scratch_operands = 3 : i64, tpu.core_type = #tpu.core_type<tc>, window_params = [{transform_indices = @transform_0, window_bounds = array<i64: 1, 4, 600>}, {pipeline_mode = #tpu.pipeline_mode<synchronous>, transform_indices = @transform_1, window_bounds = array<i64: 5, 4, 20>}, {pipeline_mode = #tpu.pipeline_mode<synchronous>, transform_indices = @transform_2, window_bounds = array<i64: 5, 4, 20>}, {pipeline_mode = #tpu.pipeline_mode<synchronous>, transform_indices = @transform_3, window_bounds = array<i64: 4, 1>}, {pipeline_mode = #tpu.pipeline_mode<synchronous>, transform_indices = @transform_4, window_bounds = array<i64: 4, 1>}, {transform_indices = @transform_5, window_bounds = array<i64: 1, 4, 384>}]} {
    %c0 = arith.constant 0 : index
    %c0_0 = arith.constant 0 : index
    %c0_1 = arith.constant 0 : index
    %0 = vector.load %arg1[%c0, %c0_0, %c0_1] : memref<1x4x600xf32, #tpu.memory_space<vmem>>, vector<1x4x128xf32>
    %1 = vector.shape_cast %0 : vector<1x4x128xf32> to vector<4x128xf32>
    %c0_2 = arith.constant 0 : index
    %c0_3 = arith.constant 0 : index
    %2 = vector.load %arg7[%c0_2, %c0_3] : memref<20x128xf32, #tpu.memory_space<vmem>>, vector<4x128xf32>
    tpu.vector_store %arg7[%c0_2, %c0_3], %1 {strides = array<i32>} : memref<20x128xf32, #tpu.memory_space<vmem>>, vector<4x128xf32>,
    %c0_4 = arith.constant 0 : index
    %c0_5 = arith.constant 0 : index
    %c2 = arith.constant 2 : index
    %3 = vector.load %arg1[%c0_4, %c0_5, %c2] : memref<1x4x600xf32, #tpu.memory_space<vmem>>, vector<1x4x128xf32>
    %4 = vector.shape_cast %3 : vector<1x4x128xf32> to vector<4x128xf32>
    %c4 = arith.constant 4 : index
    %c0_6 = arith.constant 0 : index
    %5 = vector.load %arg7[%c4, %c0_6] : memref<20x128xf32, #tpu.memory_space<vmem>>, vector<4x128xf32>
    tpu.vector_store %arg7[%c4, %c0_6], %4 {strides = array<i32>} : memref<20x128xf32, #tpu.memory_space<vmem>>, vector<4x128xf32>,
    %c0_7 = arith.constant 0 : index
    %c0_8 = arith.constant 0 : index
    %c4_9 = arith.constant 4 : index
    %6 = vector.load %arg1[%c0_7, %c0_8, %c4_9] : memref<1x4x600xf32, #tpu.memory_space<vmem>>, vector<1x4x128xf32>
    %7 = vector.shape_cast %6 : vector<1x4x128xf32> to vector<4x128xf32>
    %c8 = arith.constant 8 : index
    %c0_10 = arith.constant 0 : index
    %8 = vector.load %arg7[%c8, %c0_10] : memref<20x128xf32, #tpu.memory_space<vmem>>, vector<4x128xf32>
    tpu.vector_store %arg7[%c8, %c0_10], %7 {strides = array<i32>} : memref<20x128xf32, #tpu.memory_space<vmem>>, vector<4x128xf32>,
    %c0_11 = arith.constant 0 : index
    %c0_12 = arith.constant 0 : index
    %c6 = arith.constant 6 : index
    %9 = vector.load %arg1[%c0_11, %c0_12, %c6] : memref<1x4x600xf32, #tpu.memory_space<vmem>>, vector<1x4x128xf32>
    %10 = vector.shape_cast %9 : vector<1x4x128xf32> to vector<4x128xf32>
    %c12 = arith.constant 12 : index
    %c0_13 = arith.constant 0 : index
    %11 = vector.load %arg7[%c12, %c0_13] : memref<20x128xf32, #tpu.memory_space<vmem>>, vector<4x128xf32>
    tpu.vector_store %arg7[%c12, %c0_13], %10 {strides = array<i32>} : memref<20x128xf32, #tpu.memory_space<vmem>>, vector<4x128xf32>,
    %c0_14 = arith.constant 0 : index
    %c0_15 = arith.constant 0 : index
    %c8_16 = arith.constant 8 : index
    %12 = vector.load %arg1[%c0_14, %c0_15, %c8_16] : memref<1x4x600xf32, #tpu.memory_space<vmem>>, vector<1x4x128xf32>
    %13 = vector.shape_cast %12 : vector<1x4x128xf32> to vector<4x128xf32>
    %c16 = arith.constant 16 : index
    %c0_17 = arith.constant 0 : index
    %14 = vector.load %arg7[%c16, %c0_17] : memref<20x128xf32, #tpu.memory_space<vmem>>, vector<4x128xf32>
    tpu.vector_store %arg7[%c16, %c0_17], %13 {strides = array<i32>} : memref<20x128xf32, #tpu.memory_space<vmem>>, vector<4x128xf32>,
    %c0_18 = arith.constant 0 : index
    %c0_19 = arith.constant 0 : index
    %15 = vector.load %arg7[%c0_18, %c0_19] : memref<20x128xf32, #tpu.memory_space<vmem>>, vector<20x128xf32>
    %c0_20 = arith.constant 0 : index
    %c0_21 = arith.constant 0 : index
    %c0_22 = arith.constant 0 : index
    %16 = vector.load %arg2[%c0_20, %c0_21, %c0_22] : memref<5x4x20xf32, #tpu.memory_space<vmem>>, vector<1x4x20xf32>
    %17 = vector.shape_cast %16 : vector<1x4x20xf32> to vector<4x20xf32>
    %cst = arith.constant dense<0.000000e+00> : vector<4x128xf32>
    %18 = tpu.matmul %17, %15, %cst {dimension_numbers = #tpu.dot_dimension_numbers<[1], [0], [0], [1], [0, 0, 1, 1], [], []>} : vector<4x20xf32>, vector<20x128xf32>, vector<4x128xf32> -> vector<4x128xf32>
    %c0_23 = arith.constant 0 : index
    %c0_24 = arith.constant 0 : index
    %19 = vector.load %arg8[%c0_23, %c0_24] : memref<4x128xf32, #tpu.memory_space<vmem>>, vector<4x128xf32>
    tpu.vector_store %arg8[%c0_23, %c0_24], %18 {strides = array<i32>} : memref<4x128xf32, #tpu.memory_space<vmem>>, vector<4x128xf32>,
    %c0_25 = arith.constant 0 : index
    %c0_26 = arith.constant 0 : index
    %c0_27 = arith.constant 0 : index
    %20 = vector.load %arg3[%c0_25, %c0_26, %c0_27] : memref<5x4x20xf32, #tpu.memory_space<vmem>>, vector<1x4x20xf32>
    %21 = vector.shape_cast %20 : vector<1x4x20xf32> to vector<4x20xf32>
    %cst_28 = arith.constant dense<0.000000e+00> : vector<4x128xf32>
    %22 = tpu.matmul %21, %15, %cst_28 {dimension_numbers = #tpu.dot_dimension_numbers<[1], [0], [0], [1], [0, 0, 1, 1], [], []>} : vector<4x20xf32>, vector<20x128xf32>, vector<4x128xf32> -> vector<4x128xf32>
    %c0_29 = arith.constant 0 : index
    %c0_30 = arith.constant 0 : index
    %23 = vector.load %arg9[%c0_29, %c0_30] : memref<4x128xf32, #tpu.memory_space<vmem>>, vector<4x128xf32>
    tpu.vector_store %arg9[%c0_29, %c0_30], %22 {strides = array<i32>} : memref<4x128xf32, #tpu.memory_space<vmem>>, vector<4x128xf32>,
    %c0_31 = arith.constant 0 : index
    %c0_32 = arith.constant 0 : index
    %c48 = arith.constant 48 : index
    %24 = vector.load %arg1[%c0_31, %c0_32, %c48] : memref<1x4x600xf32, #tpu.memory_space<vmem>>, vector<1x4x128xf32>
    %25 = vector.shape_cast %24 : vector<1x4x128xf32> to vector<4x128xf32>
    %c0_33 = arith.constant 0 : index
    %c0_34 = arith.constant 0 : index
    %26 = vector.load %arg7[%c0_33, %c0_34] : memref<20x128xf32, #tpu.memory_space<vmem>>, vector<4x128xf32>
    tpu.vector_store %arg7[%c0_33, %c0_34], %25 {strides = array<i32>} : memref<20x128xf32, #tpu.memory_space<vmem>>, vector<4x128xf32>,
    %c0_35 = arith.constant 0 : index
    %c0_36 = arith.constant 0 : index
    %c50 = arith.constant 50 : index
    %27 = vector.load %arg1[%c0_35, %c0_36, %c50] : memref<1x4x600xf32, #tpu.memory_space<vmem>>, vector<1x4x128xf32>
    %28 = vector.shape_cast %27 : vector<1x4x128xf32> to vector<4x128xf32>
    %c4_37 = arith.constant 4 : index
    %c0_38 = arith.constant 0 : index
    %29 = vector.load %arg7[%c4_37, %c0_38] : memref<20x128xf32, #tpu.memory_space<vmem>>, vector<4x128xf32>
    tpu.vector_store %arg7[%c4_37, %c0_38], %28 {strides = array<i32>} : memref<20x128xf32, #tpu.memory_space<vmem>>, vector<4x128xf32>,
    %c0_39 = arith.constant 0 : index
    %c0_40 = arith.constant 0 : index
    %c52 = arith.constant 52 : index
    %30 = vector.load %arg1[%c0_39, %c0_40, %c52] : memref<1x4x600xf32, #tpu.memory_space<vmem>>, vector<1x4x128xf32>
    %31 = vector.shape_cast %30 : vector<1x4x128xf32> to vector<4x128xf32>
    %c8_41 = arith.constant 8 : index
    %c0_42 = arith.constant 0 : index
    %32 = vector.load %arg7[%c8_41, %c0_42] : memref<20x128xf32, #tpu.memory_space<vmem>>, vector<4x128xf32>
    tpu.vector_store %arg7[%c8_41, %c0_42], %31 {strides = array<i32>} : memref<20x128xf32, #tpu.memory_space<vmem>>, vector<4x128xf32>,
    %c0_43 = arith.constant 0 : index
    %c0_44 = arith.constant 0 : index
    %c54 = arith.constant 54 : index
    %33 = vector.load %arg1[%c0_43, %c0_44, %c54] : memref<1x4x600xf32, #tpu.memory_space<vmem>>, vector<1x4x128xf32>
    %34 = vector.shape_cast %33 : vector<1x4x128xf32> to vector<4x128xf32>
    %c12_45 = arith.constant 12 : index
    %c0_46 = arith.constant 0 : index
    %35 = vector.load %arg7[%c12_45, %c0_46] : memref<20x128xf32, #tpu.memory_space<vmem>>, vector<4x128xf32>
    tpu.vector_store %arg7[%c12_45, %c0_46], %34 {strides = array<i32>} : memref<20x128xf32, #tpu.memory_space<vmem>>, vector<4x128xf32>,
    %c0_47 = arith.constant 0 : index
    %c0_48 = arith.constant 0 : index
    %c56 = arith.constant 56 : index
    %36 = vector.load %arg1[%c0_47, %c0_48, %c56] : memref<1x4x600xf32, #tpu.memory_space<vmem>>, vector<1x4x128xf32>
    %37 = vector.shape_cast %36 : vector<1x4x128xf32> to vector<4x128xf32>
    %c16_49 = arith.constant 16 : index
    %c0_50 = arith.constant 0 : index
    %38 = vector.load %arg7[%c16_49, %c0_50] : memref<20x128xf32, #tpu.memory_space<vmem>>, vector<4x128xf32>
    tpu.vector_store %arg7[%c16_49, %c0_50], %37 {strides = array<i32>} : memref<20x128xf32, #tpu.memory_space<vmem>>, vector<4x128xf32>,
    %c0_51 = arith.constant 0 : index
    %c0_52 = arith.constant 0 : index
    %39 = vector.load %arg7[%c0_51, %c0_52] : memref<20x128xf32, #tpu.memory_space<vmem>>, vector<20x128xf32>
    %c1 = arith.constant 1 : index
    %c0_53 = arith.constant 0 : index
    %c0_54 = arith.constant 0 : index
    %40 = vector.load %arg2[%c1, %c0_53, %c0_54] : memref<5x4x20xf32, #tpu.memory_space<vmem>>, vector<1x4x20xf32>
    %41 = vector.shape_cast %40 : vector<1x4x20xf32> to vector<4x20xf32>
    %cst_55 = arith.constant dense<0.000000e+00> : vector<4x128xf32>
    %42 = tpu.matmul %41, %39, %cst_55 {dimension_numbers = #tpu.dot_dimension_numbers<[1], [0], [0], [1], [0, 0, 1, 1], [], []>} : vector<4x20xf32>, vector<20x128xf32>, vector<4x128xf32> -> vector<4x128xf32>
    %c0_56 = arith.constant 0 : index
    %c0_57 = arith.constant 0 : index
    %43 = vector.load %arg8[%c0_56, %c0_57] : memref<4x128xf32, #tpu.memory_space<vmem>>, vector<4x128xf32>
    %44 = arith.addf %43, %42 : vector<4x128xf32>
    %c0_58 = arith.constant 0 : index
    %c0_59 = arith.constant 0 : index
    %45 = vector.load %arg8[%c0_58, %c0_59] : memref<4x128xf32, #tpu.memory_space<vmem>>, vector<4x128xf32>
    tpu.vector_store %arg8[%c0_58, %c0_59], %44 {strides = array<i32>} : memref<4x128xf32, #tpu.memory_space<vmem>>, vector<4x128xf32>,
    %c1_60 = arith.constant 1 : index
    %c0_61 = arith.constant 0 : index
    %c0_62 = arith.constant 0 : index
    %46 = vector.load %arg3[%c1_60, %c0_61, %c0_62] : memref<5x4x20xf32, #tpu.memory_space<vmem>>, vector<1x4x20xf32>
    %47 = vector.shape_cast %46 : vector<1x4x20xf32> to vector<4x20xf32>
    %cst_63 = arith.constant dense<0.000000e+00> : vector<4x128xf32>
    %48 = tpu.matmul %47, %39, %cst_63 {dimension_numbers = #tpu.dot_dimension_numbers<[1], [0], [0], [1], [0, 0, 1, 1], [], []>} : vector<4x20xf32>, vector<20x128xf32>, vector<4x128xf32> -> vector<4x128xf32>
    %c0_64 = arith.constant 0 : index
    %c0_65 = arith.constant 0 : index
    %49 = vector.load %arg9[%c0_64, %c0_65] : memref<4x128xf32, #tpu.memory_space<vmem>>, vector<4x128xf32>
    %50 = arith.addf %49, %48 : vector<4x128xf32>
    %c0_66 = arith.constant 0 : index
    %c0_67 = arith.constant 0 : index
    %51 = vector.load %arg9[%c0_66, %c0_67] : memref<4x128xf32, #tpu.memory_space<vmem>>, vector<4x128xf32>
    tpu.vector_store %arg9[%c0_66, %c0_67], %50 {strides = array<i32>} : memref<4x128xf32, #tpu.memory_space<vmem>>, vector<4x128xf32>,
    %c0_68 = arith.constant 0 : index
    %c0_69 = arith.constant 0 : index
    %c96 = arith.constant 96 : index
    %52 = vector.load %arg1[%c0_68, %c0_69, %c96] : memref<1x4x600xf32, #tpu.memory_space<vmem>>, vector<1x4x128xf32>
    %53 = vector.shape_cast %52 : vector<1x4x128xf32> to vector<4x128xf32>
    %c0_70 = arith.constant 0 : index
    %c0_71 = arith.constant 0 : index
    %54 = vector.load %arg7[%c0_70, %c0_71] : memref<20x128xf32, #tpu.memory_space<vmem>>, vector<4x128xf32>
    tpu.vector_store %arg7[%c0_70, %c0_71], %53 {strides = array<i32>} : memref<20x128xf32, #tpu.memory_space<vmem>>, vector<4x128xf32>,
    %c0_72 = arith.constant 0 : index
    %c0_73 = arith.constant 0 : index
    %c98 = arith.constant 98 : index
    %55 = vector.load %arg1[%c0_72, %c0_73, %c98] : memref<1x4x600xf32, #tpu.memory_space<vmem>>, vector<1x4x128xf32>
    %56 = vector.shape_cast %55 : vector<1x4x128xf32> to vector<4x128xf32>
    %c4_74 = arith.constant 4 : index
    %c0_75 = arith.constant 0 : index
    %57 = vector.load %arg7[%c4_74, %c0_75] : memref<20x128xf32, #tpu.memory_space<vmem>>, vector<4x128xf32>
    tpu.vector_store %arg7[%c4_74, %c0_75], %56 {strides = array<i32>} : memref<20x128xf32, #tpu.memory_space<vmem>>, vector<4x128xf32>,
    %c0_76 = arith.constant 0 : index
    %c0_77 = arith.constant 0 : index
    %c100 = arith.constant 100 : index
    %58 = vector.load %arg1[%c0_76, %c0_77, %c100] : memref<1x4x600xf32, #tpu.memory_space<vmem>>, vector<1x4x128xf32>
    %59 = vector.shape_cast %58 : vector<1x4x128xf32> to vector<4x128xf32>
    %c8_78 = arith.constant 8 : index
    %c0_79 = arith.constant 0 : index
    %60 = vector.load %arg7[%c8_78, %c0_79] : memref<20x128xf32, #tpu.memory_space<vmem>>, vector<4x128xf32>
    tpu.vector_store %arg7[%c8_78, %c0_79], %59 {strides = array<i32>} : memref<20x128xf32, #tpu.memory_space<vmem>>, vector<4x128xf32>,
    %c0_80 = arith.constant 0 : index
    %c0_81 = arith.constant 0 : index
    %c102 = arith.constant 102 : index
    %61 = vector.load %arg1[%c0_80, %c0_81, %c102] : memref<1x4x600xf32, #tpu.memory_space<vmem>>, vector<1x4x128xf32>
    %62 = vector.shape_cast %61 : vector<1x4x128xf32> to vector<4x128xf32>
    %c12_82 = arith.constant 12 : index
    %c0_83 = arith.constant 0 : index
    %63 = vector.load %arg7[%c12_82, %c0_83] : memref<20x128xf32, #tpu.memory_space<vmem>>, vector<4x128xf32>
    tpu.vector_store %arg7[%c12_82, %c0_83], %62 {strides = array<i32>} : memref<20x128xf32, #tpu.memory_space<vmem>>, vector<4x128xf32>,
    %c0_84 = arith.constant 0 : index
    %c0_85 = arith.constant 0 : index
    %c104 = arith.constant 104 : index
    %64 = vector.load %arg1[%c0_84, %c0_85, %c104] : memref<1x4x600xf32, #tpu.memory_space<vmem>>, vector<1x4x128xf32>
    %65 = vector.shape_cast %64 : vector<1x4x128xf32> to vector<4x128xf32>
    %c16_86 = arith.constant 16 : index
    %c0_87 = arith.constant 0 : index
    %66 = vector.load %arg7[%c16_86, %c0_87] : memref<20x128xf32, #tpu.memory_space<vmem>>, vector<4x128xf32>
    tpu.vector_store %arg7[%c16_86, %c0_87], %65 {strides = array<i32>} : memref<20x128xf32, #tpu.memory_space<vmem>>, vector<4x128xf32>,
    %c0_88 = arith.constant 0 : index
    %c0_89 = arith.constant 0 : index
    %67 = vector.load %arg7[%c0_88, %c0_89] : memref<20x128xf32, #tpu.memory_space<vmem>>, vector<20x128xf32>
    %c2_90 = arith.constant 2 : index
    %c0_91 = arith.constant 0 : index
    %c0_92 = arith.constant 0 : index
    %68 = vector.load %arg2[%c2_90, %c0_91, %c0_92] : memref<5x4x20xf32, #tpu.memory_space<vmem>>, vector<1x4x20xf32>
    %69 = vector.shape_cast %68 : vector<1x4x20xf32> to vector<4x20xf32>
    %cst_93 = arith.constant dense<0.000000e+00> : vector<4x128xf32>
    %70 = tpu.matmul %69, %67, %cst_93 {dimension_numbers = #tpu.dot_dimension_numbers<[1], [0], [0], [1], [0, 0, 1, 1], [], []>} : vector<4x20xf32>, vector<20x128xf32>, vector<4x128xf32> -> vector<4x128xf32>
    %c0_94 = arith.constant 0 : index
    %c0_95 = arith.constant 0 : index
    %71 = vector.load %arg8[%c0_94, %c0_95] : memref<4x128xf32, #tpu.memory_space<vmem>>, vector<4x128xf32>
    %72 = arith.addf %71, %70 : vector<4x128xf32>
    %c0_96 = arith.constant 0 : index
    %c0_97 = arith.constant 0 : index
    %73 = vector.load %arg8[%c0_96, %c0_97] : memref<4x128xf32, #tpu.memory_space<vmem>>, vector<4x128xf32>
    tpu.vector_store %arg8[%c0_96, %c0_97], %72 {strides = array<i32>} : memref<4x128xf32, #tpu.memory_space<vmem>>, vector<4x128xf32>,
    %c2_98 = arith.constant 2 : index
    %c0_99 = arith.constant 0 : index
    %c0_100 = arith.constant 0 : index
    %74 = vector.load %arg3[%c2_98, %c0_99, %c0_100] : memref<5x4x20xf32, #tpu.memory_space<vmem>>, vector<1x4x20xf32>
    %75 = vector.shape_cast %74 : vector<1x4x20xf32> to vector<4x20xf32>
    %cst_101 = arith.constant dense<0.000000e+00> : vector<4x128xf32>
    %76 = tpu.matmul %75, %67, %cst_101 {dimension_numbers = #tpu.dot_dimension_numbers<[1], [0], [0], [1], [0, 0, 1, 1], [], []>} : vector<4x20xf32>, vector<20x128xf32>, vector<4x128xf32> -> vector<4x128xf32>
    %c0_102 = arith.constant 0 : index
    %c0_103 = arith.constant 0 : index
    %77 = vector.load %arg9[%c0_102, %c0_103] : memref<4x128xf32, #tpu.memory_space<vmem>>, vector<4x128xf32>
    %78 = arith.addf %77, %76 : vector<4x128xf32>
    %c0_104 = arith.constant 0 : index
    %c0_105 = arith.constant 0 : index
    %79 = vector.load %arg9[%c0_104, %c0_105] : memref<4x128xf32, #tpu.memory_space<vmem>>, vector<4x128xf32>
    tpu.vector_store %arg9[%c0_104, %c0_105], %78 {strides = array<i32>} : memref<4x128xf32, #tpu.memory_space<vmem>>, vector<4x128xf32>,
    %c0_106 = arith.constant 0 : index
    %c0_107 = arith.constant 0 : index
    %c144 = arith.constant 144 : index
    %80 = vector.load %arg1[%c0_106, %c0_107, %c144] : memref<1x4x600xf32, #tpu.memory_space<vmem>>, vector<1x4x128xf32>
    %81 = vector.shape_cast %80 : vector<1x4x128xf32> to vector<4x128xf32>
    %c0_108 = arith.constant 0 : index
    %c0_109 = arith.constant 0 : index
    %82 = vector.load %arg7[%c0_108, %c0_109] : memref<20x128xf32, #tpu.memory_space<vmem>>, vector<4x128xf32>
    tpu.vector_store %arg7[%c0_108, %c0_109], %81 {strides = array<i32>} : memref<20x128xf32, #tpu.memory_space<vmem>>, vector<4x128xf32>,
    %c0_110 = arith.constant 0 : index
    %c0_111 = arith.constant 0 : index
    %c146 = arith.constant 146 : index
    %83 = vector.load %arg1[%c0_110, %c0_111, %c146] : memref<1x4x600xf32, #tpu.memory_space<vmem>>, vector<1x4x128xf32>
    %84 = vector.shape_cast %83 : vector<1x4x128xf32> to vector<4x128xf32>
    %c4_112 = arith.constant 4 : index
    %c0_113 = arith.constant 0 : index
    %85 = vector.load %arg7[%c4_112, %c0_113] : memref<20x128xf32, #tpu.memory_space<vmem>>, vector<4x128xf32>
    tpu.vector_store %arg7[%c4_112, %c0_113], %84 {strides = array<i32>} : memref<20x128xf32, #tpu.memory_space<vmem>>, vector<4x128xf32>,
    %c0_114 = arith.constant 0 : index
    %c0_115 = arith.constant 0 : index
    %c148 = arith.constant 148 : index
    %86 = vector.load %arg1[%c0_114, %c0_115, %c148] : memref<1x4x600xf32, #tpu.memory_space<vmem>>, vector<1x4x128xf32>
    %87 = vector.shape_cast %86 : vector<1x4x128xf32> to vector<4x128xf32>
    %c8_116 = arith.constant 8 : index
    %c0_117 = arith.constant 0 : index
    %88 = vector.load %arg7[%c8_116, %c0_117] : memref<20x128xf32, #tpu.memory_space<vmem>>, vector<4x128xf32>
    tpu.vector_store %arg7[%c8_116, %c0_117], %87 {strides = array<i32>} : memref<20x128xf32, #tpu.memory_space<vmem>>, vector<4x128xf32>,
    %c0_118 = arith.constant 0 : index
    %c0_119 = arith.constant 0 : index
    %c150 = arith.constant 150 : index
    %89 = vector.load %arg1[%c0_118, %c0_119, %c150] : memref<1x4x600xf32, #tpu.memory_space<vmem>>, vector<1x4x128xf32>
    %90 = vector.shape_cast %89 : vector<1x4x128xf32> to vector<4x128xf32>
    %c12_120 = arith.constant 12 : index
    %c0_121 = arith.constant 0 : index
    %91 = vector.load %arg7[%c12_120, %c0_121] : memref<20x128xf32, #tpu.memory_space<vmem>>, vector<4x128xf32>
    tpu.vector_store %arg7[%c12_120, %c0_121], %90 {strides = array<i32>} : memref<20x128xf32, #tpu.memory_space<vmem>>, vector<4x128xf32>,
    %c0_122 = arith.constant 0 : index
    %c0_123 = arith.constant 0 : index
    %c152 = arith.constant 152 : index
    %92 = vector.load %arg1[%c0_122, %c0_123, %c152] : memref<1x4x600xf32, #tpu.memory_space<vmem>>, vector<1x4x128xf32>
    %93 = vector.shape_cast %92 : vector<1x4x128xf32> to vector<4x128xf32>
    %c16_124 = arith.constant 16 : index
    %c0_125 = arith.constant 0 : index
    %94 = vector.load %arg7[%c16_124, %c0_125] : memref<20x128xf32, #tpu.memory_space<vmem>>, vector<4x128xf32>
    tpu.vector_store %arg7[%c16_124, %c0_125], %93 {strides = array<i32>} : memref<20x128xf32, #tpu.memory_space<vmem>>, vector<4x128xf32>,
    %c0_126 = arith.constant 0 : index
    %c0_127 = arith.constant 0 : index
    %95 = vector.load %arg7[%c0_126, %c0_127] : memref<20x128xf32, #tpu.memory_space<vmem>>, vector<20x128xf32>
    %c3 = arith.constant 3 : index
    %c0_128 = arith.constant 0 : index
    %c0_129 = arith.constant 0 : index
    %96 = vector.load %arg2[%c3, %c0_128, %c0_129] : memref<5x4x20xf32, #tpu.memory_space<vmem>>, vector<1x4x20xf32>
    %97 = vector.shape_cast %96 : vector<1x4x20xf32> to vector<4x20xf32>
    %cst_130 = arith.constant dense<0.000000e+00> : vector<4x128xf32>
    %98 = tpu.matmul %97, %95, %cst_130 {dimension_numbers = #tpu.dot_dimension_numbers<[1], [0], [0], [1], [0, 0, 1, 1], [], []>} : vector<4x20xf32>, vector<20x128xf32>, vector<4x128xf32> -> vector<4x128xf32>
    %c0_131 = arith.constant 0 : index
    %c0_132 = arith.constant 0 : index
    %99 = vector.load %arg8[%c0_131, %c0_132] : memref<4x128xf32, #tpu.memory_space<vmem>>, vector<4x128xf32>
    %100 = arith.addf %99, %98 : vector<4x128xf32>
    %c0_133 = arith.constant 0 : index
    %c0_134 = arith.constant 0 : index
    %101 = vector.load %arg8[%c0_133, %c0_134] : memref<4x128xf32, #tpu.memory_space<vmem>>, vector<4x128xf32>
    tpu.vector_store %arg8[%c0_133, %c0_134], %100 {strides = array<i32>} : memref<4x128xf32, #tpu.memory_space<vmem>>, vector<4x128xf32>,
    %c3_135 = arith.constant 3 : index
    %c0_136 = arith.constant 0 : index
    %c0_137 = arith.constant 0 : index
    %102 = vector.load %arg3[%c3_135, %c0_136, %c0_137] : memref<5x4x20xf32, #tpu.memory_space<vmem>>, vector<1x4x20xf32>
    %103 = vector.shape_cast %102 : vector<1x4x20xf32> to vector<4x20xf32>
    %cst_138 = arith.constant dense<0.000000e+00> : vector<4x128xf32>
    %104 = tpu.matmul %103, %95, %cst_138 {dimension_numbers = #tpu.dot_dimension_numbers<[1], [0], [0], [1], [0, 0, 1, 1], [], []>} : vector<4x20xf32>, vector<20x128xf32>, vector<4x128xf32> -> vector<4x128xf32>
    %c0_139 = arith.constant 0 : index
    %c0_140 = arith.constant 0 : index
    %105 = vector.load %arg9[%c0_139, %c0_140] : memref<4x128xf32, #tpu.memory_space<vmem>>, vector<4x128xf32>
    %106 = arith.addf %105, %104 : vector<4x128xf32>
    %c0_141 = arith.constant 0 : index
    %c0_142 = arith.constant 0 : index
    %107 = vector.load %arg9[%c0_141, %c0_142] : memref<4x128xf32, #tpu.memory_space<vmem>>, vector<4x128xf32>
    tpu.vector_store %arg9[%c0_141, %c0_142], %106 {strides = array<i32>} : memref<4x128xf32, #tpu.memory_space<vmem>>, vector<4x128xf32>,
    %c0_143 = arith.constant 0 : index
    %c0_144 = arith.constant 0 : index
    %c192 = arith.constant 192 : index
    %108 = vector.load %arg1[%c0_143, %c0_144, %c192] : memref<1x4x600xf32, #tpu.memory_space<vmem>>, vector<1x4x128xf32>
    %109 = vector.shape_cast %108 : vector<1x4x128xf32> to vector<4x128xf32>
    %c0_145 = arith.constant 0 : index
    %c0_146 = arith.constant 0 : index
    %110 = vector.load %arg7[%c0_145, %c0_146] : memref<20x128xf32, #tpu.memory_space<vmem>>, vector<4x128xf32>
    tpu.vector_store %arg7[%c0_145, %c0_146], %109 {strides = array<i32>} : memref<20x128xf32, #tpu.memory_space<vmem>>, vector<4x128xf32>,
    %c0_147 = arith.constant 0 : index
    %c0_148 = arith.constant 0 : index
    %c194 = arith.constant 194 : index
    %111 = vector.load %arg1[%c0_147, %c0_148, %c194] : memref<1x4x600xf32, #tpu.memory_space<vmem>>, vector<1x4x128xf32>
    %112 = vector.shape_cast %111 : vector<1x4x128xf32> to vector<4x128xf32>
    %c4_149 = arith.constant 4 : index
    %c0_150 = arith.constant 0 : index
    %113 = vector.load %arg7[%c4_149, %c0_150] : memref<20x128xf32, #tpu.memory_space<vmem>>, vector<4x128xf32>
    tpu.vector_store %arg7[%c4_149, %c0_150], %112 {strides = array<i32>} : memref<20x128xf32, #tpu.memory_space<vmem>>, vector<4x128xf32>,
    %c0_151 = arith.constant 0 : index
    %c0_152 = arith.constant 0 : index
    %c196 = arith.constant 196 : index
    %114 = vector.load %arg1[%c0_151, %c0_152, %c196] : memref<1x4x600xf32, #tpu.memory_space<vmem>>, vector<1x4x128xf32>
    %115 = vector.shape_cast %114 : vector<1x4x128xf32> to vector<4x128xf32>
    %c8_153 = arith.constant 8 : index
    %c0_154 = arith.constant 0 : index
    %116 = vector.load %arg7[%c8_153, %c0_154] : memref<20x128xf32, #tpu.memory_space<vmem>>, vector<4x128xf32>
    tpu.vector_store %arg7[%c8_153, %c0_154], %115 {strides = array<i32>} : memref<20x128xf32, #tpu.memory_space<vmem>>, vector<4x128xf32>,
    %c0_155 = arith.constant 0 : index
    %c0_156 = arith.constant 0 : index
    %c198 = arith.constant 198 : index
    %117 = vector.load %arg1[%c0_155, %c0_156, %c198] : memref<1x4x600xf32, #tpu.memory_space<vmem>>, vector<1x4x128xf32>
    %118 = vector.shape_cast %117 : vector<1x4x128xf32> to vector<4x128xf32>
    %c12_157 = arith.constant 12 : index
    %c0_158 = arith.constant 0 : index
    %119 = vector.load %arg7[%c12_157, %c0_158] : memref<20x128xf32, #tpu.memory_space<vmem>>, vector<4x128xf32>
    tpu.vector_store %arg7[%c12_157, %c0_158], %118 {strides = array<i32>} : memref<20x128xf32, #tpu.memory_space<vmem>>, vector<4x128xf32>,
    %c0_159 = arith.constant 0 : index
    %c0_160 = arith.constant 0 : index
    %c200 = arith.constant 200 : index
    %120 = vector.load %arg1[%c0_159, %c0_160, %c200] : memref<1x4x600xf32, #tpu.memory_space<vmem>>, vector<1x4x128xf32>
    %121 = vector.shape_cast %120 : vector<1x4x128xf32> to vector<4x128xf32>
    %c16_161 = arith.constant 16 : index
    %c0_162 = arith.constant 0 : index
    %122 = vector.load %arg7[%c16_161, %c0_162] : memref<20x128xf32, #tpu.memory_space<vmem>>, vector<4x128xf32>
    tpu.vector_store %arg7[%c16_161, %c0_162], %121 {strides = array<i32>} : memref<20x128xf32, #tpu.memory_space<vmem>>, vector<4x128xf32>,
    %c0_163 = arith.constant 0 : index
    %c0_164 = arith.constant 0 : index
    %123 = vector.load %arg7[%c0_163, %c0_164] : memref<20x128xf32, #tpu.memory_space<vmem>>, vector<20x128xf32>
    %c4_165 = arith.constant 4 : index
    %c0_166 = arith.constant 0 : index
    %c0_167 = arith.constant 0 : index
    %124 = vector.load %arg2[%c4_165, %c0_166, %c0_167] : memref<5x4x20xf32, #tpu.memory_space<vmem>>, vector<1x4x20xf32>
    %125 = vector.shape_cast %124 : vector<1x4x20xf32> to vector<4x20xf32>
    %cst_168 = arith.constant dense<0.000000e+00> : vector<4x128xf32>
    %126 = tpu.matmul %125, %123, %cst_168 {dimension_numbers = #tpu.dot_dimension_numbers<[1], [0], [0], [1], [0, 0, 1, 1], [], []>} : vector<4x20xf32>, vector<20x128xf32>, vector<4x128xf32> -> vector<4x128xf32>
    %c0_169 = arith.constant 0 : index
    %c0_170 = arith.constant 0 : index
    %127 = vector.load %arg8[%c0_169, %c0_170] : memref<4x128xf32, #tpu.memory_space<vmem>>, vector<4x128xf32>
    %128 = arith.addf %127, %126 : vector<4x128xf32>
    %c0_171 = arith.constant 0 : index
    %c0_172 = arith.constant 0 : index
    %129 = vector.load %arg8[%c0_171, %c0_172] : memref<4x128xf32, #tpu.memory_space<vmem>>, vector<4x128xf32>
    tpu.vector_store %arg8[%c0_171, %c0_172], %128 {strides = array<i32>} : memref<4x128xf32, #tpu.memory_space<vmem>>, vector<4x128xf32>,
    %c4_173 = arith.constant 4 : index
    %c0_174 = arith.constant 0 : index
    %c0_175 = arith.constant 0 : index
    %130 = vector.load %arg3[%c4_173, %c0_174, %c0_175] : memref<5x4x20xf32, #tpu.memory_space<vmem>>, vector<1x4x20xf32>
    %131 = vector.shape_cast %130 : vector<1x4x20xf32> to vector<4x20xf32>
    %cst_176 = arith.constant dense<0.000000e+00> : vector<4x128xf32>
    %132 = tpu.matmul %131, %123, %cst_176 {dimension_numbers = #tpu.dot_dimension_numbers<[1], [0], [0], [1], [0, 0, 1, 1], [], []>} : vector<4x20xf32>, vector<20x128xf32>, vector<4x128xf32> -> vector<4x128xf32>
    %c0_177 = arith.constant 0 : index
    %c0_178 = arith.constant 0 : index
    %133 = vector.load %arg9[%c0_177, %c0_178] : memref<4x128xf32, #tpu.memory_space<vmem>>, vector<4x128xf32>
    %134 = arith.addf %133, %132 : vector<4x128xf32>
    %c0_179 = arith.constant 0 : index
    %c0_180 = arith.constant 0 : index
    %135 = vector.load %arg9[%c0_179, %c0_180] : memref<4x128xf32, #tpu.memory_space<vmem>>, vector<4x128xf32>
    tpu.vector_store %arg9[%c0_179, %c0_180], %134 {strides = array<i32>} : memref<4x128xf32, #tpu.memory_space<vmem>>, vector<4x128xf32>,
    %c0_181 = arith.constant 0 : index
    %c0_182 = arith.constant 0 : index
    %136 = vector.load %arg8[%c0_181, %c0_182] : memref<4x128xf32, #tpu.memory_space<vmem>>, vector<4x128xf32>
    %c0_183 = arith.constant 0 : index
    %c0_184 = arith.constant 0 : index
    %137 = vector.load %arg4[%c0_183, %c0_184] : memref<4x1xf32, #tpu.memory_space<vmem>>, vector<4x1xf32>
    %138 = vector.broadcast %137 : vector<4x1xf32> to vector<4x128xf32>
    %139 = arith.addf %136, %138 : vector<4x128xf32>
    %c0_185 = arith.constant 0 : index
    %c0_186 = arith.constant 0 : index
    %140 = vector.load %arg9[%c0_185, %c0_186] : memref<4x128xf32, #tpu.memory_space<vmem>>, vector<4x128xf32>
    %c0_187 = arith.constant 0 : index
    %c0_188 = arith.constant 0 : index
    %141 = vector.load %arg5[%c0_187, %c0_188] : memref<4x1xf32, #tpu.memory_space<vmem>>, vector<4x1xf32>
    %142 = vector.broadcast %141 : vector<4x1xf32> to vector<4x128xf32>
    %143 = arith.addf %140, %142 : vector<4x128xf32>
    %144 = arith.negf %143 : vector<4x128xf32>
    %145 = math.exp %144 : vector<4x128xf32>
    %cst_189 = arith.constant 1.000000e+00 : f32
    %146 = vector.broadcast %cst_189 : f32 to vector<4x128xf32>
    %147 = arith.addf %146, %145 : vector<4x128xf32>
    %148 = arith.divf %146, %147 : vector<4x128xf32>
    %149 = arith.mulf %139, %148 : vector<4x128xf32>
    %c0_190 = arith.constant 0 : index
    %c0_191 = arith.constant 0 : index
    %c0_192 = arith.constant 0 : index
    %150 = vector.load %arg6[%c0_190, %c0_191, %c0_192] : memref<1x4x384xf32, #tpu.memory_space<vmem>>, vector<1x4x128xf32>
    %151 = vector.shape_cast %150 : vector<1x4x128xf32> to vector<4x128xf32>
    %152 = vector.shape_cast %149 : vector<4x128xf32> to vector<1x4x128xf32>
    tpu.vector_store %arg6[%c0_190, %c0_191, %c0_192], %152 {strides = array<i32>} : memref<1x4x384xf32, #tpu.memory_space<vmem>>, vector<1x4x128xf32>,
    %c0_193 = arith.constant 0 : index
    %c0_194 = arith.constant 0 : index
    %c128 = arith.constant 128 : index
    %153 = vector.load %arg1[%c0_193, %c0_194, %c128] : memref<1x4x600xf32, #tpu.memory_space<vmem>>, vector<1x4x128xf32>
    %154 = vector.shape_cast %153 : vector<1x4x128xf32> to vector<4x128xf32>
    %c0_195 = arith.constant 0 : index
    %c0_196 = arith.constant 0 : index
    %155 = vector.load %arg7[%c0_195, %c0_196] : memref<20x128xf32, #tpu.memory_space<vmem>>, vector<4x128xf32>
    tpu.vector_store %arg7[%c0_195, %c0_196], %154 {strides = array<i32>} : memref<20x128xf32, #tpu.memory_space<vmem>>, vector<4x128xf32>,
    %c0_197 = arith.constant 0 : index
    %c0_198 = arith.constant 0 : index
    %c130 = arith.constant 130 : index
    %156 = vector.load %arg1[%c0_197, %c0_198, %c130] : memref<1x4x600xf32, #tpu.memory_space<vmem>>, vector<1x4x128xf32>
    %157 = vector.shape_cast %156 : vector<1x4x128xf32> to vector<4x128xf32>
    %c4_199 = arith.constant 4 : index
    %c0_200 = arith.constant 0 : index
    %158 = vector.load %arg7[%c4_199, %c0_200] : memref<20x128xf32, #tpu.memory_space<vmem>>, vector<4x128xf32>
    tpu.vector_store %arg7[%c4_199, %c0_200], %157 {strides = array<i32>} : memref<20x128xf32, #tpu.memory_space<vmem>>, vector<4x128xf32>,
    %c0_201 = arith.constant 0 : index
    %c0_202 = arith.constant 0 : index
    %c132 = arith.constant 132 : index
    %159 = vector.load %arg1[%c0_201, %c0_202, %c132] : memref<1x4x600xf32, #tpu.memory_space<vmem>>, vector<1x4x128xf32>
    %160 = vector.shape_cast %159 : vector<1x4x128xf32> to vector<4x128xf32>
    %c8_203 = arith.constant 8 : index
    %c0_204 = arith.constant 0 : index
    %161 = vector.load %arg7[%c8_203, %c0_204] : memref<20x128xf32, #tpu.memory_space<vmem>>, vector<4x128xf32>
    tpu.vector_store %arg7[%c8_203, %c0_204], %160 {strides = array<i32>} : memref<20x128xf32, #tpu.memory_space<vmem>>, vector<4x128xf32>,
    %c0_205 = arith.constant 0 : index
    %c0_206 = arith.constant 0 : index
    %c134 = arith.constant 134 : index
    %162 = vector.load %arg1[%c0_205, %c0_206, %c134] : memref<1x4x600xf32, #tpu.memory_space<vmem>>, vector<1x4x128xf32>
    %163 = vector.shape_cast %162 : vector<1x4x128xf32> to vector<4x128xf32>
    %c12_207 = arith.constant 12 : index
    %c0_208 = arith.constant 0 : index
    %164 = vector.load %arg7[%c12_207, %c0_208] : memref<20x128xf32, #tpu.memory_space<vmem>>, vector<4x128xf32>
    tpu.vector_store %arg7[%c12_207, %c0_208], %163 {strides = array<i32>} : memref<20x128xf32, #tpu.memory_space<vmem>>, vector<4x128xf32>,
    %c0_209 = arith.constant 0 : index
    %c0_210 = arith.constant 0 : index
    %c136 = arith.constant 136 : index
    %165 = vector.load %arg1[%c0_209, %c0_210, %c136] : memref<1x4x600xf32, #tpu.memory_space<vmem>>, vector<1x4x128xf32>
    %166 = vector.shape_cast %165 : vector<1x4x128xf32> to vector<4x128xf32>
    %c16_211 = arith.constant 16 : index
    %c0_212 = arith.constant 0 : index
    %167 = vector.load %arg7[%c16_211, %c0_212] : memref<20x128xf32, #tpu.memory_space<vmem>>, vector<4x128xf32>
    tpu.vector_store %arg7[%c16_211, %c0_212], %166 {strides = array<i32>} : memref<20x128xf32, #tpu.memory_space<vmem>>, vector<4x128xf32>,
    %c0_213 = arith.constant 0 : index
    %c0_214 = arith.constant 0 : index
    %168 = vector.load %arg7[%c0_213, %c0_214] : memref<20x128xf32, #tpu.memory_space<vmem>>, vector<20x128xf32>
    %c0_215 = arith.constant 0 : index
    %c0_216 = arith.constant 0 : index
    %c0_217 = arith.constant 0 : index
    %169 = vector.load %arg2[%c0_215, %c0_216, %c0_217] : memref<5x4x20xf32, #tpu.memory_space<vmem>>, vector<1x4x20xf32>
    %170 = vector.shape_cast %169 : vector<1x4x20xf32> to vector<4x20xf32>
    %cst_218 = arith.constant dense<0.000000e+00> : vector<4x128xf32>
    %171 = tpu.matmul %170, %168, %cst_218 {dimension_numbers = #tpu.dot_dimension_numbers<[1], [0], [0], [1], [0, 0, 1, 1], [], []>} : vector<4x20xf32>, vector<20x128xf32>, vector<4x128xf32> -> vector<4x128xf32>
    %c0_219 = arith.constant 0 : index
    %c0_220 = arith.constant 0 : index
    %172 = vector.load %arg8[%c0_219, %c0_220] : memref<4x128xf32, #tpu.memory_space<vmem>>, vector<4x128xf32>
    tpu.vector_store %arg8[%c0_219, %c0_220], %171 {strides = array<i32>} : memref<4x128xf32, #tpu.memory_space<vmem>>, vector<4x128xf32>,
    %c0_221 = arith.constant 0 : index
    %c0_222 = arith.constant 0 : index
    %c0_223 = arith.constant 0 : index
    %173 = vector.load %arg3[%c0_221, %c0_222, %c0_223] : memref<5x4x20xf32, #tpu.memory_space<vmem>>, vector<1x4x20xf32>
    %174 = vector.shape_cast %173 : vector<1x4x20xf32> to vector<4x20xf32>
    %cst_224 = arith.constant dense<0.000000e+00> : vector<4x128xf32>
    %175 = tpu.matmul %174, %168, %cst_224 {dimension_numbers = #tpu.dot_dimension_numbers<[1], [0], [0], [1], [0, 0, 1, 1], [], []>} : vector<4x20xf32>, vector<20x128xf32>, vector<4x128xf32> -> vector<4x128xf32>
    %c0_225 = arith.constant 0 : index
    %c0_226 = arith.constant 0 : index
    %176 = vector.load %arg9[%c0_225, %c0_226] : memref<4x128xf32, #tpu.memory_space<vmem>>, vector<4x128xf32>
    tpu.vector_store %arg9[%c0_225, %c0_226], %175 {strides = array<i32>} : memref<4x128xf32, #tpu.memory_space<vmem>>, vector<4x128xf32>,
    %c0_227 = arith.constant 0 : index
    %c0_228 = arith.constant 0 : index
    %c176 = arith.constant 176 : index
    %177 = vector.load %arg1[%c0_227, %c0_228, %c176] : memref<1x4x600xf32, #tpu.memory_space<vmem>>, vector<1x4x128xf32>
    %178 = vector.shape_cast %177 : vector<1x4x128xf32> to vector<4x128xf32>
    %c0_229 = arith.constant 0 : index
    %c0_230 = arith.constant 0 : index
    %179 = vector.load %arg7[%c0_229, %c0_230] : memref<20x128xf32, #tpu.memory_space<vmem>>, vector<4x128xf32>
    tpu.vector_store %arg7[%c0_229, %c0_230], %178 {strides = array<i32>} : memref<20x128xf32, #tpu.memory_space<vmem>>, vector<4x128xf32>,
    %c0_231 = arith.constant 0 : index
    %c0_232 = arith.constant 0 : index
    %c178 = arith.constant 178 : index
    %180 = vector.load %arg1[%c0_231, %c0_232, %c178] : memref<1x4x600xf32, #tpu.memory_space<vmem>>, vector<1x4x128xf32>
    %181 = vector.shape_cast %180 : vector<1x4x128xf32> to vector<4x128xf32>
    %c4_233 = arith.constant 4 : index
    %c0_234 = arith.constant 0 : index
    %182 = vector.load %arg7[%c4_233, %c0_234] : memref<20x128xf32, #tpu.memory_space<vmem>>, vector<4x128xf32>
    tpu.vector_store %arg7[%c4_233, %c0_234], %181 {strides = array<i32>} : memref<20x128xf32, #tpu.memory_space<vmem>>, vector<4x128xf32>,
    %c0_235 = arith.constant 0 : index
    %c0_236 = arith.constant 0 : index
    %c180 = arith.constant 180 : index
    %183 = vector.load %arg1[%c0_235, %c0_236, %c180] : memref<1x4x600xf32, #tpu.memory_space<vmem>>, vector<1x4x128xf32>
    %184 = vector.shape_cast %183 : vector<1x4x128xf32> to vector<4x128xf32>
    %c8_237 = arith.constant 8 : index
    %c0_238 = arith.constant 0 : index
    %185 = vector.load %arg7[%c8_237, %c0_238] : memref<20x128xf32, #tpu.memory_space<vmem>>, vector<4x128xf32>
    tpu.vector_store %arg7[%c8_237, %c0_238], %184 {strides = array<i32>} : memref<20x128xf32, #tpu.memory_space<vmem>>, vector<4x128xf32>,
    %c0_239 = arith.constant 0 : index
    %c0_240 = arith.constant 0 : index
    %c182 = arith.constant 182 : index
    %186 = vector.load %arg1[%c0_239, %c0_240, %c182] : memref<1x4x600xf32, #tpu.memory_space<vmem>>, vector<1x4x128xf32>
    %187 = vector.shape_cast %186 : vector<1x4x128xf32> to vector<4x128xf32>
    %c12_241 = arith.constant 12 : index
    %c0_242 = arith.constant 0 : index
    %188 = vector.load %arg7[%c12_241, %c0_242] : memref<20x128xf32, #tpu.memory_space<vmem>>, vector<4x128xf32>
    tpu.vector_store %arg7[%c12_241, %c0_242], %187 {strides = array<i32>} : memref<20x128xf32, #tpu.memory_space<vmem>>, vector<4x128xf32>,
    %c0_243 = arith.constant 0 : index
    %c0_244 = arith.constant 0 : index
    %c184 = arith.constant 184 : index
    %189 = vector.load %arg1[%c0_243, %c0_244, %c184] : memref<1x4x600xf32, #tpu.memory_space<vmem>>, vector<1x4x128xf32>
    %190 = vector.shape_cast %189 : vector<1x4x128xf32> to vector<4x128xf32>
    %c16_245 = arith.constant 16 : index
    %c0_246 = arith.constant 0 : index
    %191 = vector.load %arg7[%c16_245, %c0_246] : memref<20x128xf32, #tpu.memory_space<vmem>>, vector<4x128xf32>
    tpu.vector_store %arg7[%c16_245, %c0_246], %190 {strides = array<i32>} : memref<20x128xf32, #tpu.memory_space<vmem>>, vector<4x128xf32>,
    %c0_247 = arith.constant 0 : index
    %c0_248 = arith.constant 0 : index
    %192 = vector.load %arg7[%c0_247, %c0_248] : memref<20x128xf32, #tpu.memory_space<vmem>>, vector<20x128xf32>
    %c1_249 = arith.constant 1 : index
    %c0_250 = arith.constant 0 : index
    %c0_251 = arith.constant 0 : index
    %193 = vector.load %arg2[%c1_249, %c0_250, %c0_251] : memref<5x4x20xf32, #tpu.memory_space<vmem>>, vector<1x4x20xf32>
    %194 = vector.shape_cast %193 : vector<1x4x20xf32> to vector<4x20xf32>
    %cst_252 = arith.constant dense<0.000000e+00> : vector<4x128xf32>
    %195 = tpu.matmul %194, %192, %cst_252 {dimension_numbers = #tpu.dot_dimension_numbers<[1], [0], [0], [1], [0, 0, 1, 1], [], []>} : vector<4x20xf32>, vector<20x128xf32>, vector<4x128xf32> -> vector<4x128xf32>
    %c0_253 = arith.constant 0 : index
    %c0_254 = arith.constant 0 : index
    %196 = vector.load %arg8[%c0_253, %c0_254] : memref<4x128xf32, #tpu.memory_space<vmem>>, vector<4x128xf32>
    %197 = arith.addf %196, %195 : vector<4x128xf32>
    %c0_255 = arith.constant 0 : index
    %c0_256 = arith.constant 0 : index
    %198 = vector.load %arg8[%c0_255, %c0_256] : memref<4x128xf32, #tpu.memory_space<vmem>>, vector<4x128xf32>
    tpu.vector_store %arg8[%c0_255, %c0_256], %197 {strides = array<i32>} : memref<4x128xf32, #tpu.memory_space<vmem>>, vector<4x128xf32>,
    %c1_257 = arith.constant 1 : index
    %c0_258 = arith.constant 0 : index
    %c0_259 = arith.constant 0 : index
    %199 = vector.load %arg3[%c1_257, %c0_258, %c0_259] : memref<5x4x20xf32, #tpu.memory_space<vmem>>, vector<1x4x20xf32>
    %200 = vector.shape_cast %199 : vector<1x4x20xf32> to vector<4x20xf32>
    %cst_260 = arith.constant dense<0.000000e+00> : vector<4x128xf32>
    %201 = tpu.matmul %200, %192, %cst_260 {dimension_numbers = #tpu.dot_dimension_numbers<[1], [0], [0], [1], [0, 0, 1, 1], [], []>} : vector<4x20xf32>, vector<20x128xf32>, vector<4x128xf32> -> vector<4x128xf32>
    %c0_261 = arith.constant 0 : index
    %c0_262 = arith.constant 0 : index
    %202 = vector.load %arg9[%c0_261, %c0_262] : memref<4x128xf32, #tpu.memory_space<vmem>>, vector<4x128xf32>
    %203 = arith.addf %202, %201 : vector<4x128xf32>
    %c0_263 = arith.constant 0 : index
    %c0_264 = arith.constant 0 : index
    %204 = vector.load %arg9[%c0_263, %c0_264] : memref<4x128xf32, #tpu.memory_space<vmem>>, vector<4x128xf32>
    tpu.vector_store %arg9[%c0_263, %c0_264], %203 {strides = array<i32>} : memref<4x128xf32, #tpu.memory_space<vmem>>, vector<4x128xf32>,
    %c0_265 = arith.constant 0 : index
    %c0_266 = arith.constant 0 : index
    %c224 = arith.constant 224 : index
    %205 = vector.load %arg1[%c0_265, %c0_266, %c224] : memref<1x4x600xf32, #tpu.memory_space<vmem>>, vector<1x4x128xf32>
    %206 = vector.shape_cast %205 : vector<1x4x128xf32> to vector<4x128xf32>
    %c0_267 = arith.constant 0 : index
    %c0_268 = arith.constant 0 : index
    %207 = vector.load %arg7[%c0_267, %c0_268] : memref<20x128xf32, #tpu.memory_space<vmem>>, vector<4x128xf32>
    tpu.vector_store %arg7[%c0_267, %c0_268], %206 {strides = array<i32>} : memref<20x128xf32, #tpu.memory_space<vmem>>, vector<4x128xf32>,
    %c0_269 = arith.constant 0 : index
    %c0_270 = arith.constant 0 : index
    %c226 = arith.constant 226 : index
    %208 = vector.load %arg1[%c0_269, %c0_270, %c226] : memref<1x4x600xf32, #tpu.memory_space<vmem>>, vector<1x4x128xf32>
    %209 = vector.shape_cast %208 : vector<1x4x128xf32> to vector<4x128xf32>
    %c4_271 = arith.constant 4 : index
    %c0_272 = arith.constant 0 : index
    %210 = vector.load %arg7[%c4_271, %c0_272] : memref<20x128xf32, #tpu.memory_space<vmem>>, vector<4x128xf32>
    tpu.vector_store %arg7[%c4_271, %c0_272], %209 {strides = array<i32>} : memref<20x128xf32, #tpu.memory_space<vmem>>, vector<4x128xf32>,
    %c0_273 = arith.constant 0 : index
    %c0_274 = arith.constant 0 : index
    %c228 = arith.constant 228 : index
    %211 = vector.load %arg1[%c0_273, %c0_274, %c228] : memref<1x4x600xf32, #tpu.memory_space<vmem>>, vector<1x4x128xf32>
    %212 = vector.shape_cast %211 : vector<1x4x128xf32> to vector<4x128xf32>
    %c8_275 = arith.constant 8 : index
    %c0_276 = arith.constant 0 : index
    %213 = vector.load %arg7[%c8_275, %c0_276] : memref<20x128xf32, #tpu.memory_space<vmem>>, vector<4x128xf32>
    tpu.vector_store %arg7[%c8_275, %c0_276], %212 {strides = array<i32>} : memref<20x128xf32, #tpu.memory_space<vmem>>, vector<4x128xf32>,
    %c0_277 = arith.constant 0 : index
    %c0_278 = arith.constant 0 : index
    %c230 = arith.constant 230 : index
    %214 = vector.load %arg1[%c0_277, %c0_278, %c230] : memref<1x4x600xf32, #tpu.memory_space<vmem>>, vector<1x4x128xf32>
    %215 = vector.shape_cast %214 : vector<1x4x128xf32> to vector<4x128xf32>
    %c12_279 = arith.constant 12 : index
    %c0_280 = arith.constant 0 : index
    %216 = vector.load %arg7[%c12_279, %c0_280] : memref<20x128xf32, #tpu.memory_space<vmem>>, vector<4x128xf32>
    tpu.vector_store %arg7[%c12_279, %c0_280], %215 {strides = array<i32>} : memref<20x128xf32, #tpu.memory_space<vmem>>, vector<4x128xf32>,
    %c0_281 = arith.constant 0 : index
    %c0_282 = arith.constant 0 : index
    %c232 = arith.constant 232 : index
    %217 = vector.load %arg1[%c0_281, %c0_282, %c232] : memref<1x4x600xf32, #tpu.memory_space<vmem>>, vector<1x4x128xf32>
    %218 = vector.shape_cast %217 : vector<1x4x128xf32> to vector<4x128xf32>
    %c16_283 = arith.constant 16 : index
    %c0_284 = arith.constant 0 : index
    %219 = vector.load %arg7[%c16_283, %c0_284] : memref<20x128xf32, #tpu.memory_space<vmem>>, vector<4x128xf32>
    tpu.vector_store %arg7[%c16_283, %c0_284], %218 {strides = array<i32>} : memref<20x128xf32, #tpu.memory_space<vmem>>, vector<4x128xf32>,
    %c0_285 = arith.constant 0 : index
    %c0_286 = arith.constant 0 : index
    %220 = vector.load %arg7[%c0_285, %c0_286] : memref<20x128xf32, #tpu.memory_space<vmem>>, vector<20x128xf32>
    %c2_287 = arith.constant 2 : index
    %c0_288 = arith.constant 0 : index
    %c0_289 = arith.constant 0 : index
    %221 = vector.load %arg2[%c2_287, %c0_288, %c0_289] : memref<5x4x20xf32, #tpu.memory_space<vmem>>, vector<1x4x20xf32>
    %222 = vector.shape_cast %221 : vector<1x4x20xf32> to vector<4x20xf32>
    %cst_290 = arith.constant dense<0.000000e+00> : vector<4x128xf32>
    %223 = tpu.matmul %222, %220, %cst_290 {dimension_numbers = #tpu.dot_dimension_numbers<[1], [0], [0], [1], [0, 0, 1, 1], [], []>} : vector<4x20xf32>, vector<20x128xf32>, vector<4x128xf32> -> vector<4x128xf32>
    %c0_291 = arith.constant 0 : index
    %c0_292 = arith.constant 0 : index
    %224 = vector.load %arg8[%c0_291, %c0_292] : memref<4x128xf32, #tpu.memory_space<vmem>>, vector<4x128xf32>
    %225 = arith.addf %224, %223 : vector<4x128xf32>
    %c0_293 = arith.constant 0 : index
    %c0_294 = arith.constant 0 : index
    %226 = vector.load %arg8[%c0_293, %c0_294] : memref<4x128xf32, #tpu.memory_space<vmem>>, vector<4x128xf32>
    tpu.vector_store %arg8[%c0_293, %c0_294], %225 {strides = array<i32>} : memref<4x128xf32, #tpu.memory_space<vmem>>, vector<4x128xf32>,
    %c2_295 = arith.constant 2 : index
    %c0_296 = arith.constant 0 : index
    %c0_297 = arith.constant 0 : index
    %227 = vector.load %arg3[%c2_295, %c0_296, %c0_297] : memref<5x4x20xf32, #tpu.memory_space<vmem>>, vector<1x4x20xf32>
    %228 = vector.shape_cast %227 : vector<1x4x20xf32> to vector<4x20xf32>
    %cst_298 = arith.constant dense<0.000000e+00> : vector<4x128xf32>
    %229 = tpu.matmul %228, %220, %cst_298 {dimension_numbers = #tpu.dot_dimension_numbers<[1], [0], [0], [1], [0, 0, 1, 1], [], []>} : vector<4x20xf32>, vector<20x128xf32>, vector<4x128xf32> -> vector<4x128xf32>
    %c0_299 = arith.constant 0 : index
    %c0_300 = arith.constant 0 : index
    %230 = vector.load %arg9[%c0_299, %c0_300] : memref<4x128xf32, #tpu.memory_space<vmem>>, vector<4x128xf32>
    %231 = arith.addf %230, %229 : vector<4x128xf32>
    %c0_301 = arith.constant 0 : index
    %c0_302 = arith.constant 0 : index
    %232 = vector.load %arg9[%c0_301, %c0_302] : memref<4x128xf32, #tpu.memory_space<vmem>>, vector<4x128xf32>
    tpu.vector_store %arg9[%c0_301, %c0_302], %231 {strides = array<i32>} : memref<4x128xf32, #tpu.memory_space<vmem>>, vector<4x128xf32>,
    %c0_303 = arith.constant 0 : index
    %c0_304 = arith.constant 0 : index
    %c272 = arith.constant 272 : index
    %233 = vector.load %arg1[%c0_303, %c0_304, %c272] : memref<1x4x600xf32, #tpu.memory_space<vmem>>, vector<1x4x128xf32>
    %234 = vector.shape_cast %233 : vector<1x4x128xf32> to vector<4x128xf32>
    %c0_305 = arith.constant 0 : index
    %c0_306 = arith.constant 0 : index
    %235 = vector.load %arg7[%c0_305, %c0_306] : memref<20x128xf32, #tpu.memory_space<vmem>>, vector<4x128xf32>
    tpu.vector_store %arg7[%c0_305, %c0_306], %234 {strides = array<i32>} : memref<20x128xf32, #tpu.memory_space<vmem>>, vector<4x128xf32>,
    %c0_307 = arith.constant 0 : index
    %c0_308 = arith.constant 0 : index
    %c274 = arith.constant 274 : index
    %236 = vector.load %arg1[%c0_307, %c0_308, %c274] : memref<1x4x600xf32, #tpu.memory_space<vmem>>, vector<1x4x128xf32>
    %237 = vector.shape_cast %236 : vector<1x4x128xf32> to vector<4x128xf32>
    %c4_309 = arith.constant 4 : index
    %c0_310 = arith.constant 0 : index
    %238 = vector.load %arg7[%c4_309, %c0_310] : memref<20x128xf32, #tpu.memory_space<vmem>>, vector<4x128xf32>
    tpu.vector_store %arg7[%c4_309, %c0_310], %237 {strides = array<i32>} : memref<20x128xf32, #tpu.memory_space<vmem>>, vector<4x128xf32>,
    %c0_311 = arith.constant 0 : index
    %c0_312 = arith.constant 0 : index
    %c276 = arith.constant 276 : index
    %239 = vector.load %arg1[%c0_311, %c0_312, %c276] : memref<1x4x600xf32, #tpu.memory_space<vmem>>, vector<1x4x128xf32>
    %240 = vector.shape_cast %239 : vector<1x4x128xf32> to vector<4x128xf32>
    %c8_313 = arith.constant 8 : index
    %c0_314 = arith.constant 0 : index
    %241 = vector.load %arg7[%c8_313, %c0_314] : memref<20x128xf32, #tpu.memory_space<vmem>>, vector<4x128xf32>
    tpu.vector_store %arg7[%c8_313, %c0_314], %240 {strides = array<i32>} : memref<20x128xf32, #tpu.memory_space<vmem>>, vector<4x128xf32>,
    %c0_315 = arith.constant 0 : index
    %c0_316 = arith.constant 0 : index
    %c278 = arith.constant 278 : index
    %242 = vector.load %arg1[%c0_315, %c0_316, %c278] : memref<1x4x600xf32, #tpu.memory_space<vmem>>, vector<1x4x128xf32>
    %243 = vector.shape_cast %242 : vector<1x4x128xf32> to vector<4x128xf32>
    %c12_317 = arith.constant 12 : index
    %c0_318 = arith.constant 0 : index
    %244 = vector.load %arg7[%c12_317, %c0_318] : memref<20x128xf32, #tpu.memory_space<vmem>>, vector<4x128xf32>
    tpu.vector_store %arg7[%c12_317, %c0_318], %243 {strides = array<i32>} : memref<20x128xf32, #tpu.memory_space<vmem>>, vector<4x128xf32>,
    %c0_319 = arith.constant 0 : index
    %c0_320 = arith.constant 0 : index
    %c280 = arith.constant 280 : index
    %245 = vector.load %arg1[%c0_319, %c0_320, %c280] : memref<1x4x600xf32, #tpu.memory_space<vmem>>, vector<1x4x128xf32>
    %246 = vector.shape_cast %245 : vector<1x4x128xf32> to vector<4x128xf32>
    %c16_321 = arith.constant 16 : index
    %c0_322 = arith.constant 0 : index
    %247 = vector.load %arg7[%c16_321, %c0_322] : memref<20x128xf32, #tpu.memory_space<vmem>>, vector<4x128xf32>
    tpu.vector_store %arg7[%c16_321, %c0_322], %246 {strides = array<i32>} : memref<20x128xf32, #tpu.memory_space<vmem>>, vector<4x128xf32>,
    %c0_323 = arith.constant 0 : index
    %c0_324 = arith.constant 0 : index
    %248 = vector.load %arg7[%c0_323, %c0_324] : memref<20x128xf32, #tpu.memory_space<vmem>>, vector<20x128xf32>
    %c3_325 = arith.constant 3 : index
    %c0_326 = arith.constant 0 : index
    %c0_327 = arith.constant 0 : index
    %249 = vector.load %arg2[%c3_325, %c0_326, %c0_327] : memref<5x4x20xf32, #tpu.memory_space<vmem>>, vector<1x4x20xf32>
    %250 = vector.shape_cast %249 : vector<1x4x20xf32> to vector<4x20xf32>
    %cst_328 = arith.constant dense<0.000000e+00> : vector<4x128xf32>
    %251 = tpu.matmul %250, %248, %cst_328 {dimension_numbers = #tpu.dot_dimension_numbers<[1], [0], [0], [1], [0, 0, 1, 1], [], []>} : vector<4x20xf32>, vector<20x128xf32>, vector<4x128xf32> -> vector<4x128xf32>
    %c0_329 = arith.constant 0 : index
    %c0_330 = arith.constant 0 : index
    %252 = vector.load %arg8[%c0_329, %c0_330] : memref<4x128xf32, #tpu.memory_space<vmem>>, vector<4x128xf32>
    %253 = arith.addf %252, %251 : vector<4x128xf32>
    %c0_331 = arith.constant 0 : index
    %c0_332 = arith.constant 0 : index
    %254 = vector.load %arg8[%c0_331, %c0_332] : memref<4x128xf32, #tpu.memory_space<vmem>>, vector<4x128xf32>
    tpu.vector_store %arg8[%c0_331, %c0_332], %253 {strides = array<i32>} : memref<4x128xf32, #tpu.memory_space<vmem>>, vector<4x128xf32>,
    %c3_333 = arith.constant 3 : index
    %c0_334 = arith.constant 0 : index
    %c0_335 = arith.constant 0 : index
    %255 = vector.load %arg3[%c3_333, %c0_334, %c0_335] : memref<5x4x20xf32, #tpu.memory_space<vmem>>, vector<1x4x20xf32>
    %256 = vector.shape_cast %255 : vector<1x4x20xf32> to vector<4x20xf32>
    %cst_336 = arith.constant dense<0.000000e+00> : vector<4x128xf32>
    %257 = tpu.matmul %256, %248, %cst_336 {dimension_numbers = #tpu.dot_dimension_numbers<[1], [0], [0], [1], [0, 0, 1, 1], [], []>} : vector<4x20xf32>, vector<20x128xf32>, vector<4x128xf32> -> vector<4x128xf32>
    %c0_337 = arith.constant 0 : index
    %c0_338 = arith.constant 0 : index
    %258 = vector.load %arg9[%c0_337, %c0_338] : memref<4x128xf32, #tpu.memory_space<vmem>>, vector<4x128xf32>
    %259 = arith.addf %258, %257 : vector<4x128xf32>
    %c0_339 = arith.constant 0 : index
    %c0_340 = arith.constant 0 : index
    %260 = vector.load %arg9[%c0_339, %c0_340] : memref<4x128xf32, #tpu.memory_space<vmem>>, vector<4x128xf32>
    tpu.vector_store %arg9[%c0_339, %c0_340], %259 {strides = array<i32>} : memref<4x128xf32, #tpu.memory_space<vmem>>, vector<4x128xf32>,
    %c0_341 = arith.constant 0 : index
    %c0_342 = arith.constant 0 : index
    %c320 = arith.constant 320 : index
    %261 = vector.load %arg1[%c0_341, %c0_342, %c320] : memref<1x4x600xf32, #tpu.memory_space<vmem>>, vector<1x4x128xf32>
    %262 = vector.shape_cast %261 : vector<1x4x128xf32> to vector<4x128xf32>
    %c0_343 = arith.constant 0 : index
    %c0_344 = arith.constant 0 : index
    %263 = vector.load %arg7[%c0_343, %c0_344] : memref<20x128xf32, #tpu.memory_space<vmem>>, vector<4x128xf32>
    tpu.vector_store %arg7[%c0_343, %c0_344], %262 {strides = array<i32>} : memref<20x128xf32, #tpu.memory_space<vmem>>, vector<4x128xf32>,
    %c0_345 = arith.constant 0 : index
    %c0_346 = arith.constant 0 : index
    %c322 = arith.constant 322 : index
    %264 = vector.load %arg1[%c0_345, %c0_346, %c322] : memref<1x4x600xf32, #tpu.memory_space<vmem>>, vector<1x4x128xf32>
    %265 = vector.shape_cast %264 : vector<1x4x128xf32> to vector<4x128xf32>
    %c4_347 = arith.constant 4 : index
    %c0_348 = arith.constant 0 : index
    %266 = vector.load %arg7[%c4_347, %c0_348] : memref<20x128xf32, #tpu.memory_space<vmem>>, vector<4x128xf32>
    tpu.vector_store %arg7[%c4_347, %c0_348], %265 {strides = array<i32>} : memref<20x128xf32, #tpu.memory_space<vmem>>, vector<4x128xf32>,
    %c0_349 = arith.constant 0 : index
    %c0_350 = arith.constant 0 : index
    %c324 = arith.constant 324 : index
    %267 = vector.load %arg1[%c0_349, %c0_350, %c324] : memref<1x4x600xf32, #tpu.memory_space<vmem>>, vector<1x4x128xf32>
    %268 = vector.shape_cast %267 : vector<1x4x128xf32> to vector<4x128xf32>
    %c8_351 = arith.constant 8 : index
    %c0_352 = arith.constant 0 : index
    %269 = vector.load %arg7[%c8_351, %c0_352] : memref<20x128xf32, #tpu.memory_space<vmem>>, vector<4x128xf32>
    tpu.vector_store %arg7[%c8_351, %c0_352], %268 {strides = array<i32>} : memref<20x128xf32, #tpu.memory_space<vmem>>, vector<4x128xf32>,
    %c0_353 = arith.constant 0 : index
    %c0_354 = arith.constant 0 : index
    %c326 = arith.constant 326 : index
    %270 = vector.load %arg1[%c0_353, %c0_354, %c326] : memref<1x4x600xf32, #tpu.memory_space<vmem>>, vector<1x4x128xf32>
    %271 = vector.shape_cast %270 : vector<1x4x128xf32> to vector<4x128xf32>
    %c12_355 = arith.constant 12 : index
    %c0_356 = arith.constant 0 : index
    %272 = vector.load %arg7[%c12_355, %c0_356] : memref<20x128xf32, #tpu.memory_space<vmem>>, vector<4x128xf32>
    tpu.vector_store %arg7[%c12_355, %c0_356], %271 {strides = array<i32>} : memref<20x128xf32, #tpu.memory_space<vmem>>, vector<4x128xf32>,
    %c0_357 = arith.constant 0 : index
    %c0_358 = arith.constant 0 : index
    %c328 = arith.constant 328 : index
    %273 = vector.load %arg1[%c0_357, %c0_358, %c328] : memref<1x4x600xf32, #tpu.memory_space<vmem>>, vector<1x4x128xf32>
    %274 = vector.shape_cast %273 : vector<1x4x128xf32> to vector<4x128xf32>
    %c16_359 = arith.constant 16 : index
    %c0_360 = arith.constant 0 : index
    %275 = vector.load %arg7[%c16_359, %c0_360] : memref<20x128xf32, #tpu.memory_space<vmem>>, vector<4x128xf32>
    tpu.vector_store %arg7[%c16_359, %c0_360], %274 {strides = array<i32>} : memref<20x128xf32, #tpu.memory_space<vmem>>, vector<4x128xf32>,
    %c0_361 = arith.constant 0 : index
    %c0_362 = arith.constant 0 : index
    %276 = vector.load %arg7[%c0_361, %c0_362] : memref<20x128xf32, #tpu.memory_space<vmem>>, vector<20x128xf32>
    %c4_363 = arith.constant 4 : index
    %c0_364 = arith.constant 0 : index
    %c0_365 = arith.constant 0 : index
    %277 = vector.load %arg2[%c4_363, %c0_364, %c0_365] : memref<5x4x20xf32, #tpu.memory_space<vmem>>, vector<1x4x20xf32>
    %278 = vector.shape_cast %277 : vector<1x4x20xf32> to vector<4x20xf32>
    %cst_366 = arith.constant dense<0.000000e+00> : vector<4x128xf32>
    %279 = tpu.matmul %278, %276, %cst_366 {dimension_numbers = #tpu.dot_dimension_numbers<[1], [0], [0], [1], [0, 0, 1, 1], [], []>} : vector<4x20xf32>, vector<20x128xf32>, vector<4x128xf32> -> vector<4x128xf32>
    %c0_367 = arith.constant 0 : index
    %c0_368 = arith.constant 0 : index
    %280 = vector.load %arg8[%c0_367, %c0_368] : memref<4x128xf32, #tpu.memory_space<vmem>>, vector<4x128xf32>
    %281 = arith.addf %280, %279 : vector<4x128xf32>
    %c0_369 = arith.constant 0 : index
    %c0_370 = arith.constant 0 : index
    %282 = vector.load %arg8[%c0_369, %c0_370] : memref<4x128xf32, #tpu.memory_space<vmem>>, vector<4x128xf32>
    tpu.vector_store %arg8[%c0_369, %c0_370], %281 {strides = array<i32>} : memref<4x128xf32, #tpu.memory_space<vmem>>, vector<4x128xf32>,
    %c4_371 = arith.constant 4 : index
    %c0_372 = arith.constant 0 : index
    %c0_373 = arith.constant 0 : index
    %283 = vector.load %arg3[%c4_371, %c0_372, %c0_373] : memref<5x4x20xf32, #tpu.memory_space<vmem>>, vector<1x4x20xf32>
    %284 = vector.shape_cast %283 : vector<1x4x20xf32> to vector<4x20xf32>
    %cst_374 = arith.constant dense<0.000000e+00> : vector<4x128xf32>
    %285 = tpu.matmul %284, %276, %cst_374 {dimension_numbers = #tpu.dot_dimension_numbers<[1], [0], [0], [1], [0, 0, 1, 1], [], []>} : vector<4x20xf32>, vector<20x128xf32>, vector<4x128xf32> -> vector<4x128xf32>
    %c0_375 = arith.constant 0 : index
    %c0_376 = arith.constant 0 : index
    %286 = vector.load %arg9[%c0_375, %c0_376] : memref<4x128xf32, #tpu.memory_space<vmem>>, vector<4x128xf32>
    %287 = arith.addf %286, %285 : vector<4x128xf32>
    %c0_377 = arith.constant 0 : index
    %c0_378 = arith.constant 0 : index
    %288 = vector.load %arg9[%c0_377, %c0_378] : memref<4x128xf32, #tpu.memory_space<vmem>>, vector<4x128xf32>
    tpu.vector_store %arg9[%c0_377, %c0_378], %287 {strides = array<i32>} : memref<4x128xf32, #tpu.memory_space<vmem>>, vector<4x128xf32>,
    %c0_379 = arith.constant 0 : index
    %c0_380 = arith.constant 0 : index
    %289 = vector.load %arg8[%c0_379, %c0_380] : memref<4x128xf32, #tpu.memory_space<vmem>>, vector<4x128xf32>
    %c0_381 = arith.constant 0 : index
    %c0_382 = arith.constant 0 : index
    %290 = vector.load %arg4[%c0_381, %c0_382] : memref<4x1xf32, #tpu.memory_space<vmem>>, vector<4x1xf32>
    %291 = vector.broadcast %290 : vector<4x1xf32> to vector<4x128xf32>
    %292 = arith.addf %289, %291 : vector<4x128xf32>
    %c0_383 = arith.constant 0 : index
    %c0_384 = arith.constant 0 : index
    %293 = vector.load %arg9[%c0_383, %c0_384] : memref<4x128xf32, #tpu.memory_space<vmem>>, vector<4x128xf32>
    %c0_385 = arith.constant 0 : index
    %c0_386 = arith.constant 0 : index
    %294 = vector.load %arg5[%c0_385, %c0_386] : memref<4x1xf32, #tpu.memory_space<vmem>>, vector<4x1xf32>
    %295 = vector.broadcast %294 : vector<4x1xf32> to vector<4x128xf32>
    %296 = arith.addf %293, %295 : vector<4x128xf32>
    %297 = arith.negf %296 : vector<4x128xf32>
    %298 = math.exp %297 : vector<4x128xf32>
    %cst_387 = arith.constant 1.000000e+00 : f32
    %299 = vector.broadcast %cst_387 : f32 to vector<4x128xf32>
    %300 = arith.addf %299, %298 : vector<4x128xf32>
    %301 = arith.divf %299, %300 : vector<4x128xf32>
    %302 = arith.mulf %292, %301 : vector<4x128xf32>
    %c0_388 = arith.constant 0 : index
    %c0_389 = arith.constant 0 : index
    %c128_390 = arith.constant 128 : index
    %303 = vector.load %arg6[%c0_388, %c0_389, %c128_390] : memref<1x4x384xf32, #tpu.memory_space<vmem>>, vector<1x4x128xf32>
    %304 = vector.shape_cast %303 : vector<1x4x128xf32> to vector<4x128xf32>
    %305 = vector.shape_cast %302 : vector<4x128xf32> to vector<1x4x128xf32>
    tpu.vector_store %arg6[%c0_388, %c0_389, %c128_390], %305 {strides = array<i32>} : memref<1x4x384xf32, #tpu.memory_space<vmem>>, vector<1x4x128xf32>,
    %c0_391 = arith.constant 0 : index
    %c0_392 = arith.constant 0 : index
    %c256 = arith.constant 256 : index
    %306 = vector.load %arg1[%c0_391, %c0_392, %c256] : memref<1x4x600xf32, #tpu.memory_space<vmem>>, vector<1x4x128xf32>
    %307 = vector.shape_cast %306 : vector<1x4x128xf32> to vector<4x128xf32>
    %c0_393 = arith.constant 0 : index
    %c0_394 = arith.constant 0 : index
    %308 = vector.load %arg7[%c0_393, %c0_394] : memref<20x128xf32, #tpu.memory_space<vmem>>, vector<4x128xf32>
    tpu.vector_store %arg7[%c0_393, %c0_394], %307 {strides = array<i32>} : memref<20x128xf32, #tpu.memory_space<vmem>>, vector<4x128xf32>,
    %c0_395 = arith.constant 0 : index
    %c0_396 = arith.constant 0 : index
    %c258 = arith.constant 258 : index
    %309 = vector.load %arg1[%c0_395, %c0_396, %c258] : memref<1x4x600xf32, #tpu.memory_space<vmem>>, vector<1x4x128xf32>
    %310 = vector.shape_cast %309 : vector<1x4x128xf32> to vector<4x128xf32>
    %c4_397 = arith.constant 4 : index
    %c0_398 = arith.constant 0 : index
    %311 = vector.load %arg7[%c4_397, %c0_398] : memref<20x128xf32, #tpu.memory_space<vmem>>, vector<4x128xf32>
    tpu.vector_store %arg7[%c4_397, %c0_398], %310 {strides = array<i32>} : memref<20x128xf32, #tpu.memory_space<vmem>>, vector<4x128xf32>,
    %c0_399 = arith.constant 0 : index
    %c0_400 = arith.constant 0 : index
    %c260 = arith.constant 260 : index
    %312 = vector.load %arg1[%c0_399, %c0_400, %c260] : memref<1x4x600xf32, #tpu.memory_space<vmem>>, vector<1x4x128xf32>
    %313 = vector.shape_cast %312 : vector<1x4x128xf32> to vector<4x128xf32>
    %c8_401 = arith.constant 8 : index
    %c0_402 = arith.constant 0 : index
    %314 = vector.load %arg7[%c8_401, %c0_402] : memref<20x128xf32, #tpu.memory_space<vmem>>, vector<4x128xf32>
    tpu.vector_store %arg7[%c8_401, %c0_402], %313 {strides = array<i32>} : memref<20x128xf32, #tpu.memory_space<vmem>>, vector<4x128xf32>,
    %c0_403 = arith.constant 0 : index
    %c0_404 = arith.constant 0 : index
    %c262 = arith.constant 262 : index
    %315 = vector.load %arg1[%c0_403, %c0_404, %c262] : memref<1x4x600xf32, #tpu.memory_space<vmem>>, vector<1x4x128xf32>
    %316 = vector.shape_cast %315 : vector<1x4x128xf32> to vector<4x128xf32>
    %c12_405 = arith.constant 12 : index
    %c0_406 = arith.constant 0 : index
    %317 = vector.load %arg7[%c12_405, %c0_406] : memref<20x128xf32, #tpu.memory_space<vmem>>, vector<4x128xf32>
    tpu.vector_store %arg7[%c12_405, %c0_406], %316 {strides = array<i32>} : memref<20x128xf32, #tpu.memory_space<vmem>>, vector<4x128xf32>,
    %c0_407 = arith.constant 0 : index
    %c0_408 = arith.constant 0 : index
    %c264 = arith.constant 264 : index
    %318 = vector.load %arg1[%c0_407, %c0_408, %c264] : memref<1x4x600xf32, #tpu.memory_space<vmem>>, vector<1x4x128xf32>
    %319 = vector.shape_cast %318 : vector<1x4x128xf32> to vector<4x128xf32>
    %c16_409 = arith.constant 16 : index
    %c0_410 = arith.constant 0 : index
    %320 = vector.load %arg7[%c16_409, %c0_410] : memref<20x128xf32, #tpu.memory_space<vmem>>, vector<4x128xf32>
    tpu.vector_store %arg7[%c16_409, %c0_410], %319 {strides = array<i32>} : memref<20x128xf32, #tpu.memory_space<vmem>>, vector<4x128xf32>,
    %c0_411 = arith.constant 0 : index
    %c0_412 = arith.constant 0 : index
    %321 = vector.load %arg7[%c0_411, %c0_412] : memref<20x128xf32, #tpu.memory_space<vmem>>, vector<20x128xf32>
    %c0_413 = arith.constant 0 : index
    %c0_414 = arith.constant 0 : index
    %c0_415 = arith.constant 0 : index
    %322 = vector.load %arg2[%c0_413, %c0_414, %c0_415] : memref<5x4x20xf32, #tpu.memory_space<vmem>>, vector<1x4x20xf32>
    %323 = vector.shape_cast %322 : vector<1x4x20xf32> to vector<4x20xf32>
    %cst_416 = arith.constant dense<0.000000e+00> : vector<4x128xf32>
    %324 = tpu.matmul %323, %321, %cst_416 {dimension_numbers = #tpu.dot_dimension_numbers<[1], [0], [0], [1], [0, 0, 1, 1], [], []>} : vector<4x20xf32>, vector<20x128xf32>, vector<4x128xf32> -> vector<4x128xf32>
    %c0_417 = arith.constant 0 : index
    %c0_418 = arith.constant 0 : index
    %325 = vector.load %arg8[%c0_417, %c0_418] : memref<4x128xf32, #tpu.memory_space<vmem>>, vector<4x128xf32>
    tpu.vector_store %arg8[%c0_417, %c0_418], %324 {strides = array<i32>} : memref<4x128xf32, #tpu.memory_space<vmem>>, vector<4x128xf32>,
    %c0_419 = arith.constant 0 : index
    %c0_420 = arith.constant 0 : index
    %c0_421 = arith.constant 0 : index
    %326 = vector.load %arg3[%c0_419, %c0_420, %c0_421] : memref<5x4x20xf32, #tpu.memory_space<vmem>>, vector<1x4x20xf32>
    %327 = vector.shape_cast %326 : vector<1x4x20xf32> to vector<4x20xf32>
    %cst_422 = arith.constant dense<0.000000e+00> : vector<4x128xf32>
    %328 = tpu.matmul %327, %321, %cst_422 {dimension_numbers = #tpu.dot_dimension_numbers<[1], [0], [0], [1], [0, 0, 1, 1], [], []>} : vector<4x20xf32>, vector<20x128xf32>, vector<4x128xf32> -> vector<4x128xf32>
    %c0_423 = arith.constant 0 : index
    %c0_424 = arith.constant 0 : index
    %329 = vector.load %arg9[%c0_423, %c0_424] : memref<4x128xf32, #tpu.memory_space<vmem>>, vector<4x128xf32>
    tpu.vector_store %arg9[%c0_423, %c0_424], %328 {strides = array<i32>} : memref<4x128xf32, #tpu.memory_space<vmem>>, vector<4x128xf32>,
    %c0_425 = arith.constant 0 : index
    %c0_426 = arith.constant 0 : index
    %c304 = arith.constant 304 : index
    %330 = vector.load %arg1[%c0_425, %c0_426, %c304] : memref<1x4x600xf32, #tpu.memory_space<vmem>>, vector<1x4x128xf32>
    %331 = vector.shape_cast %330 : vector<1x4x128xf32> to vector<4x128xf32>
    %c0_427 = arith.constant 0 : index
    %c0_428 = arith.constant 0 : index
    %332 = vector.load %arg7[%c0_427, %c0_428] : memref<20x128xf32, #tpu.memory_space<vmem>>, vector<4x128xf32>
    tpu.vector_store %arg7[%c0_427, %c0_428], %331 {strides = array<i32>} : memref<20x128xf32, #tpu.memory_space<vmem>>, vector<4x128xf32>,
    %c0_429 = arith.constant 0 : index
    %c0_430 = arith.constant 0 : index
    %c306 = arith.constant 306 : index
    %333 = vector.load %arg1[%c0_429, %c0_430, %c306] : memref<1x4x600xf32, #tpu.memory_space<vmem>>, vector<1x4x128xf32>
    %334 = vector.shape_cast %333 : vector<1x4x128xf32> to vector<4x128xf32>
    %c4_431 = arith.constant 4 : index
    %c0_432 = arith.constant 0 : index
    %335 = vector.load %arg7[%c4_431, %c0_432] : memref<20x128xf32, #tpu.memory_space<vmem>>, vector<4x128xf32>
    tpu.vector_store %arg7[%c4_431, %c0_432], %334 {strides = array<i32>} : memref<20x128xf32, #tpu.memory_space<vmem>>, vector<4x128xf32>,
    %c0_433 = arith.constant 0 : index
    %c0_434 = arith.constant 0 : index
    %c308 = arith.constant 308 : index
    %336 = vector.load %arg1[%c0_433, %c0_434, %c308] : memref<1x4x600xf32, #tpu.memory_space<vmem>>, vector<1x4x128xf32>
    %337 = vector.shape_cast %336 : vector<1x4x128xf32> to vector<4x128xf32>
    %c8_435 = arith.constant 8 : index
    %c0_436 = arith.constant 0 : index
    %338 = vector.load %arg7[%c8_435, %c0_436] : memref<20x128xf32, #tpu.memory_space<vmem>>, vector<4x128xf32>
    tpu.vector_store %arg7[%c8_435, %c0_436], %337 {strides = array<i32>} : memref<20x128xf32, #tpu.memory_space<vmem>>, vector<4x128xf32>,
    %c0_437 = arith.constant 0 : index
    %c0_438 = arith.constant 0 : index
    %c310 = arith.constant 310 : index
    %339 = vector.load %arg1[%c0_437, %c0_438, %c310] : memref<1x4x600xf32, #tpu.memory_space<vmem>>, vector<1x4x128xf32>
    %340 = vector.shape_cast %339 : vector<1x4x128xf32> to vector<4x128xf32>
    %c12_439 = arith.constant 12 : index
    %c0_440 = arith.constant 0 : index
    %341 = vector.load %arg7[%c12_439, %c0_440] : memref<20x128xf32, #tpu.memory_space<vmem>>, vector<4x128xf32>
    tpu.vector_store %arg7[%c12_439, %c0_440], %340 {strides = array<i32>} : memref<20x128xf32, #tpu.memory_space<vmem>>, vector<4x128xf32>,
    %c0_441 = arith.constant 0 : index
    %c0_442 = arith.constant 0 : index
    %c312 = arith.constant 312 : index
    %342 = vector.load %arg1[%c0_441, %c0_442, %c312] : memref<1x4x600xf32, #tpu.memory_space<vmem>>, vector<1x4x128xf32>
    %343 = vector.shape_cast %342 : vector<1x4x128xf32> to vector<4x128xf32>
    %c16_443 = arith.constant 16 : index
    %c0_444 = arith.constant 0 : index
    %344 = vector.load %arg7[%c16_443, %c0_444] : memref<20x128xf32, #tpu.memory_space<vmem>>, vector<4x128xf32>
    tpu.vector_store %arg7[%c16_443, %c0_444], %343 {strides = array<i32>} : memref<20x128xf32, #tpu.memory_space<vmem>>, vector<4x128xf32>,
    %c0_445 = arith.constant 0 : index
    %c0_446 = arith.constant 0 : index
    %345 = vector.load %arg7[%c0_445, %c0_446] : memref<20x128xf32, #tpu.memory_space<vmem>>, vector<20x128xf32>
    %c1_447 = arith.constant 1 : index
    %c0_448 = arith.constant 0 : index
    %c0_449 = arith.constant 0 : index
    %346 = vector.load %arg2[%c1_447, %c0_448, %c0_449] : memref<5x4x20xf32, #tpu.memory_space<vmem>>, vector<1x4x20xf32>
    %347 = vector.shape_cast %346 : vector<1x4x20xf32> to vector<4x20xf32>
    %cst_450 = arith.constant dense<0.000000e+00> : vector<4x128xf32>
    %348 = tpu.matmul %347, %345, %cst_450 {dimension_numbers = #tpu.dot_dimension_numbers<[1], [0], [0], [1], [0, 0, 1, 1], [], []>} : vector<4x20xf32>, vector<20x128xf32>, vector<4x128xf32> -> vector<4x128xf32>
    %c0_451 = arith.constant 0 : index
    %c0_452 = arith.constant 0 : index
    %349 = vector.load %arg8[%c0_451, %c0_452] : memref<4x128xf32, #tpu.memory_space<vmem>>, vector<4x128xf32>
    %350 = arith.addf %349, %348 : vector<4x128xf32>
    %c0_453 = arith.constant 0 : index
    %c0_454 = arith.constant 0 : index
    %351 = vector.load %arg8[%c0_453, %c0_454] : memref<4x128xf32, #tpu.memory_space<vmem>>, vector<4x128xf32>
    tpu.vector_store %arg8[%c0_453, %c0_454], %350 {strides = array<i32>} : memref<4x128xf32, #tpu.memory_space<vmem>>, vector<4x128xf32>,
    %c1_455 = arith.constant 1 : index
    %c0_456 = arith.constant 0 : index
    %c0_457 = arith.constant 0 : index
    %352 = vector.load %arg3[%c1_455, %c0_456, %c0_457] : memref<5x4x20xf32, #tpu.memory_space<vmem>>, vector<1x4x20xf32>
    %353 = vector.shape_cast %352 : vector<1x4x20xf32> to vector<4x20xf32>
    %cst_458 = arith.constant dense<0.000000e+00> : vector<4x128xf32>
    %354 = tpu.matmul %353, %345, %cst_458 {dimension_numbers = #tpu.dot_dimension_numbers<[1], [0], [0], [1], [0, 0, 1, 1], [], []>} : vector<4x20xf32>, vector<20x128xf32>, vector<4x128xf32> -> vector<4x128xf32>
    %c0_459 = arith.constant 0 : index
    %c0_460 = arith.constant 0 : index
    %355 = vector.load %arg9[%c0_459, %c0_460] : memref<4x128xf32, #tpu.memory_space<vmem>>, vector<4x128xf32>
    %356 = arith.addf %355, %354 : vector<4x128xf32>
    %c0_461 = arith.constant 0 : index
    %c0_462 = arith.constant 0 : index
    %357 = vector.load %arg9[%c0_461, %c0_462] : memref<4x128xf32, #tpu.memory_space<vmem>>, vector<4x128xf32>
    tpu.vector_store %arg9[%c0_461, %c0_462], %356 {strides = array<i32>} : memref<4x128xf32, #tpu.memory_space<vmem>>, vector<4x128xf32>,
    %c0_463 = arith.constant 0 : index
    %c0_464 = arith.constant 0 : index
    %c352 = arith.constant 352 : index
    %358 = vector.load %arg1[%c0_463, %c0_464, %c352] : memref<1x4x600xf32, #tpu.memory_space<vmem>>, vector<1x4x128xf32>
    %359 = vector.shape_cast %358 : vector<1x4x128xf32> to vector<4x128xf32>
    %c0_465 = arith.constant 0 : index
    %c0_466 = arith.constant 0 : index
    %360 = vector.load %arg7[%c0_465, %c0_466] : memref<20x128xf32, #tpu.memory_space<vmem>>, vector<4x128xf32>
    tpu.vector_store %arg7[%c0_465, %c0_466], %359 {strides = array<i32>} : memref<20x128xf32, #tpu.memory_space<vmem>>, vector<4x128xf32>,
    %c0_467 = arith.constant 0 : index
    %c0_468 = arith.constant 0 : index
    %c354 = arith.constant 354 : index
    %361 = vector.load %arg1[%c0_467, %c0_468, %c354] : memref<1x4x600xf32, #tpu.memory_space<vmem>>, vector<1x4x128xf32>
    %362 = vector.shape_cast %361 : vector<1x4x128xf32> to vector<4x128xf32>
    %c4_469 = arith.constant 4 : index
    %c0_470 = arith.constant 0 : index
    %363 = vector.load %arg7[%c4_469, %c0_470] : memref<20x128xf32, #tpu.memory_space<vmem>>, vector<4x128xf32>
    tpu.vector_store %arg7[%c4_469, %c0_470], %362 {strides = array<i32>} : memref<20x128xf32, #tpu.memory_space<vmem>>, vector<4x128xf32>,
    %c0_471 = arith.constant 0 : index
    %c0_472 = arith.constant 0 : index
    %c356 = arith.constant 356 : index
    %364 = vector.load %arg1[%c0_471, %c0_472, %c356] : memref<1x4x600xf32, #tpu.memory_space<vmem>>, vector<1x4x128xf32>
    %365 = vector.shape_cast %364 : vector<1x4x128xf32> to vector<4x128xf32>
    %c8_473 = arith.constant 8 : index
    %c0_474 = arith.constant 0 : index
    %366 = vector.load %arg7[%c8_473, %c0_474] : memref<20x128xf32, #tpu.memory_space<vmem>>, vector<4x128xf32>
    tpu.vector_store %arg7[%c8_473, %c0_474], %365 {strides = array<i32>} : memref<20x128xf32, #tpu.memory_space<vmem>>, vector<4x128xf32>,
    %c0_475 = arith.constant 0 : index
    %c0_476 = arith.constant 0 : index
    %c358 = arith.constant 358 : index
    %367 = vector.load %arg1[%c0_475, %c0_476, %c358] : memref<1x4x600xf32, #tpu.memory_space<vmem>>, vector<1x4x128xf32>
    %368 = vector.shape_cast %367 : vector<1x4x128xf32> to vector<4x128xf32>
    %c12_477 = arith.constant 12 : index
    %c0_478 = arith.constant 0 : index
    %369 = vector.load %arg7[%c12_477, %c0_478] : memref<20x128xf32, #tpu.memory_space<vmem>>, vector<4x128xf32>
    tpu.vector_store %arg7[%c12_477, %c0_478], %368 {strides = array<i32>} : memref<20x128xf32, #tpu.memory_space<vmem>>, vector<4x128xf32>,
    %c0_479 = arith.constant 0 : index
    %c0_480 = arith.constant 0 : index
    %c360 = arith.constant 360 : index
    %370 = vector.load %arg1[%c0_479, %c0_480, %c360] : memref<1x4x600xf32, #tpu.memory_space<vmem>>, vector<1x4x128xf32>
    %371 = vector.shape_cast %370 : vector<1x4x128xf32> to vector<4x128xf32>
    %c16_481 = arith.constant 16 : index
    %c0_482 = arith.constant 0 : index
    %372 = vector.load %arg7[%c16_481, %c0_482] : memref<20x128xf32, #tpu.memory_space<vmem>>, vector<4x128xf32>
    tpu.vector_store %arg7[%c16_481, %c0_482], %371 {strides = array<i32>} : memref<20x128xf32, #tpu.memory_space<vmem>>, vector<4x128xf32>,
    %c0_483 = arith.constant 0 : index
    %c0_484 = arith.constant 0 : index
    %373 = vector.load %arg7[%c0_483, %c0_484] : memref<20x128xf32, #tpu.memory_space<vmem>>, vector<20x128xf32>
    %c2_485 = arith.constant 2 : index
    %c0_486 = arith.constant 0 : index
    %c0_487 = arith.constant 0 : index
    %374 = vector.load %arg2[%c2_485, %c0_486, %c0_487] : memref<5x4x20xf32, #tpu.memory_space<vmem>>, vector<1x4x20xf32>
    %375 = vector.shape_cast %374 : vector<1x4x20xf32> to vector<4x20xf32>
    %cst_488 = arith.constant dense<0.000000e+00> : vector<4x128xf32>
    %376 = tpu.matmul %375, %373, %cst_488 {dimension_numbers = #tpu.dot_dimension_numbers<[1], [0], [0], [1], [0, 0, 1, 1], [], []>} : vector<4x20xf32>, vector<20x128xf32>, vector<4x128xf32> -> vector<4x128xf32>
    %c0_489 = arith.constant 0 : index
    %c0_490 = arith.constant 0 : index
    %377 = vector.load %arg8[%c0_489, %c0_490] : memref<4x128xf32, #tpu.memory_space<vmem>>, vector<4x128xf32>
    %378 = arith.addf %377, %376 : vector<4x128xf32>
    %c0_491 = arith.constant 0 : index
    %c0_492 = arith.constant 0 : index
    %379 = vector.load %arg8[%c0_491, %c0_492] : memref<4x128xf32, #tpu.memory_space<vmem>>, vector<4x128xf32>
    tpu.vector_store %arg8[%c0_491, %c0_492], %378 {strides = array<i32>} : memref<4x128xf32, #tpu.memory_space<vmem>>, vector<4x128xf32>,
    %c2_493 = arith.constant 2 : index
    %c0_494 = arith.constant 0 : index
    %c0_495 = arith.constant 0 : index
    %380 = vector.load %arg3[%c2_493, %c0_494, %c0_495] : memref<5x4x20xf32, #tpu.memory_space<vmem>>, vector<1x4x20xf32>
    %381 = vector.shape_cast %380 : vector<1x4x20xf32> to vector<4x20xf32>
    %cst_496 = arith.constant dense<0.000000e+00> : vector<4x128xf32>
    %382 = tpu.matmul %381, %373, %cst_496 {dimension_numbers = #tpu.dot_dimension_numbers<[1], [0], [0], [1], [0, 0, 1, 1], [], []>} : vector<4x20xf32>, vector<20x128xf32>, vector<4x128xf32> -> vector<4x128xf32>
    %c0_497 = arith.constant 0 : index
    %c0_498 = arith.constant 0 : index
    %383 = vector.load %arg9[%c0_497, %c0_498] : memref<4x128xf32, #tpu.memory_space<vmem>>, vector<4x128xf32>
    %384 = arith.addf %383, %382 : vector<4x128xf32>
    %c0_499 = arith.constant 0 : index
    %c0_500 = arith.constant 0 : index
    %385 = vector.load %arg9[%c0_499, %c0_500] : memref<4x128xf32, #tpu.memory_space<vmem>>, vector<4x128xf32>
    tpu.vector_store %arg9[%c0_499, %c0_500], %384 {strides = array<i32>} : memref<4x128xf32, #tpu.memory_space<vmem>>, vector<4x128xf32>,
    %c0_501 = arith.constant 0 : index
    %c0_502 = arith.constant 0 : index
    %c400 = arith.constant 400 : index
    %386 = vector.load %arg1[%c0_501, %c0_502, %c400] : memref<1x4x600xf32, #tpu.memory_space<vmem>>, vector<1x4x128xf32>
    %387 = vector.shape_cast %386 : vector<1x4x128xf32> to vector<4x128xf32>
    %c0_503 = arith.constant 0 : index
    %c0_504 = arith.constant 0 : index
    %388 = vector.load %arg7[%c0_503, %c0_504] : memref<20x128xf32, #tpu.memory_space<vmem>>, vector<4x128xf32>
    tpu.vector_store %arg7[%c0_503, %c0_504], %387 {strides = array<i32>} : memref<20x128xf32, #tpu.memory_space<vmem>>, vector<4x128xf32>,
    %c0_505 = arith.constant 0 : index
    %c0_506 = arith.constant 0 : index
    %c402 = arith.constant 402 : index
    %389 = vector.load %arg1[%c0_505, %c0_506, %c402] : memref<1x4x600xf32, #tpu.memory_space<vmem>>, vector<1x4x128xf32>
    %390 = vector.shape_cast %389 : vector<1x4x128xf32> to vector<4x128xf32>
    %c4_507 = arith.constant 4 : index
    %c0_508 = arith.constant 0 : index
    %391 = vector.load %arg7[%c4_507, %c0_508] : memref<20x128xf32, #tpu.memory_space<vmem>>, vector<4x128xf32>
    tpu.vector_store %arg7[%c4_507, %c0_508], %390 {strides = array<i32>} : memref<20x128xf32, #tpu.memory_space<vmem>>, vector<4x128xf32>,
    %c0_509 = arith.constant 0 : index
    %c0_510 = arith.constant 0 : index
    %c404 = arith.constant 404 : index
    %392 = vector.load %arg1[%c0_509, %c0_510, %c404] : memref<1x4x600xf32, #tpu.memory_space<vmem>>, vector<1x4x128xf32>
    %393 = vector.shape_cast %392 : vector<1x4x128xf32> to vector<4x128xf32>
    %c8_511 = arith.constant 8 : index
    %c0_512 = arith.constant 0 : index
    %394 = vector.load %arg7[%c8_511, %c0_512] : memref<20x128xf32, #tpu.memory_space<vmem>>, vector<4x128xf32>
    tpu.vector_store %arg7[%c8_511, %c0_512], %393 {strides = array<i32>} : memref<20x128xf32, #tpu.memory_space<vmem>>, vector<4x128xf32>,
    %c0_513 = arith.constant 0 : index
    %c0_514 = arith.constant 0 : index
    %c406 = arith.constant 406 : index
    %395 = vector.load %arg1[%c0_513, %c0_514, %c406] : memref<1x4x600xf32, #tpu.memory_space<vmem>>, vector<1x4x128xf32>
    %396 = vector.shape_cast %395 : vector<1x4x128xf32> to vector<4x128xf32>
    %c12_515 = arith.constant 12 : index
    %c0_516 = arith.constant 0 : index
    %397 = vector.load %arg7[%c12_515, %c0_516] : memref<20x128xf32, #tpu.memory_space<vmem>>, vector<4x128xf32>
    tpu.vector_store %arg7[%c12_515, %c0_516], %396 {strides = array<i32>} : memref<20x128xf32, #tpu.memory_space<vmem>>, vector<4x128xf32>,
    %c0_517 = arith.constant 0 : index
    %c0_518 = arith.constant 0 : index
    %c408 = arith.constant 408 : index
    %398 = vector.load %arg1[%c0_517, %c0_518, %c408] : memref<1x4x600xf32, #tpu.memory_space<vmem>>, vector<1x4x128xf32>
    %399 = vector.shape_cast %398 : vector<1x4x128xf32> to vector<4x128xf32>
    %c16_519 = arith.constant 16 : index
    %c0_520 = arith.constant 0 : index
    %400 = vector.load %arg7[%c16_519, %c0_520] : memref<20x128xf32, #tpu.memory_space<vmem>>, vector<4x128xf32>
    tpu.vector_store %arg7[%c16_519, %c0_520], %399 {strides = array<i32>} : memref<20x128xf32, #tpu.memory_space<vmem>>, vector<4x128xf32>,
    %c0_521 = arith.constant 0 : index
    %c0_522 = arith.constant 0 : index
    %401 = vector.load %arg7[%c0_521, %c0_522] : memref<20x128xf32, #tpu.memory_space<vmem>>, vector<20x128xf32>
    %c3_523 = arith.constant 3 : index
    %c0_524 = arith.constant 0 : index
    %c0_525 = arith.constant 0 : index
    %402 = vector.load %arg2[%c3_523, %c0_524, %c0_525] : memref<5x4x20xf32, #tpu.memory_space<vmem>>, vector<1x4x20xf32>
    %403 = vector.shape_cast %402 : vector<1x4x20xf32> to vector<4x20xf32>
    %cst_526 = arith.constant dense<0.000000e+00> : vector<4x128xf32>
    %404 = tpu.matmul %403, %401, %cst_526 {dimension_numbers = #tpu.dot_dimension_numbers<[1], [0], [0], [1], [0, 0, 1, 1], [], []>} : vector<4x20xf32>, vector<20x128xf32>, vector<4x128xf32> -> vector<4x128xf32>
    %c0_527 = arith.constant 0 : index
    %c0_528 = arith.constant 0 : index
    %405 = vector.load %arg8[%c0_527, %c0_528] : memref<4x128xf32, #tpu.memory_space<vmem>>, vector<4x128xf32>
    %406 = arith.addf %405, %404 : vector<4x128xf32>
    %c0_529 = arith.constant 0 : index
    %c0_530 = arith.constant 0 : index
    %407 = vector.load %arg8[%c0_529, %c0_530] : memref<4x128xf32, #tpu.memory_space<vmem>>, vector<4x128xf32>
    tpu.vector_store %arg8[%c0_529, %c0_530], %406 {strides = array<i32>} : memref<4x128xf32, #tpu.memory_space<vmem>>, vector<4x128xf32>,
    %c3_531 = arith.constant 3 : index
    %c0_532 = arith.constant 0 : index
    %c0_533 = arith.constant 0 : index
    %408 = vector.load %arg3[%c3_531, %c0_532, %c0_533] : memref<5x4x20xf32, #tpu.memory_space<vmem>>, vector<1x4x20xf32>
    %409 = vector.shape_cast %408 : vector<1x4x20xf32> to vector<4x20xf32>
    %cst_534 = arith.constant dense<0.000000e+00> : vector<4x128xf32>
    %410 = tpu.matmul %409, %401, %cst_534 {dimension_numbers = #tpu.dot_dimension_numbers<[1], [0], [0], [1], [0, 0, 1, 1], [], []>} : vector<4x20xf32>, vector<20x128xf32>, vector<4x128xf32> -> vector<4x128xf32>
    %c0_535 = arith.constant 0 : index
    %c0_536 = arith.constant 0 : index
    %411 = vector.load %arg9[%c0_535, %c0_536] : memref<4x128xf32, #tpu.memory_space<vmem>>, vector<4x128xf32>
    %412 = arith.addf %411, %410 : vector<4x128xf32>
    %c0_537 = arith.constant 0 : index
    %c0_538 = arith.constant 0 : index
    %413 = vector.load %arg9[%c0_537, %c0_538] : memref<4x128xf32, #tpu.memory_space<vmem>>, vector<4x128xf32>
    tpu.vector_store %arg9[%c0_537, %c0_538], %412 {strides = array<i32>} : memref<4x128xf32, #tpu.memory_space<vmem>>, vector<4x128xf32>,
    %c0_539 = arith.constant 0 : index
    %c0_540 = arith.constant 0 : index
    %c448 = arith.constant 448 : index
    %414 = vector.load %arg1[%c0_539, %c0_540, %c448] : memref<1x4x600xf32, #tpu.memory_space<vmem>>, vector<1x4x128xf32>
    %415 = vector.shape_cast %414 : vector<1x4x128xf32> to vector<4x128xf32>
    %c0_541 = arith.constant 0 : index
    %c0_542 = arith.constant 0 : index
    %416 = vector.load %arg7[%c0_541, %c0_542] : memref<20x128xf32, #tpu.memory_space<vmem>>, vector<4x128xf32>
    tpu.vector_store %arg7[%c0_541, %c0_542], %415 {strides = array<i32>} : memref<20x128xf32, #tpu.memory_space<vmem>>, vector<4x128xf32>,
    %c0_543 = arith.constant 0 : index
    %c0_544 = arith.constant 0 : index
    %c450 = arith.constant 450 : index
    %417 = vector.load %arg1[%c0_543, %c0_544, %c450] : memref<1x4x600xf32, #tpu.memory_space<vmem>>, vector<1x4x128xf32>
    %418 = vector.shape_cast %417 : vector<1x4x128xf32> to vector<4x128xf32>
    %c4_545 = arith.constant 4 : index
    %c0_546 = arith.constant 0 : index
    %419 = vector.load %arg7[%c4_545, %c0_546] : memref<20x128xf32, #tpu.memory_space<vmem>>, vector<4x128xf32>
    tpu.vector_store %arg7[%c4_545, %c0_546], %418 {strides = array<i32>} : memref<20x128xf32, #tpu.memory_space<vmem>>, vector<4x128xf32>,
    %c0_547 = arith.constant 0 : index
    %c0_548 = arith.constant 0 : index
    %c452 = arith.constant 452 : index
    %420 = vector.load %arg1[%c0_547, %c0_548, %c452] : memref<1x4x600xf32, #tpu.memory_space<vmem>>, vector<1x4x128xf32>
    %421 = vector.shape_cast %420 : vector<1x4x128xf32> to vector<4x128xf32>
    %c8_549 = arith.constant 8 : index
    %c0_550 = arith.constant 0 : index
    %422 = vector.load %arg7[%c8_549, %c0_550] : memref<20x128xf32, #tpu.memory_space<vmem>>, vector<4x128xf32>
    tpu.vector_store %arg7[%c8_549, %c0_550], %421 {strides = array<i32>} : memref<20x128xf32, #tpu.memory_space<vmem>>, vector<4x128xf32>,
    %c0_551 = arith.constant 0 : index
    %c0_552 = arith.constant 0 : index
    %c454 = arith.constant 454 : index
    %423 = vector.load %arg1[%c0_551, %c0_552, %c454] : memref<1x4x600xf32, #tpu.memory_space<vmem>>, vector<1x4x128xf32>
    %424 = vector.shape_cast %423 : vector<1x4x128xf32> to vector<4x128xf32>
    %c12_553 = arith.constant 12 : index
    %c0_554 = arith.constant 0 : index
    %425 = vector.load %arg7[%c12_553, %c0_554] : memref<20x128xf32, #tpu.memory_space<vmem>>, vector<4x128xf32>
    tpu.vector_store %arg7[%c12_553, %c0_554], %424 {strides = array<i32>} : memref<20x128xf32, #tpu.memory_space<vmem>>, vector<4x128xf32>,
    %c0_555 = arith.constant 0 : index
    %c0_556 = arith.constant 0 : index
    %c456 = arith.constant 456 : index
    %426 = vector.load %arg1[%c0_555, %c0_556, %c456] : memref<1x4x600xf32, #tpu.memory_space<vmem>>, vector<1x4x128xf32>
    %427 = vector.shape_cast %426 : vector<1x4x128xf32> to vector<4x128xf32>
    %c16_557 = arith.constant 16 : index
    %c0_558 = arith.constant 0 : index
    %428 = vector.load %arg7[%c16_557, %c0_558] : memref<20x128xf32, #tpu.memory_space<vmem>>, vector<4x128xf32>
    tpu.vector_store %arg7[%c16_557, %c0_558], %427 {strides = array<i32>} : memref<20x128xf32, #tpu.memory_space<vmem>>, vector<4x128xf32>,
    %c0_559 = arith.constant 0 : index
    %c0_560 = arith.constant 0 : index
    %429 = vector.load %arg7[%c0_559, %c0_560] : memref<20x128xf32, #tpu.memory_space<vmem>>, vector<20x128xf32>
    %c4_561 = arith.constant 4 : index
    %c0_562 = arith.constant 0 : index
    %c0_563 = arith.constant 0 : index
    %430 = vector.load %arg2[%c4_561, %c0_562, %c0_563] : memref<5x4x20xf32, #tpu.memory_space<vmem>>, vector<1x4x20xf32>
    %431 = vector.shape_cast %430 : vector<1x4x20xf32> to vector<4x20xf32>
    %cst_564 = arith.constant dense<0.000000e+00> : vector<4x128xf32>
    %432 = tpu.matmul %431, %429, %cst_564 {dimension_numbers = #tpu.dot_dimension_numbers<[1], [0], [0], [1], [0, 0, 1, 1], [], []>} : vector<4x20xf32>, vector<20x128xf32>, vector<4x128xf32> -> vector<4x128xf32>
    %c0_565 = arith.constant 0 : index
    %c0_566 = arith.constant 0 : index
    %433 = vector.load %arg8[%c0_565, %c0_566] : memref<4x128xf32, #tpu.memory_space<vmem>>, vector<4x128xf32>
    %434 = arith.addf %433, %432 : vector<4x128xf32>
    %c0_567 = arith.constant 0 : index
    %c0_568 = arith.constant 0 : index
    %435 = vector.load %arg8[%c0_567, %c0_568] : memref<4x128xf32, #tpu.memory_space<vmem>>, vector<4x128xf32>
    tpu.vector_store %arg8[%c0_567, %c0_568], %434 {strides = array<i32>} : memref<4x128xf32, #tpu.memory_space<vmem>>, vector<4x128xf32>,
    %c4_569 = arith.constant 4 : index
    %c0_570 = arith.constant 0 : index
    %c0_571 = arith.constant 0 : index
    %436 = vector.load %arg3[%c4_569, %c0_570, %c0_571] : memref<5x4x20xf32, #tpu.memory_space<vmem>>, vector<1x4x20xf32>
    %437 = vector.shape_cast %436 : vector<1x4x20xf32> to vector<4x20xf32>
    %cst_572 = arith.constant dense<0.000000e+00> : vector<4x128xf32>
    %438 = tpu.matmul %437, %429, %cst_572 {dimension_numbers = #tpu.dot_dimension_numbers<[1], [0], [0], [1], [0, 0, 1, 1], [], []>} : vector<4x20xf32>, vector<20x128xf32>, vector<4x128xf32> -> vector<4x128xf32>
    %c0_573 = arith.constant 0 : index
    %c0_574 = arith.constant 0 : index
    %439 = vector.load %arg9[%c0_573, %c0_574] : memref<4x128xf32, #tpu.memory_space<vmem>>, vector<4x128xf32>
    %440 = arith.addf %439, %438 : vector<4x128xf32>
    %c0_575 = arith.constant 0 : index
    %c0_576 = arith.constant 0 : index
    %441 = vector.load %arg9[%c0_575, %c0_576] : memref<4x128xf32, #tpu.memory_space<vmem>>, vector<4x128xf32>
    tpu.vector_store %arg9[%c0_575, %c0_576], %440 {strides = array<i32>} : memref<4x128xf32, #tpu.memory_space<vmem>>, vector<4x128xf32>,
    %c0_577 = arith.constant 0 : index
    %c0_578 = arith.constant 0 : index
    %442 = vector.load %arg8[%c0_577, %c0_578] : memref<4x128xf32, #tpu.memory_space<vmem>>, vector<4x128xf32>
    %c0_579 = arith.constant 0 : index
    %c0_580 = arith.constant 0 : index
    %443 = vector.load %arg4[%c0_579, %c0_580] : memref<4x1xf32, #tpu.memory_space<vmem>>, vector<4x1xf32>
    %444 = vector.broadcast %443 : vector<4x1xf32> to vector<4x128xf32>
    %445 = arith.addf %442, %444 : vector<4x128xf32>
    %c0_581 = arith.constant 0 : index
    %c0_582 = arith.constant 0 : index
    %446 = vector.load %arg9[%c0_581, %c0_582] : memref<4x128xf32, #tpu.memory_space<vmem>>, vector<4x128xf32>
    %c0_583 = arith.constant 0 : index
    %c0_584 = arith.constant 0 : index
    %447 = vector.load %arg5[%c0_583, %c0_584] : memref<4x1xf32, #tpu.memory_space<vmem>>, vector<4x1xf32>
    %448 = vector.broadcast %447 : vector<4x1xf32> to vector<4x128xf32>
    %449 = arith.addf %446, %448 : vector<4x128xf32>
    %450 = arith.negf %449 : vector<4x128xf32>
    %451 = math.exp %450 : vector<4x128xf32>
    %cst_585 = arith.constant 1.000000e+00 : f32
    %452 = vector.broadcast %cst_585 : f32 to vector<4x128xf32>
    %453 = arith.addf %452, %451 : vector<4x128xf32>
    %454 = arith.divf %452, %453 : vector<4x128xf32>
    %455 = arith.mulf %445, %454 : vector<4x128xf32>
    %c0_586 = arith.constant 0 : index
    %c0_587 = arith.constant 0 : index
    %c256_588 = arith.constant 256 : index
    %456 = vector.load %arg6[%c0_586, %c0_587, %c256_588] : memref<1x4x384xf32, #tpu.memory_space<vmem>>, vector<1x4x128xf32>
    %457 = vector.shape_cast %456 : vector<1x4x128xf32> to vector<4x128xf32>
    %458 = vector.shape_cast %455 : vector<4x128xf32> to vector<1x4x128xf32>
    tpu.vector_store %arg6[%c0_586, %c0_587, %c256_588], %458 {strides = array<i32>} : memref<1x4x384xf32, #tpu.memory_space<vmem>>, vector<1x4x128xf32>,
    return
  }
  func.func @transform_0(%arg0: i32) -> (i32, i32, i32) {
    %c0_i32 = arith.constant 0 : i32
    %c0_i32_0 = arith.constant 0 : i32
    %c0_i32_1 = arith.constant 0 : i32
    return %arg0, %c0_i32, %c0_i32_0 : i32, i32, i32
  }
  func.func @transform_1(%arg0: i32) -> (i32, i32, i32) {
    %c0_i32 = arith.constant 0 : i32
    %c0_i32_0 = arith.constant 0 : i32
    %c0_i32_1 = arith.constant 0 : i32
    %c0_i32_2 = arith.constant 0 : i32
    return %c0_i32, %c0_i32_0, %c0_i32_1 : i32, i32, i32
  }
  func.func @transform_2(%arg0: i32) -> (i32, i32, i32) {
    %c0_i32 = arith.constant 0 : i32
    %c0_i32_0 = arith.constant 0 : i32
    %c0_i32_1 = arith.constant 0 : i32
    %c0_i32_2 = arith.constant 0 : i32
    return %c0_i32, %c0_i32_0, %c0_i32_1 : i32, i32, i32
  }
  func.func @transform_3(%arg0: i32) -> (i32, i32) {
    %c0_i32 = arith.constant 0 : i32
    %c0_i32_0 = arith.constant 0 : i32
    %c0_i32_1 = arith.constant 0 : i32
    return %c0_i32, %c0_i32_0 : i32, i32
  }
  func.func @transform_4(%arg0: i32) -> (i32, i32) {
    %c0_i32 = arith.constant 0 : i32
    %c0_i32_0 = arith.constant 0 : i32
    %c0_i32_1 = arith.constant 0 : i32
    return %c0_i32, %c0_i32_0 : i32, i32
  }
  func.func @transform_5(%arg0: i32) -> (i32, i32, i32) {
    %c0_i32 = arith.constant 0 : i32
    %c0_i32_0 = arith.constant 0 : i32
    %c0_i32_1 = arith.constant 0 : i32
    return %arg0, %c0_i32, %c0_i32_0 : i32, i32, i32
  }
}

</mosaic_0001>

<llo_original>
// kernel: covd_forward.2
$region0: #{covd_forward.2}
  #allocation0 [shape = 'u32[]', space=smem, size = 0x4, offset = 0x4, fixed_abs, tag = 'smem constant byte address 0x4 - core index']
  #allocation1 [shape = 'u32[72,128]{1,0:T(1,128)}', space=vmem, size = 0x9000, scoped, tag = 'internal scratch']
  #allocation2 [shape = 'f32[12,128]{1,0:T(8,128)}', space=vmem, size = 0x2000, scoped, tag = 'scratch operand']
  #allocation3 [shape = 'f32[4,128]{1,0:T(4,128)}', space=vmem, size = 0x800, scoped, tag = 'scratch operand']
  #allocation4 [shape = 'f32[4,128]{1,0:T(4,128)}', space=vmem, size = 0x800, scoped, tag = 'scratch operand']
  %s0 = inlined_call_operand.vmem [shape: f32[2,4,504], index: 0, kind: input, shape index: {}]
  %s1 = inlined_call_operand.vmem [shape: f32[3,4,12], index: 1, kind: input, shape index: {}]
  %s2 = inlined_call_operand.vmem [shape: f32[3,4,12], index: 2, kind: input, shape index: {}]
  %s3 = inlined_call_operand.vmem [shape: f32[4,1], index: 3, kind: input, shape index: {}]
  %s4 = inlined_call_operand.vmem [shape: f32[4,1], index: 4, kind: input, shape index: {}]
  %s5 = inlined_call_operand.vmem [shape: f32[2,4,384], index: 5, kind: output, shape index: {}]
  %s6 = sld [smem:[#allocation0]]
  $region53: #{covd_forward.2} parent=0
    _
  %s8 = ssub.s32 1, %s6
  %s9 = scalar_select 0, %s8, %s6
  loop: start=0, step=1, limit=4
  $region2: #{covd_forward.2} parent=0 // loop_pre_header
    _
  $region3: #{covd_forward.2} parent=0 // loop_header
    %s11 = sphi 0, %s15
    %p12 = scmp.ge.s32.totalorder %s11, 4
    %s21 = sphi 0, %s23
    %s24 = sphi 0, %s21
    %s25 = sphi 0, %s24
    %s41 = sphi 0, %s25
    %s45 = sphi 0, %s45
    %s47 = sphi 0, %s45
    %s48 = sphi 0, %s47
    %s62 = sphi 0, %s48
    %s66 = sphi 0, %s66
    %s68 = sphi 0, %s66
    %s69 = sphi 0, %s68
    %s83 = sphi 0, %s69
    %s87 = sphi 0, %s87
    %s89 = sphi 0, %s87
    %s90 = sphi 0, %s89
    %s104 = sphi 0, %s90
    %s108 = sphi 0, %s108
    %s110 = sphi 0, %s108
    %s111 = sphi 0, %s110
    %s125 = sphi 0, %s111
    %s131 = sphi 0, %s133
    %s134 = sphi 0, %s131
    %s135 = sphi 0, %s134
    %s151 = sphi 0, %s135
  $region4: #{covd_forward.2} parent=0 // loop_header_branch
    %14 = sbr.rel (%p12) target = $region8
  $region5: #{covd_forward.2} parent=0 // loop_body
    %s16 = ssub.s32 %s11, 1
    %s17 = ssub.s32 %s11, 2
    %s18 = sadd.s32 %s11, 1
    %s19 = ssub.s32 %s11, %s18
    %p20 = scmp.eq.s32.totalorder %s19, 0
    %s22 = sadd.s32 %s21, 1
    %s23 = scalar_select %p20, %s21, %s22
    %p26 = pneg %p20
    %p27 = scmp.eq.s32.totalorder %s11, 1
    %p28 = por %p26, %p27
    %p29 = scmp.ne.s32.totalorder %s21, %s24
    %p30 = scmp.eq.s32.totalorder %s11, 0
    %p31 = por %p29, %p30
    %p32 = scmp.ne.s32.totalorder %s21, %s24
    %p33 = scmp.eq.s32.totalorder %s16, 1
    %p34 = por %p32, %p33
    %p35 = scmp.ne.s32.totalorder %s24, %s25
    %p36 = scmp.eq.s32.totalorder %s16, 0
    %p37 = por %p35, %p36
    %p38 = scmp.ne.s32.totalorder %s24, %s25
    %p39 = scmp.eq.s32.totalorder %s17, 1
    %p40 = por %p38, %p39
    %p42 = scmp.ne.s32.totalorder %s25, %s41
    %p43 = scmp.eq.s32.totalorder %s17, 0
    %p44 = por %p42, %p43
    %s46 = sadd.s32 %s45, 1
    %p49 = scmp.eq.s32.totalorder %s11, 1
    %p50 = scmp.ne.s32.totalorder %s45, %s47
    %p51 = scmp.eq.s32.totalorder %s11, 0
    %p52 = por %p50, %p51
    %p53 = scmp.ne.s32.totalorder %s45, %s47
    %p54 = scmp.eq.s32.totalorder %s16, 1
    %p55 = por %p53, %p54
    %p56 = scmp.ne.s32.totalorder %s47, %s48
    %p57 = scmp.eq.s32.totalorder %s16, 0
    %p58 = por %p56, %p57
    %p59 = scmp.ne.s32.totalorder %s47, %s48
    %p60 = scmp.eq.s32.totalorder %s17, 1
    %p61 = por %p59, %p60
    %p63 = scmp.ne.s32.totalorder %s48, %s62
    %p64 = scmp.eq.s32.totalorder %s17, 0
    %p65 = por %p63, %p64
    %s67 = sadd.s32 %s66, 1
    %p70 = scmp.eq.s32.totalorder %s11, 1
    %p71 = scmp.ne.s32.totalorder %s66, %s68
    %p72 = scmp.eq.s32.totalorder %s11, 0
    %p73 = por %p71, %p72
    %p74 = scmp.ne.s32.totalorder %s66, %s68
    %p75 = scmp.eq.s32.totalorder %s16, 1
    %p76 = por %p74, %p75
    %p77 = scmp.ne.s32.totalorder %s68, %s69
    %p78 = scmp.eq.s32.totalorder %s16, 0
    %p79 = por %p77, %p78
    %p80 = scmp.ne.s32.totalorder %s68, %s69
    %p81 = scmp.eq.s32.totalorder %s17, 1
    %p82 = por %p80, %p81
    %p84 = scmp.ne.s32.totalorder %s69, %s83
    %p85 = scmp.eq.s32.totalorder %s17, 0
    %p86 = por %p84, %p85
    %s88 = sadd.s32 %s87, 1
    %p91 = scmp.eq.s32.totalorder %s11, 1
    %p92 = scmp.ne.s32.totalorder %s87, %s89
    %p93 = scmp.eq.s32.totalorder %s11, 0
    %p94 = por %p92, %p93
    %p95 = scmp.ne.s32.totalorder %s87, %s89
    %p96 = scmp.eq.s32.totalorder %s16, 1
    %p97 = por %p95, %p96
    %p98 = scmp.ne.s32.totalorder %s89, %s90
    %p99 = scmp.eq.s32.totalorder %s16, 0
    %p100 = por %p98, %p99
    %p101 = scmp.ne.s32.totalorder %s89, %s90
    %p102 = scmp.eq.s32.totalorder %s17, 1
    %p103 = por %p101, %p102
    %p105 = scmp.ne.s32.totalorder %s90, %s104
    %p106 = scmp.eq.s32.totalorder %s17, 0
    %p107 = por %p105, %p106
    %s109 = sadd.s32 %s108, 1
    %p112 = scmp.eq.s32.totalorder %s11, 1
    %p113 = scmp.ne.s32.totalorder %s108, %s110
    %p114 = scmp.eq.s32.totalorder %s11, 0
    %p115 = por %p113, %p114
    %p116 = scmp.ne.s32.totalorder %s108, %s110
    %p117 = scmp.eq.s32.totalorder %s16, 1
    %p118 = por %p116, %p117
    %p119 = scmp.ne.s32.totalorder %s110, %s111
    %p120 = scmp.eq.s32.totalorder %s16, 0
    %p121 = por %p119, %p120
    %p122 = scmp.ne.s32.totalorder %s110, %s111
    %p123 = scmp.eq.s32.totalorder %s17, 1
    %p124 = por %p122, %p123
    %p126 = scmp.ne.s32.totalorder %s111, %s125
    %p127 = scmp.eq.s32.totalorder %s17, 0
    %p128 = por %p126, %p127
    %s129 = ssub.s32 %s11, %s18
    %p130 = scmp.eq.s32.totalorder %s129, 0
    %s132 = sadd.s32 %s131, 1
    %s133 = scalar_select %p130, %s131, %s132
    %p136 = pneg %p130
    %p137 = scmp.eq.s32.totalorder %s11, 1
    %p138 = por %p136, %p137
    %p139 = scmp.ne.s32.totalorder %s131, %s134
    %p140 = scmp.eq.s32.totalorder %s11, 0
    %p141 = por %p139, %p140
    %p142 = scmp.ne.s32.totalorder %s131, %s134
    %p143 = scmp.eq.s32.totalorder %s16, 1
    %p144 = por %p142, %p143
    %p145 = scmp.ne.s32.totalorder %s134, %s135
    %p146 = scmp.eq.s32.totalorder %s16, 0
    %p147 = por %p145, %p146
    %p148 = scmp.ne.s32.totalorder %s134, %s135
    %p149 = scmp.eq.s32.totalorder %s17, 1
    %p150 = por %p148, %p149
    %p152 = scmp.ne.s32.totalorder %s135, %s151
    %p153 = scmp.eq.s32.totalorder %s17, 0
    %p154 = por %p152, %p153
    %p155 = scmp.le.s32.totalorder 1, %s11
    %p156 = scmp.lt.s32.totalorder %s11, 3
    %p157 = pnand %p155, %p156
    %p158 = pneg %p157
    // Predicated region
    $region9: #{covd_forward.2} parent=5 // pred_check
      _
    $region10: #{covd_forward.2} parent=5 // pred_check_branch
      %160 = sbr.rel (%p157) target = $region12
    $region11: #{covd_forward.2} parent=5 // pred_region
      %s161 = ssub.s32 %s11, 1
      // Predicated region
      $region13: #{covd_forward.2} parent=11 // pred_check
        %p162 = pneg %p58
      $region14: #{covd_forward.2} parent=11 // pred_check_branch
        %164 = sbr.rel (%p162) target = $region16
      $region15: #{covd_forward.2} parent=11 // pred_region
        _
      $region16: #{covd_forward.2} parent=11 // pred_fallthru
        _
      // Predicated region
      $region17: #{covd_forward.2} parent=11 // pred_check
        %p165 = pneg %p79
      $region18: #{covd_forward.2} parent=11 // pred_check_branch
        %167 = sbr.rel (%p165) target = $region20
      $region19: #{covd_forward.2} parent=11 // pred_region
        _
      $region20: #{covd_forward.2} parent=11 // pred_fallthru
        _
      // Predicated region
      $region21: #{covd_forward.2} parent=11 // pred_check
        %p168 = pneg %p100
      $region22: #{covd_forward.2} parent=11 // pred_check_branch
        %170 = sbr.rel (%p168) target = $region24
      $region23: #{covd_forward.2} parent=11 // pred_region
        _
      $region24: #{covd_forward.2} parent=11 // pred_fallthru
        _
      // Predicated region
      $region25: #{covd_forward.2} parent=11 // pred_check
        %p171 = pneg %p121
      $region26: #{covd_forward.2} parent=11 // pred_check_branch
        %173 = sbr.rel (%p171) target = $region28
      $region27: #{covd_forward.2} parent=11 // pred_region
        _
      $region28: #{covd_forward.2} parent=11 // pred_fallthru
        _
    $region12: #{covd_forward.2} parent=5 // pred_fallthru
      _
    %p174 = scmp.lt.s32.totalorder %s11, 2
    // Predicated region
    $region29: #{covd_forward.2} parent=5 // pred_check
      %p175 = pneg %p174
    $region30: #{covd_forward.2} parent=5 // pred_check_branch
      %177 = sbr.rel (%p175) target = $region32
    $region31: #{covd_forward.2} parent=5 // pred_region
      // Predicated region
      $region33: #{covd_forward.2} parent=31 // pred_check
        %p178 = pneg %p31
      $region34: #{covd_forward.2} parent=31 // pred_check_branch
        %180 = sbr.rel (%p178) target = $region36
      $region35: #{covd_forward.2} parent=31 // pred_region
        %p181 = scmp.lt.s32.totalorder %s11, 1
        %s182 = scalar_select %p181, %s11, 1
        %s183 = smul.addr %s182, 4
        %s184 = smul.addr %s183, 4
        %s185 = scalar_lea.vmem %s0, %s184
      $region36: #{covd_forward.2} parent=31 // pred_fallthru
        _
    $region32: #{covd_forward.2} parent=5 // pred_fallthru
      _
    %p186 = scmp.le.s32.totalorder 1, %s11
    %p187 = scmp.lt.s32.totalorder %s11, 3
    %p188 = pnand %p186, %p187
    %p189 = pneg %p188
    // Predicated region
    $region37: #{covd_forward.2} parent=5 // pred_check
      _
    $region38: #{covd_forward.2} parent=5 // pred_check_branch
      %191 = sbr.rel (%p188) target = $region40
    $region39: #{covd_forward.2} parent=5 // pred_region
      %s192 = ssub.s32 %s11, 1
      %p193 = scmp.lt.s32.totalorder %s16, 1
      %s194 = scalar_select %p193, %s16, 1
      %s195 = smul.addr %s194, 4
      %s196 = smul.addr %s195, 4
      %s197 = scalar_lea.vmem %s0, %s196
      %p198 = pneg %p37
      %p199 = pneg %p34
      %p200 = pneg %p58
      %p201 = pneg %p55
      %p202 = pneg %p79
      %p203 = pneg %p76
      %p204 = pneg %p100
      %p205 = pneg %p97
      %p206 = pneg %p121
      %p207 = pneg %p118
      %p208 = pneg %p147
      %p209 = pneg %p144
      %p210 = scmp.lt.s32.totalorder %s16, 1
      %s211 = scalar_select %p210, %s16, 1
      %s212 = smul.addr %s211, 3
      %s213 = smul.addr %s212, 4
      %s214 = scalar_lea.vmem %s5, %s213
      %p215 = scmp.lt.s32.totalorder %s16, 1
      %s216 = scalar_select %p215, %s16, 1
      %s217 = smul.addr %s216, 4
      %s218 = smul.addr %s217, 4
      %s219 = scalar_lea.vmem %s0, %s218
      %p220 = scmp.lt.s32.totalorder %s16, 1
      %s221 = scalar_select %p220, %s16, 1
      %s222 = smul.addr %s221, 3
      %s223 = smul.addr %s222, 4
      %s224 = scalar_lea.vmem %s5, %s223
      %v225 = vld [vmem:[%s219] sm:$0xf]
      %226 = vst [vmem:[#allocation2] sm:$0xf] %v225
      %v227 = vld [vmem:[%s219] sm:$0xff]
      %229 = vst [vmem:[#allocation1] ss:$2 sm:$0xff] %v227
      %v230 = vld.sshfl [vmem:[#allocation1] sm:$0xff pattern:$0x75316420]
      %v231 = vld.sshfl [vmem:[#allocation1 + $0x8] sm:$0xff pattern:$0x75316420]
      %232 = vrot.lane.b32.xlu0 %v230, 126
      %v233 = vpop.permute.xlu0 %232
      %234 = vrot.lane.b32.xlu0 %v231, 126
      %v235 = vpop.permute.xlu0 %234
      %vm236 = vcmask 1031168
      %v237 = vsel %vm236, %v233, %v235
      %239 = vst [vmem:[#allocation2 + $0x4] sm:$0xf] %v237
      %v240 = vld [vmem:[%s219] sm:$0xff]
      %242 = vst [vmem:[#allocation1] ss:$2 sm:$0xff] %v240
      %v243 = vld.sshfl [vmem:[#allocation1] sm:$0xff pattern:$0x75316420]
      %v244 = vld.sshfl [vmem:[#allocation1 + $0x8] sm:$0xff pattern:$0x75316420]
      %245 = vrot.lane.b32.xlu0 %v243, 124
      %v246 = vpop.permute.xlu0 %245
      %247 = vrot.lane.b32.xlu0 %v244, 124
      %v248 = vpop.permute.xlu0 %247
      %vm249 = vcmask 1014784
      %v250 = vsel %vm249, %v246, %v248
      %252 = vst [vmem:[#allocation2 + $0x8] sm:$0xf] %v250
      %v253 = vld [vmem:[#allocation2] sm:$0xff]
      %v254 = vld [vmem:[#allocation2 + $0x8] sm:$0xf]
      %v255 = vld [vmem:[%s1] sm:$0xf]
      %vm256 = vcmask 97280
      %v258 = vsel %vm256, %v255, 0
      %vm260 = vcmask 1043456
      %v262 = vsel %vm260, %v254, 0
      %264 = vmatpush.msra.mxu0 0.0
      %265 = vmatpush.msra.mxu0 0.0
      %266 = vmatpush.msra.mxu0 0.0
      %267 = vmatpush.msra.mxu0 0.0
      %268 = vmatpush.msra.mxu0 0.0
      %269 = vmatpush.msra.mxu0 0.0
      %270 = vmatpush.msra.mxu0 0.0
      %271 = vmatpush.msra.mxu0 0.0
      %272 = vmatpush.msra.mxu0 0.0
      %273 = vmatpush.msra.mxu0 0.0
      %274 = vmatpush.msra.mxu0 0.0
      %275 = vmatpush.msra.mxu0 0.0
      %276 = vmatpush.msra.mxu0 0.0
      %277 = vmatpush.msra.mxu0 0.0
      %278 = vmatpush.msra.mxu0 %v262
      %279 = vmatpush.msra.mxu0 %v253
      %280 = vmatmul.f32.gmra.mxu0 %v258
      %v281 = vpop.f32.mrf.mxu0
      %v282 = vadd.f32 0.0, %v281
      %283 = vdwg.mxu0
      %284 = vst [vmem:[#allocation3] sm:$0xf] %v282
      %v285 = vld [vmem:[%s2] sm:$0xf]
      %v287 = vsel %vm256, %v285, 0
      %289 = vmatpush.msra.mxu0 0.0
      %290 = vmatpush.msra.mxu0 0.0
      %291 = vmatpush.msra.mxu0 0.0
      %292 = vmatpush.msra.mxu0 0.0
      %293 = vmatpush.msra.mxu0 0.0
      %294 = vmatpush.msra.mxu0 0.0
      %295 = vmatpush.msra.mxu0 0.0
      %296 = vmatpush.msra.mxu0 0.0
      %297 = vmatpush.msra.mxu0 0.0
      %298 = vmatpush.msra.mxu0 0.0
      %299 = vmatpush.msra.mxu0 0.0
      %300 = vmatpush.msra.mxu0 0.0
      %301 = vmatpush.msra.mxu0 0.0
      %302 = vmatpush.msra.mxu0 0.0
      %303 = vmatpush.msra.mxu0 %v262
      %304 = vmatpush.msra.mxu0 %v253
      %305 = vmatmul.f32.gmra.mxu0 %v287
      %v306 = vpop.f32.mrf.mxu0
      %v307 = vadd.f32 0.0, %v306
      %308 = vdwg.mxu0
      %309 = vst [vmem:[#allocation4] sm:$0xf] %v307
      %v310 = vld [vmem:[%s219] sm:$0xff]
      %312 = vst [vmem:[#allocation1] ss:$2 sm:$0xff] %v310
      %v313 = vld.sshfl [vmem:[#allocation1] sm:$0xff pattern:$0x75316420]
      %v314 = vld.sshfl [vmem:[#allocation1 + $0x8] sm:$0xff pattern:$0x75316420]
      %315 = vrot.lane.b32.xlu0 %v313, 80
      %v316 = vpop.permute.xlu0 %315
      %317 = vrot.lane.b32.xlu0 %v314, 80
      %v318 = vpop.permute.xlu0 %317
      %vm319 = vcmask 654336
      %v320 = vsel %vm319, %v316, %v318
      %322 = vst [vmem:[#allocation2] sm:$0xf] %v320
      %v323 = vld [vmem:[%s219] sm:$0xff]
      %325 = vst [vmem:[#allocation1] ss:$2 sm:$0xff] %v323
      %v326 = vld.sshfl [vmem:[#allocation1] sm:$0xff pattern:$0x75316420]
      %v327 = vld.sshfl [vmem:[#allocation1 + $0x8] sm:$0xff pattern:$0x75316420]
      %328 = vrot.lane.b32.xlu0 %v326, 78
      %v329 = vpop.permute.xlu0 %328
      %330 = vrot.lane.b32.xlu0 %v327, 78
      %v331 = vpop.permute.xlu0 %330
      %vm332 = vcmask 637952
      %v333 = vsel %vm332, %v329, %v331
      %335 = vst [vmem:[#allocation2 + $0x4] sm:$0xf] %v333
      %v336 = vld [vmem:[%s219] sm:$0xff]
      %338 = vst [vmem:[#allocation1] ss:$2 sm:$0xff] %v336
      %v339 = vld.sshfl [vmem:[#allocation1] sm:$0xff pattern:$0x75316420]
      %v340 = vld.sshfl [vmem:[#allocation1 + $0x8] sm:$0xff pattern:$0x75316420]
      %341 = vrot.lane.b32.xlu0 %v339, 76
      %v342 = vpop.permute.xlu0 %341
      %343 = vrot.lane.b32.xlu0 %v340, 76
      %v344 = vpop.permute.xlu0 %343
      %vm345 = vcmask 621568
      %v346 = vsel %vm345, %v342, %v344
      %348 = vst [vmem:[#allocation2 + $0x8] sm:$0xf] %v346
      %v349 = vld [vmem:[#allocation2] sm:$0xff]
      %v350 = vld [vmem:[#allocation2 + $0x8] sm:$0xf]
      %s351 = scalar_lea.vmem %s1, 4
      %v352 = vld [vmem:[%s351] sm:$0xf]
      %v354 = vsel %vm256, %v352, 0
      %v357 = vsel %vm260, %v350, 0
      %359 = vmatpush.msra.mxu0 0.0
      %360 = vmatpush.msra.mxu0 0.0
      %361 = vmatpush.msra.mxu0 0.0
      %362 = vmatpush.msra.mxu0 0.0
      %363 = vmatpush.msra.mxu0 0.0
      %364 = vmatpush.msra.mxu0 0.0
      %365 = vmatpush.msra.mxu0 0.0
      %366 = vmatpush.msra.mxu0 0.0
      %367 = vmatpush.msra.mxu0 0.0
      %368 = vmatpush.msra.mxu0 0.0
      %369 = vmatpush.msra.mxu0 0.0
      %370 = vmatpush.msra.mxu0 0.0
      %371 = vmatpush.msra.mxu0 0.0
      %372 = vmatpush.msra.mxu0 0.0
      %373 = vmatpush.msra.mxu0 %v357
      %374 = vmatpush.msra.mxu0 %v349
      %375 = vmatmul.f32.gmra.mxu0 %v354
      %v376 = vpop.f32.mrf.mxu0
      %v377 = vadd.f32 0.0, %v376
      %378 = vdwg.mxu0
      %v379 = vld [vmem:[#allocation3] sm:$0xf]
      %v380 = vadd.f32 %v379, %v377
      %381 = vst [vmem:[#allocation3] sm:$0xf] %v380
      %s382 = scalar_lea.vmem %s2, 4
      %v383 = vld [vmem:[%s382] sm:$0xf]
      %v385 = vsel %vm256, %v383, 0
      %387 = vmatpush.msra.mxu0 0.0
      %388 = vmatpush.msra.mxu0 0.0
      %389 = vmatpush.msra.mxu0 0.0
      %390 = vmatpush.msra.mxu0 0.0
      %391 = vmatpush.msra.mxu0 0.0
      %392 = vmatpush.msra.mxu0 0.0
      %393 = vmatpush.msra.mxu0 0.0
      %394 = vmatpush.msra.mxu0 0.0
      %395 = vmatpush.msra.mxu0 0.0
      %396 = vmatpush.msra.mxu0 0.0
      %397 = vmatpush.msra.mxu0 0.0
      %398 = vmatpush.msra.mxu0 0.0
      %399 = vmatpush.msra.mxu0 0.0
      %400 = vmatpush.msra.mxu0 0.0
      %401 = vmatpush.msra.mxu0 %v357
      %402 = vmatpush.msra.mxu0 %v349
      %403 = vmatmul.f32.gmra.mxu0 %v385
      %v404 = vpop.f32.mrf.mxu0
      %v405 = vadd.f32 0.0, %v404
      %406 = vdwg.mxu0
      %v407 = vld [vmem:[#allocation4] sm:$0xf]
      %v408 = vadd.f32 %v407, %v405
      %409 = vst [vmem:[#allocation4] sm:$0xf] %v408
      %v410 = vld [vmem:[%s219] sm:$0xff]
      %412 = vst [vmem:[#allocation1] ss:$2 sm:$0xff] %v410
      %v413 = vld.sshfl [vmem:[#allocation1] sm:$0xff pattern:$0x75316420]
      %v414 = vld.sshfl [vmem:[#allocation1 + $0x8] sm:$0xff pattern:$0x75316420]
      %415 = vrot.lane.b32.xlu0 %v413, 32
      %v416 = vpop.permute.xlu0 %415
      %417 = vrot.lane.b32.xlu0 %v414, 32
      %v418 = vpop.permute.xlu0 %417
      %vm419 = vcmask 261120
      %v420 = vsel %vm419, %v416, %v418
      %422 = vst [vmem:[#allocation2] sm:$0xf] %v420
      %v423 = vld [vmem:[%s219] sm:$0xff]
      %425 = vst [vmem:[#allocation1] ss:$2 sm:$0xff] %v423
      %v426 = vld.sshfl [vmem:[#allocation1] sm:$0xff pattern:$0x75316420]
      %v427 = vld.sshfl [vmem:[#allocation1 + $0x8] sm:$0xff pattern:$0x75316420]
      %428 = vrot.lane.b32.xlu0 %v426, 30
      %v429 = vpop.permute.xlu0 %428
      %430 = vrot.lane.b32.xlu0 %v427, 30
      %v431 = vpop.permute.xlu0 %430
      %vm432 = vcmask 244736
      %v433 = vsel %vm432, %v429, %v431
      %435 = vst [vmem:[#allocation2 + $0x4] sm:$0xf] %v433
      %v436 = vld [vmem:[%s219] sm:$0xff]
      %438 = vst [vmem:[#allocation1] ss:$2 sm:$0xff] %v436
      %v439 = vld.sshfl [vmem:[#allocation1] sm:$0xff pattern:$0x75316420]
      %v440 = vld.sshfl [vmem:[#allocation1 + $0x8] sm:$0xff pattern:$0x75316420]
      %441 = vrot.lane.b32.xlu0 %v439, 28
      %v442 = vpop.permute.xlu0 %441
      %443 = vrot.lane.b32.xlu0 %v440, 28
      %v444 = vpop.permute.xlu0 %443
      %vm445 = vcmask 228352
      %v446 = vsel %vm445, %v442, %v444
      %448 = vst [vmem:[#allocation2 + $0x8] sm:$0xf] %v446
      %v449 = vld [vmem:[#allocation2] sm:$0xff]
      %v450 = vld [vmem:[#allocation2 + $0x8] sm:$0xf]
      %s451 = scalar_lea.vmem %s1, 8
      %v452 = vld [vmem:[%s451] sm:$0xf]
      %v454 = vsel %vm256, %v452, 0
      %v457 = vsel %vm260, %v450, 0
      %459 = vmatpush.msra.mxu0 0.0
      %460 = vmatpush.msra.mxu0 0.0
      %461 = vmatpush.msra.mxu0 0.0
      %462 = vmatpush.msra.mxu0 0.0
      %463 = vmatpush.msra.mxu0 0.0
      %464 = vmatpush.msra.mxu0 0.0
      %465 = vmatpush.msra.mxu0 0.0
      %466 = vmatpush.msra.mxu0 0.0
      %467 = vmatpush.msra.mxu0 0.0
      %468 = vmatpush.msra.mxu0 0.0
      %469 = vmatpush.msra.mxu0 0.0
      %470 = vmatpush.msra.mxu0 0.0
      %471 = vmatpush.msra.mxu0 0.0
      %472 = vmatpush.msra.mxu0 0.0
      %473 = vmatpush.msra.mxu0 %v457
      %474 = vmatpush.msra.mxu0 %v449
      %475 = vmatmul.f32.gmra.mxu0 %v454
      %v476 = vpop.f32.mrf.mxu0
      %v477 = vadd.f32 0.0, %v476
      %478 = vdwg.mxu0
      %v479 = vld [vmem:[#allocation3] sm:$0xf]
      %v480 = vadd.f32 %v479, %v477
      %481 = vst [vmem:[#allocation3] sm:$0xf] %v480
      %s482 = scalar_lea.vmem %s2, 8
      %v483 = vld [vmem:[%s482] sm:$0xf]
      %v485 = vsel %vm256, %v483, 0
      %487 = vmatpush.msra.mxu0 0.0
      %488 = vmatpush.msra.mxu0 0.0
      %489 = vmatpush.msra.mxu0 0.0
      %490 = vmatpush.msra.mxu0 0.0
      %491 = vmatpush.msra.mxu0 0.0
      %492 = vmatpush.msra.mxu0 0.0
      %493 = vmatpush.msra.mxu0 0.0
      %494 = vmatpush.msra.mxu0 0.0
      %495 = vmatpush.msra.mxu0 0.0
      %496 = vmatpush.msra.mxu0 0.0
      %497 = vmatpush.msra.mxu0 0.0
      %498 = vmatpush.msra.mxu0 0.0
      %499 = vmatpush.msra.mxu0 0.0
      %500 = vmatpush.msra.mxu0 0.0
      %501 = vmatpush.msra.mxu0 %v457
      %502 = vmatpush.msra.mxu0 %v449
      %503 = vmatmul.f32.gmra.mxu0 %v485
      %v504 = vpop.f32.mrf.mxu0
      %v505 = vadd.f32 0.0, %v504
      %506 = vdwg.mxu0
      %v507 = vld [vmem:[#allocation4] sm:$0xf]
      %v508 = vadd.f32 %v507, %v505
      %509 = vst [vmem:[#allocation4] sm:$0xf] %v508
      %v510 = vld [vmem:[#allocation3] sm:$0xf]
      %v511 = vld [vmem:[%s3] sm:$0xf]
      %513 = vset.pattern.permute.xlu0 0
      %514 = vperm.xlu0 %513, %v511
      %v515 = vpop.permute.xlu0 %514
      %v517 = vadd.f32 %v510, %v515
      %v518 = vld [vmem:[#allocation4] sm:$0xf]
      %v519 = vld [vmem:[%s4] sm:$0xf]
      %521 = vset.pattern.permute.xlu0 0
      %522 = vperm.xlu0 %521, %v519
      %v523 = vpop.permute.xlu0 %522
      %v525 = vadd.f32 %v518, %v523
      %v526 = vxor.u32 %v525, 2147483648
      %v527 = vmul.f32 %v526, 1.442695
      %v528 = vpow.pop %v527
      %v529 = vadd.f32 %v528, 1.0
      %v530 = vrcp.pop %v529
      %v531 = vmul.f32 %v529, %v530
      %v532 = vsub.f32 1.0, %v531
      %v533 = vmul.f32 %v530, %v532
      %v534 = vadd.f32 %v530, %v533
      %vm535 = vweird.f32 %v529
      %vm536 = vweird.f32 %v530
      %vm537 = vmor %vm535, %vm536
      %v538 = vsel %vm537, %v530, %v534
      %v539 = vand.u32 2147483647, %v529
      %vm540 = vcmp.eq.f32.partialorder %v539, 8.507059e+37
      %v541 = vand.u32 %v529, 2147483648
      %v542 = vor.u32 1.1754944e-38, %v541
      %v543 = vsel %vm540, %v542, %v538
      %v544 = vmul.f32 1.0, %v543
      %v545 = vmul.f32 %v517, %v544
      %546 = vst [vmem:[%s224] sm:$0xf] %v545
      %v547 = vld [vmem:[%s219 + $0x4] sm:$0xf]
      %548 = vst [vmem:[#allocation2] sm:$0xf] %v547
      %v549 = vld [vmem:[%s219 + $0x4] sm:$0xff]
      %551 = vst [vmem:[#allocation1] ss:$2 sm:$0xff] %v549
      %v552 = vld.sshfl [vmem:[#allocation1] sm:$0xff pattern:$0x75316420]
      %v553 = vld.sshfl [vmem:[#allocation1 + $0x8] sm:$0xff pattern:$0x75316420]
      %554 = vrot.lane.b32.xlu0 %v552, 126
      %v555 = vpop.permute.xlu0 %554
      %556 = vrot.lane.b32.xlu0 %v553, 126
      %v557 = vpop.permute.xlu0 %556
      %v558 = vsel %vm236, %v555, %v557
      %560 = vst [vmem:[#allocation2 + $0x4] sm:$0xf] %v558
      %v561 = vld [vmem:[%s219 + $0x4] sm:$0xff]
      %563 = vst [vmem:[#allocation1] ss:$2 sm:$0xff] %v561
      %v564 = vld.sshfl [vmem:[#allocation1] sm:$0xff pattern:$0x75316420]
      %v565 = vld.sshfl [vmem:[#allocation1 + $0x8] sm:$0xff pattern:$0x75316420]
      %566 = vrot.lane.b32.xlu0 %v564, 124
      %v567 = vpop.permute.xlu0 %566
      %568 = vrot.lane.b32.xlu0 %v565, 124
      %v569 = vpop.permute.xlu0 %568
      %v570 = vsel %vm249, %v567, %v569
      %572 = vst [vmem:[#allocation2 + $0x8] sm:$0xf] %v570
      %v573 = vld [vmem:[#allocation2] sm:$0xff]
      %v574 = vld [vmem:[#allocation2 + $0x8] sm:$0xf]
      %v575 = vld [vmem:[%s1] sm:$0xf]
      %v577 = vsel %vm256, %v575, 0
      %v580 = vsel %vm260, %v574, 0
      %582 = vmatpush.msra.mxu0 0.0
      %583 = vmatpush.msra.mxu0 0.0
      %584 = vmatpush.msra.mxu0 0.0
      %585 = vmatpush.msra.mxu0 0.0
      %586 = vmatpush.msra.mxu0 0.0
      %587 = vmatpush.msra.mxu0 0.0
      %588 = vmatpush.msra.mxu0 0.0
      %589 = vmatpush.msra.mxu0 0.0
      %590 = vmatpush.msra.mxu0 0.0
      %591 = vmatpush.msra.mxu0 0.0
      %592 = vmatpush.msra.mxu0 0.0
      %593 = vmatpush.msra.mxu0 0.0
      %594 = vmatpush.msra.mxu0 0.0
      %595 = vmatpush.msra.mxu0 0.0
      %596 = vmatpush.msra.mxu0 %v580
      %597 = vmatpush.msra.mxu0 %v573
      %598 = vmatmul.f32.gmra.mxu0 %v577
      %v599 = vpop.f32.mrf.mxu0
      %v600 = vadd.f32 0.0, %v599
      %601 = vdwg.mxu0
      %602 = vst [vmem:[#allocation3] sm:$0xf] %v600
      %v603 = vld [vmem:[%s2] sm:$0xf]
      %v605 = vsel %vm256, %v603, 0
      %607 = vmatpush.msra.mxu0 0.0
      %608 = vmatpush.msra.mxu0 0.0
      %609 = vmatpush.msra.mxu0 0.0
      %610 = vmatpush.msra.mxu0 0.0
      %611 = vmatpush.msra.mxu0 0.0
      %612 = vmatpush.msra.mxu0 0.0
      %613 = vmatpush.msra.mxu0 0.0
      %614 = vmatpush.msra.mxu0 0.0
      %615 = vmatpush.msra.mxu0 0.0
      %616 = vmatpush.msra.mxu0 0.0
      %617 = vmatpush.msra.mxu0 0.0
      %618 = vmatpush.msra.mxu0 0.0
      %619 = vmatpush.msra.mxu0 0.0
      %620 = vmatpush.msra.mxu0 0.0
      %621 = vmatpush.msra.mxu0 %v580
      %622 = vmatpush.msra.mxu0 %v573
      %623 = vmatmul.f32.gmra.mxu0 %v605
      %v624 = vpop.f32.mrf.mxu0
      %v625 = vadd.f32 0.0, %v624
      %626 = vdwg.mxu0
      %627 = vst [vmem:[#allocation4] sm:$0xf] %v625
      %v628 = vld [vmem:[%s219 + $0x4] sm:$0xff]
      %630 = vst [vmem:[#allocation1] ss:$2 sm:$0xff] %v628
      %v631 = vld.sshfl [vmem:[#allocation1] sm:$0xff pattern:$0x75316420]
      %v632 = vld.sshfl [vmem:[#allocation1 + $0x8] sm:$0xff pattern:$0x75316420]
      %633 = vrot.lane.b32.xlu0 %v631, 80
      %v634 = vpop.permute.xlu0 %633
      %635 = vrot.lane.b32.xlu0 %v632, 80
      %v636 = vpop.permute.xlu0 %635
      %v637 = vsel %vm319, %v634, %v636
      %639 = vst [vmem:[#allocation2] sm:$0xf] %v637
      %v640 = vld [vmem:[%s219 + $0x4] sm:$0xff]
      %642 = vst [vmem:[#allocation1] ss:$2 sm:$0xff] %v640
      %v643 = vld.sshfl [vmem:[#allocation1] sm:$0xff pattern:$0x75316420]
      %v644 = vld.sshfl [vmem:[#allocation1 + $0x8] sm:$0xff pattern:$0x75316420]
      %645 = vrot.lane.b32.xlu0 %v643, 78
      %v646 = vpop.permute.xlu0 %645
      %647 = vrot.lane.b32.xlu0 %v644, 78
      %v648 = vpop.permute.xlu0 %647
      %v649 = vsel %vm332, %v646, %v648
      %651 = vst [vmem:[#allocation2 + $0x4] sm:$0xf] %v649
      %v652 = vld [vmem:[%s219 + $0x4] sm:$0xff]
      %654 = vst [vmem:[#allocation1] ss:$2 sm:$0xff] %v652
      %v655 = vld.sshfl [vmem:[#allocation1] sm:$0xff pattern:$0x75316420]
      %v656 = vld.sshfl [vmem:[#allocation1 + $0x8] sm:$0xff pattern:$0x75316420]
      %657 = vrot.lane.b32.xlu0 %v655, 76
      %v658 = vpop.permute.xlu0 %657
      %659 = vrot.lane.b32.xlu0 %v656, 76
      %v660 = vpop.permute.xlu0 %659
      %v661 = vsel %vm345, %v658, %v660
      %663 = vst [vmem:[#allocation2 + $0x8] sm:$0xf] %v661
      %v664 = vld [vmem:[#allocation2] sm:$0xff]
      %v665 = vld [vmem:[#allocation2 + $0x8] sm:$0xf]
      %v666 = vld [vmem:[%s351] sm:$0xf]
      %v668 = vsel %vm256, %v666, 0
      %v671 = vsel %vm260, %v665, 0
      %673 = vmatpush.msra.mxu0 0.0
      %674 = vmatpush.msra.mxu0 0.0
      %675 = vmatpush.msra.mxu0 0.0
      %676 = vmatpush.msra.mxu0 0.0
      %677 = vmatpush.msra.mxu0 0.0
      %678 = vmatpush.msra.mxu0 0.0
      %679 = vmatpush.msra.mxu0 0.0
      %680 = vmatpush.msra.mxu0 0.0
      %681 = vmatpush.msra.mxu0 0.0
      %682 = vmatpush.msra.mxu0 0.0
      %683 = vmatpush.msra.mxu0 0.0
      %684 = vmatpush.msra.mxu0 0.0
      %685 = vmatpush.msra.mxu0 0.0
      %686 = vmatpush.msra.mxu0 0.0
      %687 = vmatpush.msra.mxu0 %v671
      %688 = vmatpush.msra.mxu0 %v664
      %689 = vmatmul.f32.gmra.mxu0 %v668
      %v690 = vpop.f32.mrf.mxu0
      %v691 = vadd.f32 0.0, %v690
      %692 = vdwg.mxu0
      %v693 = vld [vmem:[#allocation3] sm:$0xf]
      %v694 = vadd.f32 %v693, %v691
      %695 = vst [vmem:[#allocation3] sm:$0xf] %v694
      %v696 = vld [vmem:[%s382] sm:$0xf]
      %v698 = vsel %vm256, %v696, 0
      %700 = vmatpush.msra.mxu0 0.0
      %701 = vmatpush.msra.mxu0 0.0
      %702 = vmatpush.msra.mxu0 0.0
      %703 = vmatpush.msra.mxu0 0.0
      %704 = vmatpush.msra.mxu0 0.0
      %705 = vmatpush.msra.mxu0 0.0
      %706 = vmatpush.msra.mxu0 0.0
      %707 = vmatpush.msra.mxu0 0.0
      %708 = vmatpush.msra.mxu0 0.0
      %709 = vmatpush.msra.mxu0 0.0
      %710 = vmatpush.msra.mxu0 0.0
      %711 = vmatpush.msra.mxu0 0.0
      %712 = vmatpush.msra.mxu0 0.0
      %713 = vmatpush.msra.mxu0 0.0
      %714 = vmatpush.msra.mxu0 %v671
      %715 = vmatpush.msra.mxu0 %v664
      %716 = vmatmul.f32.gmra.mxu0 %v698
      %v717 = vpop.f32.mrf.mxu0
      %v718 = vadd.f32 0.0, %v717
      %719 = vdwg.mxu0
      %v720 = vld [vmem:[#allocation4] sm:$0xf]
      %v721 = vadd.f32 %v720, %v718
      %722 = vst [vmem:[#allocation4] sm:$0xf] %v721
      %v723 = vld [vmem:[%s219 + $0x4] sm:$0xff]
      %725 = vst [vmem:[#allocation1] ss:$2 sm:$0xff] %v723
      %v726 = vld.sshfl [vmem:[#allocation1] sm:$0xff pattern:$0x75316420]
      %v727 = vld.sshfl [vmem:[#allocation1 + $0x8] sm:$0xff pattern:$0x75316420]
      %728 = vrot.lane.b32.xlu0 %v726, 32
      %v729 = vpop.permute.xlu0 %728
      %730 = vrot.lane.b32.xlu0 %v727, 32
      %v731 = vpop.permute.xlu0 %730
      %v732 = vsel %vm419, %v729, %v731
      %734 = vst [vmem:[#allocation2] sm:$0xf] %v732
      %v735 = vld [vmem:[%s219 + $0x4] sm:$0xff]
      %737 = vst [vmem:[#allocation1] ss:$2 sm:$0xff] %v735
      %v738 = vld.sshfl [vmem:[#allocation1] sm:$0xff pattern:$0x75316420]
      %v739 = vld.sshfl [vmem:[#allocation1 + $0x8] sm:$0xff pattern:$0x75316420]
      %740 = vrot.lane.b32.xlu0 %v738, 30
      %v741 = vpop.permute.xlu0 %740
      %742 = vrot.lane.b32.xlu0 %v739, 30
      %v743 = vpop.permute.xlu0 %742
      %v744 = vsel %vm432, %v741, %v743
      %746 = vst [vmem:[#allocation2 + $0x4] sm:$0xf] %v744
      %v747 = vld [vmem:[%s219 + $0x4] sm:$0xff]
      %749 = vst [vmem:[#allocation1] ss:$2 sm:$0xff] %v747
      %v750 = vld.sshfl [vmem:[#allocation1] sm:$0xff pattern:$0x75316420]
      %v751 = vld.sshfl [vmem:[#allocation1 + $0x8] sm:$0xff pattern:$0x75316420]
      %752 = vrot.lane.b32.xlu0 %v750, 28
      %v753 = vpop.permute.xlu0 %752
      %754 = vrot.lane.b32.xlu0 %v751, 28
      %v755 = vpop.permute.xlu0 %754
      %v756 = vsel %vm445, %v753, %v755
      %758 = vst [vmem:[#allocation2 + $0x8] sm:$0xf] %v756
      %v759 = vld [vmem:[#allocation2] sm:$0xff]
      %v760 = vld [vmem:[#allocation2 + $0x8] sm:$0xf]
      %v761 = vld [vmem:[%s451] sm:$0xf]
      %v763 = vsel %vm256, %v761, 0
      %v766 = vsel %vm260, %v760, 0
      %768 = vmatpush.msra.mxu0 0.0
      %769 = vmatpush.msra.mxu0 0.0
      %770 = vmatpush.msra.mxu0 0.0
      %771 = vmatpush.msra.mxu0 0.0
      %772 = vmatpush.msra.mxu0 0.0
      %773 = vmatpush.msra.mxu0 0.0
      %774 = vmatpush.msra.mxu0 0.0
      %775 = vmatpush.msra.mxu0 0.0
      %776 = vmatpush.msra.mxu0 0.0
      %777 = vmatpush.msra.mxu0 0.0
      %778 = vmatpush.msra.mxu0 0.0
      %779 = vmatpush.msra.mxu0 0.0
      %780 = vmatpush.msra.mxu0 0.0
      %781 = vmatpush.msra.mxu0 0.0
      %782 = vmatpush.msra.mxu0 %v766
      %783 = vmatpush.msra.mxu0 %v759
      %784 = vmatmul.f32.gmra.mxu0 %v763
      %v785 = vpop.f32.mrf.mxu0
      %v786 = vadd.f32 0.0, %v785
      %787 = vdwg.mxu0
      %v788 = vld [vmem:[#allocation3] sm:$0xf]
      %v789 = vadd.f32 %v788, %v786
      %790 = vst [vmem:[#allocation3] sm:$0xf] %v789
      %v791 = vld [vmem:[%s482] sm:$0xf]
      %v793 = vsel %vm256, %v791, 0
      %795 = vmatpush.msra.mxu0 0.0
      %796 = vmatpush.msra.mxu0 0.0
      %797 = vmatpush.msra.mxu0 0.0
      %798 = vmatpush.msra.mxu0 0.0
      %799 = vmatpush.msra.mxu0 0.0
      %800 = vmatpush.msra.mxu0 0.0
      %801 = vmatpush.msra.mxu0 0.0
      %802 = vmatpush.msra.mxu0 0.0
      %803 = vmatpush.msra.mxu0 0.0
      %804 = vmatpush.msra.mxu0 0.0
      %805 = vmatpush.msra.mxu0 0.0
      %806 = vmatpush.msra.mxu0 0.0
      %807 = vmatpush.msra.mxu0 0.0
      %808 = vmatpush.msra.mxu0 0.0
      %809 = vmatpush.msra.mxu0 %v766
      %810 = vmatpush.msra.mxu0 %v759
      %811 = vmatmul.f32.gmra.mxu0 %v793
      %v812 = vpop.f32.mrf.mxu0
      %v813 = vadd.f32 0.0, %v812
      %814 = vdwg.mxu0
      %v815 = vld [vmem:[#allocation4] sm:$0xf]
      %v816 = vadd.f32 %v815, %v813
      %817 = vst [vmem:[#allocation4] sm:$0xf] %v816
      %v818 = vld [vmem:[#allocation3] sm:$0xf]
      %v819 = vld [vmem:[%s3] sm:$0xf]
      %821 = vset.pattern.permute.xlu0 0
      %822 = vperm.xlu0 %821, %v819
      %v823 = vpop.permute.xlu0 %822
      %v825 = vadd.f32 %v818, %v823
      %v826 = vld [vmem:[#allocation4] sm:$0xf]
      %v827 = vld [vmem:[%s4] sm:$0xf]
      %829 = vset.pattern.permute.xlu0 0
      %830 = vperm.xlu0 %829, %v827
      %v831 = vpop.permute.xlu0 %830
      %v833 = vadd.f32 %v826, %v831
      %v834 = vxor.u32 %v833, 2147483648
      %v835 = vmul.f32 %v834, 1.442695
      %v836 = vpow.pop %v835
      %v837 = vadd.f32 %v836, 1.0
      %v838 = vrcp.pop %v837
      %v839 = vmul.f32 %v837, %v838
      %v840 = vsub.f32 1.0, %v839
      %v841 = vmul.f32 %v838, %v840
      %v842 = vadd.f32 %v838, %v841
      %vm843 = vweird.f32 %v837
      %vm844 = vweird.f32 %v838
      %vm845 = vmor %vm843, %vm844
      %v846 = vsel %vm845, %v838, %v842
      %v847 = vand.u32 2147483647, %v837
      %vm848 = vcmp.eq.f32.partialorder %v847, 8.507059e+37
      %v849 = vand.u32 %v837, 2147483648
      %v850 = vor.u32 1.1754944e-38, %v849
      %v851 = vsel %vm848, %v850, %v846
      %v852 = vmul.f32 1.0, %v851
      %v853 = vmul.f32 %v825, %v852
      %854 = vst [vmem:[%s224 + $0x4] sm:$0xf] %v853
      %v855 = vld [vmem:[%s219 + $0x8] sm:$0xf]
      %856 = vst [vmem:[#allocation2] sm:$0xf] %v855
      %v857 = vld [vmem:[%s219 + $0x8] sm:$0xff]
      %859 = vst [vmem:[#allocation1] ss:$2 sm:$0xff] %v857
      %v860 = vld.sshfl [vmem:[#allocation1] sm:$0xff pattern:$0x75316420]
      %v861 = vld.sshfl [vmem:[#allocation1 + $0x8] sm:$0xff pattern:$0x75316420]
      %862 = vrot.lane.b32.xlu0 %v860, 126
      %v863 = vpop.permute.xlu0 %862
      %864 = vrot.lane.b32.xlu0 %v861, 126
      %v865 = vpop.permute.xlu0 %864
      %v866 = vsel %vm236, %v863, %v865
      %868 = vst [vmem:[#allocation2 + $0x4] sm:$0xf] %v866
      %v869 = vld [vmem:[%s219 + $0x8] sm:$0xff]
      %871 = vst [vmem:[#allocation1] ss:$2 sm:$0xff] %v869
      %v872 = vld.sshfl [vmem:[#allocation1] sm:$0xff pattern:$0x75316420]
      %v873 = vld.sshfl [vmem:[#allocation1 + $0x8] sm:$0xff pattern:$0x75316420]
      %874 = vrot.lane.b32.xlu0 %v872, 124
      %v875 = vpop.permute.xlu0 %874
      %876 = vrot.lane.b32.xlu0 %v873, 124
      %v877 = vpop.permute.xlu0 %876
      %v878 = vsel %vm249, %v875, %v877
      %880 = vst [vmem:[#allocation2 + $0x8] sm:$0xf] %v878
      %v881 = vld [vmem:[#allocation2] sm:$0xff]
      %v882 = vld [vmem:[#allocation2 + $0x8] sm:$0xf]
      %v883 = vld [vmem:[%s1] sm:$0xf]
      %v885 = vsel %vm256, %v883, 0
      %v888 = vsel %vm260, %v882, 0
      %890 = vmatpush.msra.mxu0 0.0
      %891 = vmatpush.msra.mxu0 0.0
      %892 = vmatpush.msra.mxu0 0.0
      %893 = vmatpush.msra.mxu0 0.0
      %894 = vmatpush.msra.mxu0 0.0
      %895 = vmatpush.msra.mxu0 0.0
      %896 = vmatpush.msra.mxu0 0.0
      %897 = vmatpush.msra.mxu0 0.0
      %898 = vmatpush.msra.mxu0 0.0
      %899 = vmatpush.msra.mxu0 0.0
      %900 = vmatpush.msra.mxu0 0.0
      %901 = vmatpush.msra.mxu0 0.0
      %902 = vmatpush.msra.mxu0 0.0
      %903 = vmatpush.msra.mxu0 0.0
      %904 = vmatpush.msra.mxu0 %v888
      %905 = vmatpush.msra.mxu0 %v881
      %906 = vmatmul.f32.gmra.mxu0 %v885
      %v907 = vpop.f32.mrf.mxu0
      %v908 = vadd.f32 0.0, %v907
      %909 = vdwg.mxu0
      %910 = vst [vmem:[#allocation3] sm:$0xf] %v908
      %v911 = vld [vmem:[%s2] sm:$0xf]
      %v913 = vsel %vm256, %v911, 0
      %915 = vmatpush.msra.mxu0 0.0
      %916 = vmatpush.msra.mxu0 0.0
      %917 = vmatpush.msra.mxu0 0.0
      %918 = vmatpush.msra.mxu0 0.0
      %919 = vmatpush.msra.mxu0 0.0
      %920 = vmatpush.msra.mxu0 0.0
      %921 = vmatpush.msra.mxu0 0.0
      %922 = vmatpush.msra.mxu0 0.0
      %923 = vmatpush.msra.mxu0 0.0
      %924 = vmatpush.msra.mxu0 0.0
      %925 = vmatpush.msra.mxu0 0.0
      %926 = vmatpush.msra.mxu0 0.0
      %927 = vmatpush.msra.mxu0 0.0
      %928 = vmatpush.msra.mxu0 0.0
      %929 = vmatpush.msra.mxu0 %v888
      %930 = vmatpush.msra.mxu0 %v881
      %931 = vmatmul.f32.gmra.mxu0 %v913
      %v932 = vpop.f32.mrf.mxu0
      %v933 = vadd.f32 0.0, %v932
      %934 = vdwg.mxu0
      %935 = vst [vmem:[#allocation4] sm:$0xf] %v933
      %v936 = vld [vmem:[%s219 + $0x8] sm:$0xff]
      %938 = vst [vmem:[#allocation1] ss:$2 sm:$0xff] %v936
      %v939 = vld.sshfl [vmem:[#allocation1] sm:$0xff pattern:$0x75316420]
      %v940 = vld.sshfl [vmem:[#allocation1 + $0x8] sm:$0xff pattern:$0x75316420]
      %941 = vrot.lane.b32.xlu0 %v939, 80
      %v942 = vpop.permute.xlu0 %941
      %943 = vrot.lane.b32.xlu0 %v940, 80
      %v944 = vpop.permute.xlu0 %943
      %v945 = vsel %vm319, %v942, %v944
      %947 = vst [vmem:[#allocation2] sm:$0xf] %v945
      %v948 = vld [vmem:[%s219 + $0x8] sm:$0xff]
      %950 = vst [vmem:[#allocation1] ss:$2 sm:$0xff] %v948
      %v951 = vld.sshfl [vmem:[#allocation1] sm:$0xff pattern:$0x75316420]
      %v952 = vld.sshfl [vmem:[#allocation1 + $0x8] sm:$0xff pattern:$0x75316420]
      %953 = vrot.lane.b32.xlu0 %v951, 78
      %v954 = vpop.permute.xlu0 %953
      %955 = vrot.lane.b32.xlu0 %v952, 78
      %v956 = vpop.permute.xlu0 %955
      %v957 = vsel %vm332, %v954, %v956
      %959 = vst [vmem:[#allocation2 + $0x4] sm:$0xf] %v957
      %v960 = vld [vmem:[%s219 + $0x8] sm:$0xff]
      %962 = vst [vmem:[#allocation1] ss:$2 sm:$0xff] %v960
      %v963 = vld.sshfl [vmem:[#allocation1] sm:$0xff pattern:$0x75316420]
      %v964 = vld.sshfl [vmem:[#allocation1 + $0x8] sm:$0xff pattern:$0x75316420]
      %965 = vrot.lane.b32.xlu0 %v963, 76
      %v966 = vpop.permute.xlu0 %965
      %967 = vrot.lane.b32.xlu0 %v964, 76
      %v968 = vpop.permute.xlu0 %967
      %v969 = vsel %vm345, %v966, %v968
      %971 = vst [vmem:[#allocation2 + $0x8] sm:$0xf] %v969
      %v972 = vld [vmem:[#allocation2] sm:$0xff]
      %v973 = vld [vmem:[#allocation2 + $0x8] sm:$0xf]
      %v974 = vld [vmem:[%s351] sm:$0xf]
      %v976 = vsel %vm256, %v974, 0
      %v979 = vsel %vm260, %v973, 0
      %981 = vmatpush.msra.mxu0 0.0
      %982 = vmatpush.msra.mxu0 0.0
      %983 = vmatpush.msra.mxu0 0.0
      %984 = vmatpush.msra.mxu0 0.0
      %985 = vmatpush.msra.mxu0 0.0
      %986 = vmatpush.msra.mxu0 0.0
      %987 = vmatpush.msra.mxu0 0.0
      %988 = vmatpush.msra.mxu0 0.0
      %989 = vmatpush.msra.mxu0 0.0
      %990 = vmatpush.msra.mxu0 0.0
      %991 = vmatpush.msra.mxu0 0.0
      %992 = vmatpush.msra.mxu0 0.0
      %993 = vmatpush.msra.mxu0 0.0
      %994 = vmatpush.msra.mxu0 0.0
      %995 = vmatpush.msra.mxu0 %v979
      %996 = vmatpush.msra.mxu0 %v972
      %997 = vmatmul.f32.gmra.mxu0 %v976
      %v998 = vpop.f32.mrf.mxu0
      %v999 = vadd.f32 0.0, %v998
      %1000 = vdwg.mxu0
      %v1001 = vld [vmem:[#allocation3] sm:$0xf]
      %v1002 = vadd.f32 %v1001, %v999
      %1003 = vst [vmem:[#allocation3] sm:$0xf] %v1002
      %v1004 = vld [vmem:[%s382] sm:$0xf]
      %v1006 = vsel %vm256, %v1004, 0
      %1008 = vmatpush.msra.mxu0 0.0
      %1009 = vmatpush.msra.mxu0 0.0
      %1010 = vmatpush.msra.mxu0 0.0
      %1011 = vmatpush.msra.mxu0 0.0
      %1012 = vmatpush.msra.mxu0 0.0
      %1013 = vmatpush.msra.mxu0 0.0
      %1014 = vmatpush.msra.mxu0 0.0
      %1015 = vmatpush.msra.mxu0 0.0
      %1016 = vmatpush.msra.mxu0 0.0
      %1017 = vmatpush.msra.mxu0 0.0
      %1018 = vmatpush.msra.mxu0 0.0
      %1019 = vmatpush.msra.mxu0 0.0
      %1020 = vmatpush.msra.mxu0 0.0
      %1021 = vmatpush.msra.mxu0 0.0
      %1022 = vmatpush.msra.mxu0 %v979
      %1023 = vmatpush.msra.mxu0 %v972
      %1024 = vmatmul.f32.gmra.mxu0 %v1006
      %v1025 = vpop.f32.mrf.mxu0
      %v1026 = vadd.f32 0.0, %v1025
      %1027 = vdwg.mxu0
      %v1028 = vld [vmem:[#allocation4] sm:$0xf]
      %v1029 = vadd.f32 %v1028, %v1026
      %1030 = vst [vmem:[#allocation4] sm:$0xf] %v1029
      %v1031 = vld [vmem:[%s219 + $0x8] sm:$0xff]
      %1033 = vst [vmem:[#allocation1] ss:$2 sm:$0xff] %v1031
      %v1034 = vld.sshfl [vmem:[#allocation1] sm:$0xff pattern:$0x75316420]
      %v1035 = vld.sshfl [vmem:[#allocation1 + $0x8] sm:$0xff pattern:$0x75316420]
      %1036 = vrot.lane.b32.xlu0 %v1034, 32
      %v1037 = vpop.permute.xlu0 %1036
      %1038 = vrot.lane.b32.xlu0 %v1035, 32
      %v1039 = vpop.permute.xlu0 %1038
      %v1040 = vsel %vm419, %v1037, %v1039
      %1042 = vst [vmem:[#allocation2] sm:$0xf] %v1040
      %v1043 = vld [vmem:[%s219 + $0x8] sm:$0xff]
      %1045 = vst [vmem:[#allocation1] ss:$2 sm:$0xff] %v1043
      %v1046 = vld.sshfl [vmem:[#allocation1] sm:$0xff pattern:$0x75316420]
      %v1047 = vld.sshfl [vmem:[#allocation1 + $0x8] sm:$0xff pattern:$0x75316420]
      %1048 = vrot.lane.b32.xlu0 %v1046, 30
      %v1049 = vpop.permute.xlu0 %1048
      %1050 = vrot.lane.b32.xlu0 %v1047, 30
      %v1051 = vpop.permute.xlu0 %1050
      %v1052 = vsel %vm432, %v1049, %v1051
      %1054 = vst [vmem:[#allocation2 + $0x4] sm:$0xf] %v1052
      %v1055 = vld [vmem:[%s219 + $0x8] sm:$0xff]
      %1057 = vst [vmem:[#allocation1] ss:$2 sm:$0xff] %v1055
      %v1058 = vld.sshfl [vmem:[#allocation1] sm:$0xff pattern:$0x75316420]
      %v1059 = vld.sshfl [vmem:[#allocation1 + $0x8] sm:$0xff pattern:$0x75316420]
      %1060 = vrot.lane.b32.xlu0 %v1058, 28
      %v1061 = vpop.permute.xlu0 %1060
      %1062 = vrot.lane.b32.xlu0 %v1059, 28
      %v1063 = vpop.permute.xlu0 %1062
      %v1064 = vsel %vm445, %v1061, %v1063
      %1066 = vst [vmem:[#allocation2 + $0x8] sm:$0xf] %v1064
      %v1067 = vld [vmem:[#allocation2] sm:$0xff]
      %v1068 = vld [vmem:[#allocation2 + $0x8] sm:$0xf]
      %v1069 = vld [vmem:[%s451] sm:$0xf]
      %v1071 = vsel %vm256, %v1069, 0
      %v1074 = vsel %vm260, %v1068, 0
      %1076 = vmatpush.msra.mxu0 0.0
      %1077 = vmatpush.msra.mxu0 0.0
      %1078 = vmatpush.msra.mxu0 0.0
      %1079 = vmatpush.msra.mxu0 0.0
      %1080 = vmatpush.msra.mxu0 0.0
      %1081 = vmatpush.msra.mxu0 0.0
      %1082 = vmatpush.msra.mxu0 0.0
      %1083 = vmatpush.msra.mxu0 0.0
      %1084 = vmatpush.msra.mxu0 0.0
      %1085 = vmatpush.msra.mxu0 0.0
      %1086 = vmatpush.msra.mxu0 0.0
      %1087 = vmatpush.msra.mxu0 0.0
      %1088 = vmatpush.msra.mxu0 0.0
      %1089 = vmatpush.msra.mxu0 0.0
      %1090 = vmatpush.msra.mxu0 %v1074
      %1091 = vmatpush.msra.mxu0 %v1067
      %1092 = vmatmul.f32.gmra.mxu0 %v1071
      %v1093 = vpop.f32.mrf.mxu0
      %v1094 = vadd.f32 0.0, %v1093
      %1095 = vdwg.mxu0
      %v1096 = vld [vmem:[#allocation3] sm:$0xf]
      %v1097 = vadd.f32 %v1096, %v1094
      %1098 = vst [vmem:[#allocation3] sm:$0xf] %v1097
      %v1099 = vld [vmem:[%s482] sm:$0xf]
      %v1101 = vsel %vm256, %v1099, 0
      %1103 = vmatpush.msra.mxu0 0.0
      %1104 = vmatpush.msra.mxu0 0.0
      %1105 = vmatpush.msra.mxu0 0.0
      %1106 = vmatpush.msra.mxu0 0.0
      %1107 = vmatpush.msra.mxu0 0.0
      %1108 = vmatpush.msra.mxu0 0.0
      %1109 = vmatpush.msra.mxu0 0.0
      %1110 = vmatpush.msra.mxu0 0.0
      %1111 = vmatpush.msra.mxu0 0.0
      %1112 = vmatpush.msra.mxu0 0.0
      %1113 = vmatpush.msra.mxu0 0.0
      %1114 = vmatpush.msra.mxu0 0.0
      %1115 = vmatpush.msra.mxu0 0.0
      %1116 = vmatpush.msra.mxu0 0.0
      %1117 = vmatpush.msra.mxu0 %v1074
      %1118 = vmatpush.msra.mxu0 %v1067
      %1119 = vmatmul.f32.gmra.mxu0 %v1101
      %v1120 = vpop.f32.mrf.mxu0
      %v1121 = vadd.f32 0.0, %v1120
      %1122 = vdwg.mxu0
      %v1123 = vld [vmem:[#allocation4] sm:$0xf]
      %v1124 = vadd.f32 %v1123, %v1121
      %1125 = vst [vmem:[#allocation4] sm:$0xf] %v1124
      %v1126 = vld [vmem:[#allocation3] sm:$0xf]
      %v1127 = vld [vmem:[%s3] sm:$0xf]
      %1129 = vset.pattern.permute.xlu0 0
      %1130 = vperm.xlu0 %1129, %v1127
      %v1131 = vpop.permute.xlu0 %1130
      %v1133 = vadd.f32 %v1126, %v1131
      %v1134 = vld [vmem:[#allocation4] sm:$0xf]
      %v1135 = vld [vmem:[%s4] sm:$0xf]
      %1137 = vset.pattern.permute.xlu0 0
      %1138 = vperm.xlu0 %1137, %v1135
      %v1139 = vpop.permute.xlu0 %1138
      %v1141 = vadd.f32 %v1134, %v1139
      %v1142 = vxor.u32 %v1141, 2147483648
      %v1143 = vmul.f32 %v1142, 1.442695
      %v1144 = vpow.pop %v1143
      %v1145 = vadd.f32 %v1144, 1.0
      %v1146 = vrcp.pop %v1145
      %v1147 = vmul.f32 %v1145, %v1146
      %v1148 = vsub.f32 1.0, %v1147
      %v1149 = vmul.f32 %v1146, %v1148
      %v1150 = vadd.f32 %v1146, %v1149
      %vm1151 = vweird.f32 %v1145
      %vm1152 = vweird.f32 %v1146
      %vm1153 = vmor %vm1151, %vm1152
      %v1154 = vsel %vm1153, %v1146, %v1150
      %v1155 = vand.u32 2147483647, %v1145
      %vm1156 = vcmp.eq.f32.partialorder %v1155, 8.507059e+37
      %v1157 = vand.u32 %v1145, 2147483648
      %v1158 = vor.u32 1.1754944e-38, %v1157
      %v1159 = vsel %vm1156, %v1158, %v1154
      %v1160 = vmul.f32 1.0, %v1159
      %v1161 = vmul.f32 %v1133, %v1160
      %1162 = vst [vmem:[%s224 + $0x8] sm:$0xf] %v1161
      %p1163 = scmp.lt.s32.totalorder %s16, 1
      %s1164 = scalar_select %p1163, %s16, 1
      %s1165 = smul.addr %s1164, 3
      %s1166 = smul.addr %s1165, 4
      %s1167 = scalar_lea.vmem %s5, %s1166
      // Predicated region
      $region41: #{covd_forward.2} parent=39 // pred_check
        %p1168 = pneg %p144
      $region42: #{covd_forward.2} parent=39 // pred_check_branch
        %1170 = sbr.rel (%p1168) target = $region44
      $region43: #{covd_forward.2} parent=39 // pred_region
        _
      $region44: #{covd_forward.2} parent=39 // pred_fallthru
        _
    $region40: #{covd_forward.2} parent=5 // pred_fallthru
      _
    %p1171 = scmp.le.s32.totalorder 2, %s11
    // Predicated region
    $region45: #{covd_forward.2} parent=5 // pred_check
      %p1172 = pneg %p1171
    $region46: #{covd_forward.2} parent=5 // pred_check_branch
      %1174 = sbr.rel (%p1172) target = $region48
    $region47: #{covd_forward.2} parent=5 // pred_region
      %s1175 = ssub.s32 %s11, 2
      // Predicated region
      $region49: #{covd_forward.2} parent=47 // pred_check
        %p1176 = pneg %p150
      $region50: #{covd_forward.2} parent=47 // pred_check_branch
        %1178 = sbr.rel (%p1176) target = $region52
      $region51: #{covd_forward.2} parent=47 // pred_region
        %p1179 = scmp.lt.s32.totalorder %s17, 1
        %s1180 = scalar_select %p1179, %s17, 1
        %s1181 = smul.addr %s1180, 3
        %s1182 = smul.addr %s1181, 4
        %s1183 = scalar_lea.vmem %s5, %s1182
      $region52: #{covd_forward.2} parent=47 // pred_fallthru
        _
    $region48: #{covd_forward.2} parent=5 // pred_fallthru
      _
  $region6: #{covd_forward.2} parent=0 // loop_footer
    %s15 = sadd.s32 1, %s11
  $region7: #{covd_forward.2} parent=0 // loop_footer_branch
    %10 = sbr.rel target = $region3
  $region8: #{covd_forward.2} parent=0 // loop_exit
    _

// kernel: covd_forward.3
$region0: #{covd_forward.3}
  #allocation0 [shape = 'u32[]', space=smem, size = 0x4, offset = 0x4, fixed_abs, tag = 'smem constant byte address 0x4 - core index']
  #allocation1 [shape = 'u32[72,128]{1,0:T(1,128)}', space=vmem, size = 0x9000, scoped, tag = 'internal scratch']
  #allocation2 [shape = 'f32[20,128]{1,0:T(8,128)}', space=vmem, size = 0x3000, scoped, tag = 'scratch operand']
  #allocation3 [shape = 'f32[4,128]{1,0:T(4,128)}', space=vmem, size = 0x800, scoped, tag = 'scratch operand']
  #allocation4 [shape = 'f32[4,128]{1,0:T(4,128)}', space=vmem, size = 0x800, scoped, tag = 'scratch operand']
  %s0 = inlined_call_operand.vmem [shape: f32[2,4,600], index: 0, kind: input, shape index: {}]
  %s1 = inlined_call_operand.vmem [shape: f32[5,4,20], index: 1, kind: input, shape index: {}]
  %s2 = inlined_call_operand.vmem [shape: f32[5,4,20], index: 2, kind: input, shape index: {}]
  %s3 = inlined_call_operand.vmem [shape: f32[4,1], index: 3, kind: input, shape index: {}]
  %s4 = inlined_call_operand.vmem [shape: f32[4,1], index: 4, kind: input, shape index: {}]
  %s5 = inlined_call_operand.vmem [shape: f32[2,4,384], index: 5, kind: output, shape index: {}]
  %s6 = sld [smem:[#allocation0]]
  $region53: #{covd_forward.3} parent=0
    _
  %s8 = ssub.s32 1, %s6
  %s9 = scalar_select 0, %s8, %s6
  loop: start=0, step=1, limit=4
  $region2: #{covd_forward.3} parent=0 // loop_pre_header
    _
  $region3: #{covd_forward.3} parent=0 // loop_header
    %s11 = sphi 0, %s15
    %p12 = scmp.ge.s32.totalorder %s11, 4
    %s21 = sphi 0, %s23
    %s24 = sphi 0, %s21
    %s25 = sphi 0, %s24
    %s41 = sphi 0, %s25
    %s45 = sphi 0, %s45
    %s47 = sphi 0, %s45
    %s48 = sphi 0, %s47
    %s62 = sphi 0, %s48
    %s66 = sphi 0, %s66
    %s68 = sphi 0, %s66
    %s69 = sphi 0, %s68
    %s83 = sphi 0, %s69
    %s87 = sphi 0, %s87
    %s89 = sphi 0, %s87
    %s90 = sphi 0, %s89
    %s104 = sphi 0, %s90
    %s108 = sphi 0, %s108
    %s110 = sphi 0, %s108
    %s111 = sphi 0, %s110
    %s125 = sphi 0, %s111
    %s131 = sphi 0, %s133
    %s134 = sphi 0, %s131
    %s135 = sphi 0, %s134
    %s151 = sphi 0, %s135
  $region4: #{covd_forward.3} parent=0 // loop_header_branch
    %14 = sbr.rel (%p12) target = $region8
  $region5: #{covd_forward.3} parent=0 // loop_body
    %s16 = ssub.s32 %s11, 1
    %s17 = ssub.s32 %s11, 2
    %s18 = sadd.s32 %s11, 1
    %s19 = ssub.s32 %s11, %s18
    %p20 = scmp.eq.s32.totalorder %s19, 0
    %s22 = sadd.s32 %s21, 1
    %s23 = scalar_select %p20, %s21, %s22
    %p26 = pneg %p20
    %p27 = scmp.eq.s32.totalorder %s11, 1
    %p28 = por %p26, %p27
    %p29 = scmp.ne.s32.totalorder %s21, %s24
    %p30 = scmp.eq.s32.totalorder %s11, 0
    %p31 = por %p29, %p30
    %p32 = scmp.ne.s32.totalorder %s21, %s24
    %p33 = scmp.eq.s32.totalorder %s16, 1
    %p34 = por %p32, %p33
    %p35 = scmp.ne.s32.totalorder %s24, %s25
    %p36 = scmp.eq.s32.totalorder %s16, 0
    %p37 = por %p35, %p36
    %p38 = scmp.ne.s32.totalorder %s24, %s25
    %p39 = scmp.eq.s32.totalorder %s17, 1
    %p40 = por %p38, %p39
    %p42 = scmp.ne.s32.totalorder %s25, %s41
    %p43 = scmp.eq.s32.totalorder %s17, 0
    %p44 = por %p42, %p43
    %s46 = sadd.s32 %s45, 1
    %p49 = scmp.eq.s32.totalorder %s11, 1
    %p50 = scmp.ne.s32.totalorder %s45, %s47
    %p51 = scmp.eq.s32.totalorder %s11, 0
    %p52 = por %p50, %p51
    %p53 = scmp.ne.s32.totalorder %s45, %s47
    %p54 = scmp.eq.s32.totalorder %s16, 1
    %p55 = por %p53, %p54
    %p56 = scmp.ne.s32.totalorder %s47, %s48
    %p57 = scmp.eq.s32.totalorder %s16, 0
    %p58 = por %p56, %p57
    %p59 = scmp.ne.s32.totalorder %s47, %s48
    %p60 = scmp.eq.s32.totalorder %s17, 1
    %p61 = por %p59, %p60
    %p63 = scmp.ne.s32.totalorder %s48, %s62
    %p64 = scmp.eq.s32.totalorder %s17, 0
    %p65 = por %p63, %p64
    %s67 = sadd.s32 %s66, 1
    %p70 = scmp.eq.s32.totalorder %s11, 1
    %p71 = scmp.ne.s32.totalorder %s66, %s68
    %p72 = scmp.eq.s32.totalorder %s11, 0
    %p73 = por %p71, %p72
    %p74 = scmp.ne.s32.totalorder %s66, %s68
    %p75 = scmp.eq.s32.totalorder %s16, 1
    %p76 = por %p74, %p75
    %p77 = scmp.ne.s32.totalorder %s68, %s69
    %p78 = scmp.eq.s32.totalorder %s16, 0
    %p79 = por %p77, %p78
    %p80 = scmp.ne.s32.totalorder %s68, %s69
    %p81 = scmp.eq.s32.totalorder %s17, 1
    %p82 = por %p80, %p81
    %p84 = scmp.ne.s32.totalorder %s69, %s83
    %p85 = scmp.eq.s32.totalorder %s17, 0
    %p86 = por %p84, %p85
    %s88 = sadd.s32 %s87, 1
    %p91 = scmp.eq.s32.totalorder %s11, 1
    %p92 = scmp.ne.s32.totalorder %s87, %s89
    %p93 = scmp.eq.s32.totalorder %s11, 0
    %p94 = por %p92, %p93
    %p95 = scmp.ne.s32.totalorder %s87, %s89
    %p96 = scmp.eq.s32.totalorder %s16, 1
    %p97 = por %p95, %p96
    %p98 = scmp.ne.s32.totalorder %s89, %s90
    %p99 = scmp.eq.s32.totalorder %s16, 0
    %p100 = por %p98, %p99
    %p101 = scmp.ne.s32.totalorder %s89, %s90
    %p102 = scmp.eq.s32.totalorder %s17, 1
    %p103 = por %p101, %p102
    %p105 = scmp.ne.s32.totalorder %s90, %s104
    %p106 = scmp.eq.s32.totalorder %s17, 0
    %p107 = por %p105, %p106
    %s109 = sadd.s32 %s108, 1
    %p112 = scmp.eq.s32.totalorder %s11, 1
    %p113 = scmp.ne.s32.totalorder %s108, %s110
    %p114 = scmp.eq.s32.totalorder %s11, 0
    %p115 = por %p113, %p114
    %p116 = scmp.ne.s32.totalorder %s108, %s110
    %p117 = scmp.eq.s32.totalorder %s16, 1
    %p118 = por %p116, %p117
    %p119 = scmp.ne.s32.totalorder %s110, %s111
    %p120 = scmp.eq.s32.totalorder %s16, 0
    %p121 = por %p119, %p120
    %p122 = scmp.ne.s32.totalorder %s110, %s111
    %p123 = scmp.eq.s32.totalorder %s17, 1
    %p124 = por %p122, %p123
    %p126 = scmp.ne.s32.totalorder %s111, %s125
    %p127 = scmp.eq.s32.totalorder %s17, 0
    %p128 = por %p126, %p127
    %s129 = ssub.s32 %s11, %s18
    %p130 = scmp.eq.s32.totalorder %s129, 0
    %s132 = sadd.s32 %s131, 1
    %s133 = scalar_select %p130, %s131, %s132
    %p136 = pneg %p130
    %p137 = scmp.eq.s32.totalorder %s11, 1
    %p138 = por %p136, %p137
    %p139 = scmp.ne.s32.totalorder %s131, %s134
    %p140 = scmp.eq.s32.totalorder %s11, 0
    %p141 = por %p139, %p140
    %p142 = scmp.ne.s32.totalorder %s131, %s134
    %p143 = scmp.eq.s32.totalorder %s16, 1
    %p144 = por %p142, %p143
    %p145 = scmp.ne.s32.totalorder %s134, %s135
    %p146 = scmp.eq.s32.totalorder %s16, 0
    %p147 = por %p145, %p146
    %p148 = scmp.ne.s32.totalorder %s134, %s135
    %p149 = scmp.eq.s32.totalorder %s17, 1
    %p150 = por %p148, %p149
    %p152 = scmp.ne.s32.totalorder %s135, %s151
    %p153 = scmp.eq.s32.totalorder %s17, 0
    %p154 = por %p152, %p153
    %p155 = scmp.le.s32.totalorder 1, %s11
    %p156 = scmp.lt.s32.totalorder %s11, 3
    %p157 = pnand %p155, %p156
    %p158 = pneg %p157
    // Predicated region
    $region9: #{covd_forward.3} parent=5 // pred_check
      _
    $region10: #{covd_forward.3} parent=5 // pred_check_branch
      %160 = sbr.rel (%p157) target = $region12
    $region11: #{covd_forward.3} parent=5 // pred_region
      %s161 = ssub.s32 %s11, 1
      // Predicated region
      $region13: #{covd_forward.3} parent=11 // pred_check
        %p162 = pneg %p58
      $region14: #{covd_forward.3} parent=11 // pred_check_branch
        %164 = sbr.rel (%p162) target = $region16
      $region15: #{covd_forward.3} parent=11 // pred_region
        _
      $region16: #{covd_forward.3} parent=11 // pred_fallthru
        _
      // Predicated region
      $region17: #{covd_forward.3} parent=11 // pred_check
        %p165 = pneg %p79
      $region18: #{covd_forward.3} parent=11 // pred_check_branch
        %167 = sbr.rel (%p165) target = $region20
      $region19: #{covd_forward.3} parent=11 // pred_region
        _
      $region20: #{covd_forward.3} parent=11 // pred_fallthru
        _
      // Predicated region
      $region21: #{covd_forward.3} parent=11 // pred_check
        %p168 = pneg %p100
      $region22: #{covd_forward.3} parent=11 // pred_check_branch
        %170 = sbr.rel (%p168) target = $region24
      $region23: #{covd_forward.3} parent=11 // pred_region
        _
      $region24: #{covd_forward.3} parent=11 // pred_fallthru
        _
      // Predicated region
      $region25: #{covd_forward.3} parent=11 // pred_check
        %p171 = pneg %p121
      $region26: #{covd_forward.3} parent=11 // pred_check_branch
        %173 = sbr.rel (%p171) target = $region28
      $region27: #{covd_forward.3} parent=11 // pred_region
        _
      $region28: #{covd_forward.3} parent=11 // pred_fallthru
        _
    $region12: #{covd_forward.3} parent=5 // pred_fallthru
      _
    %p174 = scmp.lt.s32.totalorder %s11, 2
    // Predicated region
    $region29: #{covd_forward.3} parent=5 // pred_check
      %p175 = pneg %p174
    $region30: #{covd_forward.3} parent=5 // pred_check_branch
      %177 = sbr.rel (%p175) target = $region32
    $region31: #{covd_forward.3} parent=5 // pred_region
      // Predicated region
      $region33: #{covd_forward.3} parent=31 // pred_check
        %p178 = pneg %p31
      $region34: #{covd_forward.3} parent=31 // pred_check_branch
        %180 = sbr.rel (%p178) target = $region36
      $region35: #{covd_forward.3} parent=31 // pred_region
        %p181 = scmp.lt.s32.totalorder %s11, 1
        %s182 = scalar_select %p181, %s11, 1
        %s183 = smul.addr %s182, 5
        %s184 = smul.addr %s183, 4
        %s185 = scalar_lea.vmem %s0, %s184
      $region36: #{covd_forward.3} parent=31 // pred_fallthru
        _
    $region32: #{covd_forward.3} parent=5 // pred_fallthru
      _
    %p186 = scmp.le.s32.totalorder 1, %s11
    %p187 = scmp.lt.s32.totalorder %s11, 3
    %p188 = pnand %p186, %p187
    %p189 = pneg %p188
    // Predicated region
    $region37: #{covd_forward.3} parent=5 // pred_check
      _
    $region38: #{covd_forward.3} parent=5 // pred_check_branch
      %191 = sbr.rel (%p188) target = $region40
    $region39: #{covd_forward.3} parent=5 // pred_region
      %s192 = ssub.s32 %s11, 1
      %p193 = scmp.lt.s32.totalorder %s16, 1
      %s194 = scalar_select %p193, %s16, 1
      %s195 = smul.addr %s194, 5
      %s196 = smul.addr %s195, 4
      %s197 = scalar_lea.vmem %s0, %s196
      %p198 = pneg %p37
      %p199 = pneg %p34
      %p200 = pneg %p58
      %p201 = pneg %p55
      %p202 = pneg %p79
      %p203 = pneg %p76
      %p204 = pneg %p100
      %p205 = pneg %p97
      %p206 = pneg %p121
      %p207 = pneg %p118
      %p208 = pneg %p147
      %p209 = pneg %p144
      %p210 = scmp.lt.s32.totalorder %s16, 1
      %s211 = scalar_select %p210, %s16, 1
      %s212 = smul.addr %s211, 3
      %s213 = smul.addr %s212, 4
      %s214 = scalar_lea.vmem %s5, %s213
      %p215 = scmp.lt.s32.totalorder %s16, 1
      %s216 = scalar_select %p215, %s16, 1
      %s217 = smul.addr %s216, 5
      %s218 = smul.addr %s217, 4
      %s219 = scalar_lea.vmem %s0, %s218
      %p220 = scmp.lt.s32.totalorder %s16, 1
      %s221 = scalar_select %p220, %s16, 1
      %s222 = smul.addr %s221, 3
      %s223 = smul.addr %s222, 4
      %s224 = scalar_lea.vmem %s5, %s223
      %v225 = vld [vmem:[%s219] sm:$0xf]
      %226 = vst [vmem:[#allocation2] sm:$0xf] %v225
      %v227 = vld [vmem:[%s219] sm:$0xff]
      %229 = vst [vmem:[#allocation1] ss:$2 sm:$0xff] %v227
      %v230 = vld.sshfl [vmem:[#allocation1] sm:$0xff pattern:$0x75316420]
      %v231 = vld.sshfl [vmem:[#allocation1 + $0x8] sm:$0xff pattern:$0x75316420]
      %232 = vrot.lane.b32.xlu0 %v230, 126
      %v233 = vpop.permute.xlu0 %232
      %234 = vrot.lane.b32.xlu0 %v231, 126
      %v235 = vpop.permute.xlu0 %234
      %vm236 = vcmask 1031168
      %v237 = vsel %vm236, %v233, %v235
      %239 = vst [vmem:[#allocation2 + $0x4] sm:$0xf] %v237
      %v240 = vld [vmem:[%s219] sm:$0xff]
      %242 = vst [vmem:[#allocation1] ss:$2 sm:$0xff] %v240
      %v243 = vld.sshfl [vmem:[#allocation1] sm:$0xff pattern:$0x75316420]
      %v244 = vld.sshfl [vmem:[#allocation1 + $0x8] sm:$0xff pattern:$0x75316420]
      %245 = vrot.lane.b32.xlu0 %v243, 124
      %v246 = vpop.permute.xlu0 %245
      %247 = vrot.lane.b32.xlu0 %v244, 124
      %v248 = vpop.permute.xlu0 %247
      %vm249 = vcmask 1014784
      %v250 = vsel %vm249, %v246, %v248
      %252 = vst [vmem:[#allocation2 + $0x8] sm:$0xf] %v250
      %v253 = vld [vmem:[%s219] sm:$0xff]
      %255 = vst [vmem:[#allocation1] ss:$2 sm:$0xff] %v253
      %v256 = vld.sshfl [vmem:[#allocation1] sm:$0xff pattern:$0x75316420]
      %v257 = vld.sshfl [vmem:[#allocation1 + $0x8] sm:$0xff pattern:$0x75316420]
      %258 = vrot.lane.b32.xlu0 %v256, 122
      %v259 = vpop.permute.xlu0 %258
      %260 = vrot.lane.b32.xlu0 %v257, 122
      %v261 = vpop.permute.xlu0 %260
      %vm262 = vcmask 998400
      %v263 = vsel %vm262, %v259, %v261
      %265 = vst [vmem:[#allocation2 + $0xc] sm:$0xf] %v263
      %v266 = vld [vmem:[%s219] sm:$0xff]
      %268 = vst [vmem:[#allocation1] ss:$2 sm:$0xff] %v266
      %v269 = vld.sshfl [vmem:[#allocation1] sm:$0xff pattern:$0x75316420]
      %v270 = vld.sshfl [vmem:[#allocation1 + $0x8] sm:$0xff pattern:$0x75316420]
      %271 = vrot.lane.b32.xlu0 %v269, 120
      %v272 = vpop.permute.xlu0 %271
      %273 = vrot.lane.b32.xlu0 %v270, 120
      %v274 = vpop.permute.xlu0 %273
      %vm275 = vcmask 982016
      %v276 = vsel %vm275, %v272, %v274
      %278 = vst [vmem:[#allocation2 + $0x10] sm:$0xf] %v276
      %v279 = vld [vmem:[#allocation2] sm:$0xff]
      %v280 = vld [vmem:[#allocation2 + $0x8] sm:$0xff]
      %v281 = vld [vmem:[#allocation2 + $0x10] sm:$0xf]
      %v282 = vld [vmem:[%s1] sm:$0xf]
      %vm283 = vcmask 162816
      %v285 = vsel %vm283, %v282, 0
      %vm287 = vcmask 1043456
      %v289 = vsel %vm287, %v281, 0
      %291 = vmatpush.msra.mxu0 0.0
      %292 = vmatpush.msra.mxu0 0.0
      %293 = vmatpush.msra.mxu0 0.0
      %294 = vmatpush.msra.mxu0 0.0
      %295 = vmatpush.msra.mxu0 0.0
      %296 = vmatpush.msra.mxu0 0.0
      %297 = vmatpush.msra.mxu0 0.0
      %298 = vmatpush.msra.mxu0 0.0
      %299 = vmatpush.msra.mxu0 0.0
      %300 = vmatpush.msra.mxu0 0.0
      %301 = vmatpush.msra.mxu0 0.0
      %302 = vmatpush.msra.mxu0 0.0
      %303 = vmatpush.msra.mxu0 0.0
      %304 = vmatpush.msra.mxu0 %v289
      %305 = vmatpush.msra.mxu0 %v280
      %306 = vmatpush.msra.mxu0 %v279
      %307 = vmatmul.f32.gmra.mxu0 %v285
      %v308 = vpop.f32.mrf.mxu0
      %v309 = vadd.f32 0.0, %v308
      %310 = vdwg.mxu0
      %311 = vst [vmem:[#allocation3] sm:$0xf] %v309
      %v312 = vld [vmem:[%s2] sm:$0xf]
      %v314 = vsel %vm283, %v312, 0
      %316 = vmatpush.msra.mxu0 0.0
      %317 = vmatpush.msra.mxu0 0.0
      %318 = vmatpush.msra.mxu0 0.0
      %319 = vmatpush.msra.mxu0 0.0
      %320 = vmatpush.msra.mxu0 0.0
      %321 = vmatpush.msra.mxu0 0.0
      %322 = vmatpush.msra.mxu0 0.0
      %323 = vmatpush.msra.mxu0 0.0
      %324 = vmatpush.msra.mxu0 0.0
      %325 = vmatpush.msra.mxu0 0.0
      %326 = vmatpush.msra.mxu0 0.0
      %327 = vmatpush.msra.mxu0 0.0
      %328 = vmatpush.msra.mxu0 0.0
      %329 = vmatpush.msra.mxu0 %v289
      %330 = vmatpush.msra.mxu0 %v280
      %331 = vmatpush.msra.mxu0 %v279
      %332 = vmatmul.f32.gmra.mxu0 %v314
      %v333 = vpop.f32.mrf.mxu0
      %v334 = vadd.f32 0.0, %v333
      %335 = vdwg.mxu0
      %336 = vst [vmem:[#allocation4] sm:$0xf] %v334
      %v337 = vld [vmem:[%s219] sm:$0xff]
      %339 = vst [vmem:[#allocation1] ss:$2 sm:$0xff] %v337
      %v340 = vld.sshfl [vmem:[#allocation1] sm:$0xff pattern:$0x75316420]
      %v341 = vld.sshfl [vmem:[#allocation1 + $0x8] sm:$0xff pattern:$0x75316420]
      %342 = vrot.lane.b32.xlu0 %v340, 80
      %v343 = vpop.permute.xlu0 %342
      %344 = vrot.lane.b32.xlu0 %v341, 80
      %v345 = vpop.permute.xlu0 %344
      %vm346 = vcmask 654336
      %v347 = vsel %vm346, %v343, %v345
      %349 = vst [vmem:[#allocation2] sm:$0xf] %v347
      %v350 = vld [vmem:[%s219] sm:$0xff]
      %352 = vst [vmem:[#allocation1] ss:$2 sm:$0xff] %v350
      %v353 = vld.sshfl [vmem:[#allocation1] sm:$0xff pattern:$0x75316420]
      %v354 = vld.sshfl [vmem:[#allocation1 + $0x8] sm:$0xff pattern:$0x75316420]
      %355 = vrot.lane.b32.xlu0 %v353, 78
      %v356 = vpop.permute.xlu0 %355
      %357 = vrot.lane.b32.xlu0 %v354, 78
      %v358 = vpop.permute.xlu0 %357
      %vm359 = vcmask 637952
      %v360 = vsel %vm359, %v356, %v358
      %362 = vst [vmem:[#allocation2 + $0x4] sm:$0xf] %v360
      %v363 = vld [vmem:[%s219] sm:$0xff]
      %365 = vst [vmem:[#allocation1] ss:$2 sm:$0xff] %v363
      %v366 = vld.sshfl [vmem:[#allocation1] sm:$0xff pattern:$0x75316420]
      %v367 = vld.sshfl [vmem:[#allocation1 + $0x8] sm:$0xff pattern:$0x75316420]
      %368 = vrot.lane.b32.xlu0 %v366, 76
      %v369 = vpop.permute.xlu0 %368
      %370 = vrot.lane.b32.xlu0 %v367, 76
      %v371 = vpop.permute.xlu0 %370
      %vm372 = vcmask 621568
      %v373 = vsel %vm372, %v369, %v371
      %375 = vst [vmem:[#allocation2 + $0x8] sm:$0xf] %v373
      %v376 = vld [vmem:[%s219] sm:$0xff]
      %378 = vst [vmem:[#allocation1] ss:$2 sm:$0xff] %v376
      %v379 = vld.sshfl [vmem:[#allocation1] sm:$0xff pattern:$0x75316420]
      %v380 = vld.sshfl [vmem:[#allocation1 + $0x8] sm:$0xff pattern:$0x75316420]
      %381 = vrot.lane.b32.xlu0 %v379, 74
      %v382 = vpop.permute.xlu0 %381
      %383 = vrot.lane.b32.xlu0 %v380, 74
      %v384 = vpop.permute.xlu0 %383
      %vm385 = vcmask 605184
      %v386 = vsel %vm385, %v382, %v384
      %388 = vst [vmem:[#allocation2 + $0xc] sm:$0xf] %v386
      %v389 = vld [vmem:[%s219] sm:$0xff]
      %391 = vst [vmem:[#allocation1] ss:$2 sm:$0xff] %v389
      %v392 = vld.sshfl [vmem:[#allocation1] sm:$0xff pattern:$0x75316420]
      %v393 = vld.sshfl [vmem:[#allocation1 + $0x8] sm:$0xff pattern:$0x75316420]
      %394 = vrot.lane.b32.xlu0 %v392, 72
      %v395 = vpop.permute.xlu0 %394
      %396 = vrot.lane.b32.xlu0 %v393, 72
      %v397 = vpop.permute.xlu0 %396
      %vm398 = vcmask 588800
      %v399 = vsel %vm398, %v395, %v397
      %401 = vst [vmem:[#allocation2 + $0x10] sm:$0xf] %v399
      %v402 = vld [vmem:[#allocation2] sm:$0xff]
      %v403 = vld [vmem:[#allocation2 + $0x8] sm:$0xff]
      %v404 = vld [vmem:[#allocation2 + $0x10] sm:$0xf]
      %s405 = scalar_lea.vmem %s1, 4
      %v406 = vld [vmem:[%s405] sm:$0xf]
      %v408 = vsel %vm283, %v406, 0
      %v411 = vsel %vm287, %v404, 0
      %413 = vmatpush.msra.mxu0 0.0
      %414 = vmatpush.msra.mxu0 0.0
      %415 = vmatpush.msra.mxu0 0.0
      %416 = vmatpush.msra.mxu0 0.0
      %417 = vmatpush.msra.mxu0 0.0
      %418 = vmatpush.msra.mxu0 0.0
      %419 = vmatpush.msra.mxu0 0.0
      %420 = vmatpush.msra.mxu0 0.0
      %421 = vmatpush.msra.mxu0 0.0
      %422 = vmatpush.msra.mxu0 0.0
      %423 = vmatpush.msra.mxu0 0.0
      %424 = vmatpush.msra.mxu0 0.0
      %425 = vmatpush.msra.mxu0 0.0
      %426 = vmatpush.msra.mxu0 %v411
      %427 = vmatpush.msra.mxu0 %v403
      %428 = vmatpush.msra.mxu0 %v402
      %429 = vmatmul.f32.gmra.mxu0 %v408
      %v430 = vpop.f32.mrf.mxu0
      %v431 = vadd.f32 0.0, %v430
      %432 = vdwg.mxu0
      %v433 = vld [vmem:[#allocation3] sm:$0xf]
      %v434 = vadd.f32 %v433, %v431
      %435 = vst [vmem:[#allocation3] sm:$0xf] %v434
      %s436 = scalar_lea.vmem %s2, 4
      %v437 = vld [vmem:[%s436] sm:$0xf]
      %v439 = vsel %vm283, %v437, 0
      %441 = vmatpush.msra.mxu0 0.0
      %442 = vmatpush.msra.mxu0 0.0
      %443 = vmatpush.msra.mxu0 0.0
      %444 = vmatpush.msra.mxu0 0.0
      %445 = vmatpush.msra.mxu0 0.0
      %446 = vmatpush.msra.mxu0 0.0
      %447 = vmatpush.msra.mxu0 0.0
      %448 = vmatpush.msra.mxu0 0.0
      %449 = vmatpush.msra.mxu0 0.0
      %450 = vmatpush.msra.mxu0 0.0
      %451 = vmatpush.msra.mxu0 0.0
      %452 = vmatpush.msra.mxu0 0.0
      %453 = vmatpush.msra.mxu0 0.0
      %454 = vmatpush.msra.mxu0 %v411
      %455 = vmatpush.msra.mxu0 %v403
      %456 = vmatpush.msra.mxu0 %v402
      %457 = vmatmul.f32.gmra.mxu0 %v439
      %v458 = vpop.f32.mrf.mxu0
      %v459 = vadd.f32 0.0, %v458
      %460 = vdwg.mxu0
      %v461 = vld [vmem:[#allocation4] sm:$0xf]
      %v462 = vadd.f32 %v461, %v459
      %463 = vst [vmem:[#allocation4] sm:$0xf] %v462
      %v464 = vld [vmem:[%s219] sm:$0xff]
      %466 = vst [vmem:[#allocation1] ss:$2 sm:$0xff] %v464
      %v467 = vld.sshfl [vmem:[#allocation1] sm:$0xff pattern:$0x75316420]
      %v468 = vld.sshfl [vmem:[#allocation1 + $0x8] sm:$0xff pattern:$0x75316420]
      %469 = vrot.lane.b32.xlu0 %v467, 32
      %v470 = vpop.permute.xlu0 %469
      %471 = vrot.lane.b32.xlu0 %v468, 32
      %v472 = vpop.permute.xlu0 %471
      %vm473 = vcmask 261120
      %v474 = vsel %vm473, %v470, %v472
      %476 = vst [vmem:[#allocation2] sm:$0xf] %v474
      %v477 = vld [vmem:[%s219] sm:$0xff]
      %479 = vst [vmem:[#allocation1] ss:$2 sm:$0xff] %v477
      %v480 = vld.sshfl [vmem:[#allocation1] sm:$0xff pattern:$0x75316420]
      %v481 = vld.sshfl [vmem:[#allocation1 + $0x8] sm:$0xff pattern:$0x75316420]
      %482 = vrot.lane.b32.xlu0 %v480, 30
      %v483 = vpop.permute.xlu0 %482
      %484 = vrot.lane.b32.xlu0 %v481, 30
      %v485 = vpop.permute.xlu0 %484
      %vm486 = vcmask 244736
      %v487 = vsel %vm486, %v483, %v485
      %489 = vst [vmem:[#allocation2 + $0x4] sm:$0xf] %v487
      %v490 = vld [vmem:[%s219] sm:$0xff]
      %492 = vst [vmem:[#allocation1] ss:$2 sm:$0xff] %v490
      %v493 = vld.sshfl [vmem:[#allocation1] sm:$0xff pattern:$0x75316420]
      %v494 = vld.sshfl [vmem:[#allocation1 + $0x8] sm:$0xff pattern:$0x75316420]
      %495 = vrot.lane.b32.xlu0 %v493, 28
      %v496 = vpop.permute.xlu0 %495
      %497 = vrot.lane.b32.xlu0 %v494, 28
      %v498 = vpop.permute.xlu0 %497
      %vm499 = vcmask 228352
      %v500 = vsel %vm499, %v496, %v498
      %502 = vst [vmem:[#allocation2 + $0x8] sm:$0xf] %v500
      %v503 = vld [vmem:[%s219] sm:$0xff]
      %505 = vst [vmem:[#allocation1] ss:$2 sm:$0xff] %v503
      %v506 = vld.sshfl [vmem:[#allocation1] sm:$0xff pattern:$0x75316420]
      %v507 = vld.sshfl [vmem:[#allocation1 + $0x8] sm:$0xff pattern:$0x75316420]
      %508 = vrot.lane.b32.xlu0 %v506, 26
      %v509 = vpop.permute.xlu0 %508
      %510 = vrot.lane.b32.xlu0 %v507, 26
      %v511 = vpop.permute.xlu0 %510
      %vm512 = vcmask 211968
      %v513 = vsel %vm512, %v509, %v511
      %515 = vst [vmem:[#allocation2 + $0xc] sm:$0xf] %v513
      %v516 = vld [vmem:[%s219] sm:$0xff]
      %518 = vst [vmem:[#allocation1] ss:$2 sm:$0xff] %v516
      %v519 = vld.sshfl [vmem:[#allocation1] sm:$0xff pattern:$0x75316420]
      %v520 = vld.sshfl [vmem:[#allocation1 + $0x8] sm:$0xff pattern:$0x75316420]
      %521 = vrot.lane.b32.xlu0 %v519, 24
      %v522 = vpop.permute.xlu0 %521
      %523 = vrot.lane.b32.xlu0 %v520, 24
      %v524 = vpop.permute.xlu0 %523
      %vm525 = vcmask 195584
      %v526 = vsel %vm525, %v522, %v524
      %528 = vst [vmem:[#allocation2 + $0x10] sm:$0xf] %v526
      %v529 = vld [vmem:[#allocation2] sm:$0xff]
      %v530 = vld [vmem:[#allocation2 + $0x8] sm:$0xff]
      %v531 = vld [vmem:[#allocation2 + $0x10] sm:$0xf]
      %s532 = scalar_lea.vmem %s1, 8
      %v533 = vld [vmem:[%s532] sm:$0xf]
      %v535 = vsel %vm283, %v533, 0
      %v538 = vsel %vm287, %v531, 0
      %540 = vmatpush.msra.mxu0 0.0
      %541 = vmatpush.msra.mxu0 0.0
      %542 = vmatpush.msra.mxu0 0.0
      %543 = vmatpush.msra.mxu0 0.0
      %544 = vmatpush.msra.mxu0 0.0
      %545 = vmatpush.msra.mxu0 0.0
      %546 = vmatpush.msra.mxu0 0.0
      %547 = vmatpush.msra.mxu0 0.0
      %548 = vmatpush.msra.mxu0 0.0
      %549 = vmatpush.msra.mxu0 0.0
      %550 = vmatpush.msra.mxu0 0.0
      %551 = vmatpush.msra.mxu0 0.0
      %552 = vmatpush.msra.mxu0 0.0
      %553 = vmatpush.msra.mxu0 %v538
      %554 = vmatpush.msra.mxu0 %v530
      %555 = vmatpush.msra.mxu0 %v529
      %556 = vmatmul.f32.gmra.mxu0 %v535
      %v557 = vpop.f32.mrf.mxu0
      %v558 = vadd.f32 0.0, %v557
      %559 = vdwg.mxu0
      %v560 = vld [vmem:[#allocation3] sm:$0xf]
      %v561 = vadd.f32 %v560, %v558
      %562 = vst [vmem:[#allocation3] sm:$0xf] %v561
      %s563 = scalar_lea.vmem %s2, 8
      %v564 = vld [vmem:[%s563] sm:$0xf]
      %v566 = vsel %vm283, %v564, 0
      %568 = vmatpush.msra.mxu0 0.0
      %569 = vmatpush.msra.mxu0 0.0
      %570 = vmatpush.msra.mxu0 0.0
      %571 = vmatpush.msra.mxu0 0.0
      %572 = vmatpush.msra.mxu0 0.0
      %573 = vmatpush.msra.mxu0 0.0
      %574 = vmatpush.msra.mxu0 0.0
      %575 = vmatpush.msra.mxu0 0.0
      %576 = vmatpush.msra.mxu0 0.0
      %577 = vmatpush.msra.mxu0 0.0
      %578 = vmatpush.msra.mxu0 0.0
      %579 = vmatpush.msra.mxu0 0.0
      %580 = vmatpush.msra.mxu0 0.0
      %581 = vmatpush.msra.mxu0 %v538
      %582 = vmatpush.msra.mxu0 %v530
      %583 = vmatpush.msra.mxu0 %v529
      %584 = vmatmul.f32.gmra.mxu0 %v566
      %v585 = vpop.f32.mrf.mxu0
      %v586 = vadd.f32 0.0, %v585
      %587 = vdwg.mxu0
      %v588 = vld [vmem:[#allocation4] sm:$0xf]
      %v589 = vadd.f32 %v588, %v586
      %590 = vst [vmem:[#allocation4] sm:$0xf] %v589
      %v591 = vld [vmem:[%s219 + $0x4] sm:$0xff]
      %593 = vst [vmem:[#allocation1] ss:$2 sm:$0xff] %v591
      %v594 = vld.sshfl [vmem:[#allocation1] sm:$0xff pattern:$0x75316420]
      %v595 = vld.sshfl [vmem:[#allocation1 + $0x8] sm:$0xff pattern:$0x75316420]
      %596 = vrot.lane.b32.xlu0 %v594, 112
      %v597 = vpop.permute.xlu0 %596
      %598 = vrot.lane.b32.xlu0 %v595, 112
      %v599 = vpop.permute.xlu0 %598
      %vm600 = vcmask 916480
      %v601 = vsel %vm600, %v597, %v599
      %603 = vst [vmem:[#allocation2] sm:$0xf] %v601
      %v604 = vld [vmem:[%s219 + $0x4] sm:$0xff]
      %606 = vst [vmem:[#allocation1] ss:$2 sm:$0xff] %v604
      %v607 = vld.sshfl [vmem:[#allocation1] sm:$0xff pattern:$0x75316420]
      %v608 = vld.sshfl [vmem:[#allocation1 + $0x8] sm:$0xff pattern:$0x75316420]
      %609 = vrot.lane.b32.xlu0 %v607, 110
      %v610 = vpop.permute.xlu0 %609
      %611 = vrot.lane.b32.xlu0 %v608, 110
      %v612 = vpop.permute.xlu0 %611
      %vm613 = vcmask 900096
      %v614 = vsel %vm613, %v610, %v612
      %616 = vst [vmem:[#allocation2 + $0x4] sm:$0xf] %v614
      %v617 = vld [vmem:[%s219 + $0x4] sm:$0xff]
      %619 = vst [vmem:[#allocation1] ss:$2 sm:$0xff] %v617
      %v620 = vld.sshfl [vmem:[#allocation1] sm:$0xff pattern:$0x75316420]
      %v621 = vld.sshfl [vmem:[#allocation1 + $0x8] sm:$0xff pattern:$0x75316420]
      %622 = vrot.lane.b32.xlu0 %v620, 108
      %v623 = vpop.permute.xlu0 %622
      %624 = vrot.lane.b32.xlu0 %v621, 108
      %v625 = vpop.permute.xlu0 %624
      %vm626 = vcmask 883712
      %v627 = vsel %vm626, %v623, %v625
      %629 = vst [vmem:[#allocation2 + $0x8] sm:$0xf] %v627
      %v630 = vld [vmem:[%s219 + $0x4] sm:$0xff]
      %632 = vst [vmem:[#allocation1] ss:$2 sm:$0xff] %v630
      %v633 = vld.sshfl [vmem:[#allocation1] sm:$0xff pattern:$0x75316420]
      %v634 = vld.sshfl [vmem:[#allocation1 + $0x8] sm:$0xff pattern:$0x75316420]
      %635 = vrot.lane.b32.xlu0 %v633, 106
      %v636 = vpop.permute.xlu0 %635
      %637 = vrot.lane.b32.xlu0 %v634, 106
      %v638 = vpop.permute.xlu0 %637
      %vm639 = vcmask 867328
      %v640 = vsel %vm639, %v636, %v638
      %642 = vst [vmem:[#allocation2 + $0xc] sm:$0xf] %v640
      %v643 = vld [vmem:[%s219 + $0x4] sm:$0xff]
      %645 = vst [vmem:[#allocation1] ss:$2 sm:$0xff] %v643
      %v646 = vld.sshfl [vmem:[#allocation1] sm:$0xff pattern:$0x75316420]
      %v647 = vld.sshfl [vmem:[#allocation1 + $0x8] sm:$0xff pattern:$0x75316420]
      %648 = vrot.lane.b32.xlu0 %v646, 104
      %v649 = vpop.permute.xlu0 %648
      %650 = vrot.lane.b32.xlu0 %v647, 104
      %v651 = vpop.permute.xlu0 %650
      %vm652 = vcmask 850944
      %v653 = vsel %vm652, %v649, %v651
      %655 = vst [vmem:[#allocation2 + $0x10] sm:$0xf] %v653
      %v656 = vld [vmem:[#allocation2] sm:$0xff]
      %v657 = vld [vmem:[#allocation2 + $0x8] sm:$0xff]
      %v658 = vld [vmem:[#allocation2 + $0x10] sm:$0xf]
      %s659 = scalar_lea.vmem %s1, 12
      %v660 = vld [vmem:[%s659] sm:$0xf]
      %v662 = vsel %vm283, %v660, 0
      %v665 = vsel %vm287, %v658, 0
      %667 = vmatpush.msra.mxu0 0.0
      %668 = vmatpush.msra.mxu0 0.0
      %669 = vmatpush.msra.mxu0 0.0
      %670 = vmatpush.msra.mxu0 0.0
      %671 = vmatpush.msra.mxu0 0.0
      %672 = vmatpush.msra.mxu0 0.0
      %673 = vmatpush.msra.mxu0 0.0
      %674 = vmatpush.msra.mxu0 0.0
      %675 = vmatpush.msra.mxu0 0.0
      %676 = vmatpush.msra.mxu0 0.0
      %677 = vmatpush.msra.mxu0 0.0
      %678 = vmatpush.msra.mxu0 0.0
      %679 = vmatpush.msra.mxu0 0.0
      %680 = vmatpush.msra.mxu0 %v665
      %681 = vmatpush.msra.mxu0 %v657
      %682 = vmatpush.msra.mxu0 %v656
      %683 = vmatmul.f32.gmra.mxu0 %v662
      %v684 = vpop.f32.mrf.mxu0
      %v685 = vadd.f32 0.0, %v684
      %686 = vdwg.mxu0
      %v687 = vld [vmem:[#allocation3] sm:$0xf]
      %v688 = vadd.f32 %v687, %v685
      %689 = vst [vmem:[#allocation3] sm:$0xf] %v688
      %s690 = scalar_lea.vmem %s2, 12
      %v691 = vld [vmem:[%s690] sm:$0xf]
      %v693 = vsel %vm283, %v691, 0
      %695 = vmatpush.msra.mxu0 0.0
      %696 = vmatpush.msra.mxu0 0.0
      %697 = vmatpush.msra.mxu0 0.0
      %698 = vmatpush.msra.mxu0 0.0
      %699 = vmatpush.msra.mxu0 0.0
      %700 = vmatpush.msra.mxu0 0.0
      %701 = vmatpush.msra.mxu0 0.0
      %702 = vmatpush.msra.mxu0 0.0
      %703 = vmatpush.msra.mxu0 0.0
      %704 = vmatpush.msra.mxu0 0.0
      %705 = vmatpush.msra.mxu0 0.0
      %706 = vmatpush.msra.mxu0 0.0
      %707 = vmatpush.msra.mxu0 0.0
      %708 = vmatpush.msra.mxu0 %v665
      %709 = vmatpush.msra.mxu0 %v657
      %710 = vmatpush.msra.mxu0 %v656
      %711 = vmatmul.f32.gmra.mxu0 %v693
      %v712 = vpop.f32.mrf.mxu0
      %v713 = vadd.f32 0.0, %v712
      %714 = vdwg.mxu0
      %v715 = vld [vmem:[#allocation4] sm:$0xf]
      %v716 = vadd.f32 %v715, %v713
      %717 = vst [vmem:[#allocation4] sm:$0xf] %v716
      %v718 = vld [vmem:[%s219 + $0x4] sm:$0xff]
      %720 = vst [vmem:[#allocation1] ss:$2 sm:$0xff] %v718
      %v721 = vld.sshfl [vmem:[#allocation1] sm:$0xff pattern:$0x75316420]
      %v722 = vld.sshfl [vmem:[#allocation1 + $0x8] sm:$0xff pattern:$0x75316420]
      %723 = vrot.lane.b32.xlu0 %v721, 64
      %v724 = vpop.permute.xlu0 %723
      %725 = vrot.lane.b32.xlu0 %v722, 64
      %v726 = vpop.permute.xlu0 %725
      %vm727 = vcmask 523264
      %v728 = vsel %vm727, %v724, %v726
      %730 = vst [vmem:[#allocation2] sm:$0xf] %v728
      %v731 = vld [vmem:[%s219 + $0x4] sm:$0xff]
      %733 = vst [vmem:[#allocation1] ss:$2 sm:$0xff] %v731
      %v734 = vld.sshfl [vmem:[#allocation1] sm:$0xff pattern:$0x75316420]
      %v735 = vld.sshfl [vmem:[#allocation1 + $0x8] sm:$0xff pattern:$0x75316420]
      %736 = vrot.lane.b32.xlu0 %v734, 62
      %v737 = vpop.permute.xlu0 %736
      %738 = vrot.lane.b32.xlu0 %v735, 62
      %v739 = vpop.permute.xlu0 %738
      %vm740 = vcmask 506880
      %v741 = vsel %vm740, %v737, %v739
      %743 = vst [vmem:[#allocation2 + $0x4] sm:$0xf] %v741
      %v744 = vld [vmem:[%s219 + $0x4] sm:$0xff]
      %746 = vst [vmem:[#allocation1] ss:$2 sm:$0xff] %v744
      %v747 = vld.sshfl [vmem:[#allocation1] sm:$0xff pattern:$0x75316420]
      %v748 = vld.sshfl [vmem:[#allocation1 + $0x8] sm:$0xff pattern:$0x75316420]
      %749 = vrot.lane.b32.xlu0 %v747, 60
      %v750 = vpop.permute.xlu0 %749
      %751 = vrot.lane.b32.xlu0 %v748, 60
      %v752 = vpop.permute.xlu0 %751
      %vm753 = vcmask 490496
      %v754 = vsel %vm753, %v750, %v752
      %756 = vst [vmem:[#allocation2 + $0x8] sm:$0xf] %v754
      %v757 = vld [vmem:[%s219 + $0x4] sm:$0xff]
      %759 = vst [vmem:[#allocation1] ss:$2 sm:$0xff] %v757
      %v760 = vld.sshfl [vmem:[#allocation1] sm:$0xff pattern:$0x75316420]
      %v761 = vld.sshfl [vmem:[#allocation1 + $0x8] sm:$0xff pattern:$0x75316420]
      %762 = vrot.lane.b32.xlu0 %v760, 58
      %v763 = vpop.permute.xlu0 %762
      %764 = vrot.lane.b32.xlu0 %v761, 58
      %v765 = vpop.permute.xlu0 %764
      %vm766 = vcmask 474112
      %v767 = vsel %vm766, %v763, %v765
      %769 = vst [vmem:[#allocation2 + $0xc] sm:$0xf] %v767
      %v770 = vld [vmem:[%s219 + $0x4] sm:$0xff]
      %772 = vst [vmem:[#allocation1] ss:$2 sm:$0xff] %v770
      %v773 = vld.sshfl [vmem:[#allocation1] sm:$0xff pattern:$0x75316420]
      %v774 = vld.sshfl [vmem:[#allocation1 + $0x8] sm:$0xff pattern:$0x75316420]
      %775 = vrot.lane.b32.xlu0 %v773, 56
      %v776 = vpop.permute.xlu0 %775
      %777 = vrot.lane.b32.xlu0 %v774, 56
      %v778 = vpop.permute.xlu0 %777
      %vm779 = vcmask 457728
      %v780 = vsel %vm779, %v776, %v778
      %782 = vst [vmem:[#allocation2 + $0x10] sm:$0xf] %v780
      %v783 = vld [vmem:[#allocation2] sm:$0xff]
      %v784 = vld [vmem:[#allocation2 + $0x8] sm:$0xff]
      %v785 = vld [vmem:[#allocation2 + $0x10] sm:$0xf]
      %s786 = scalar_lea.vmem %s1, 16
      %v787 = vld [vmem:[%s786] sm:$0xf]
      %v789 = vsel %vm283, %v787, 0
      %v792 = vsel %vm287, %v785, 0
      %794 = vmatpush.msra.mxu0 0.0
      %795 = vmatpush.msra.mxu0 0.0
      %796 = vmatpush.msra.mxu0 0.0
      %797 = vmatpush.msra.mxu0 0.0
      %798 = vmatpush.msra.mxu0 0.0
      %799 = vmatpush.msra.mxu0 0.0
      %800 = vmatpush.msra.mxu0 0.0
      %801 = vmatpush.msra.mxu0 0.0
      %802 = vmatpush.msra.mxu0 0.0
      %803 = vmatpush.msra.mxu0 0.0
      %804 = vmatpush.msra.mxu0 0.0
      %805 = vmatpush.msra.mxu0 0.0
      %806 = vmatpush.msra.mxu0 0.0
      %807 = vmatpush.msra.mxu0 %v792
      %808 = vmatpush.msra.mxu0 %v784
      %809 = vmatpush.msra.mxu0 %v783
      %810 = vmatmul.f32.gmra.mxu0 %v789
      %v811 = vpop.f32.mrf.mxu0
      %v812 = vadd.f32 0.0, %v811
      %813 = vdwg.mxu0
      %v814 = vld [vmem:[#allocation3] sm:$0xf]
      %v815 = vadd.f32 %v814, %v812
      %816 = vst [vmem:[#allocation3] sm:$0xf] %v815
      %s817 = scalar_lea.vmem %s2, 16
      %v818 = vld [vmem:[%s817] sm:$0xf]
      %v820 = vsel %vm283, %v818, 0
      %822 = vmatpush.msra.mxu0 0.0
      %823 = vmatpush.msra.mxu0 0.0
      %824 = vmatpush.msra.mxu0 0.0
      %825 = vmatpush.msra.mxu0 0.0
      %826 = vmatpush.msra.mxu0 0.0
      %827 = vmatpush.msra.mxu0 0.0
      %828 = vmatpush.msra.mxu0 0.0
      %829 = vmatpush.msra.mxu0 0.0
      %830 = vmatpush.msra.mxu0 0.0
      %831 = vmatpush.msra.mxu0 0.0
      %832 = vmatpush.msra.mxu0 0.0
      %833 = vmatpush.msra.mxu0 0.0
      %834 = vmatpush.msra.mxu0 0.0
      %835 = vmatpush.msra.mxu0 %v792
      %836 = vmatpush.msra.mxu0 %v784
      %837 = vmatpush.msra.mxu0 %v783
      %838 = vmatmul.f32.gmra.mxu0 %v820
      %v839 = vpop.f32.mrf.mxu0
      %v840 = vadd.f32 0.0, %v839
      %841 = vdwg.mxu0
      %v842 = vld [vmem:[#allocation4] sm:$0xf]
      %v843 = vadd.f32 %v842, %v840
      %844 = vst [vmem:[#allocation4] sm:$0xf] %v843
      %v845 = vld [vmem:[#allocation3] sm:$0xf]
      %v846 = vld [vmem:[%s3] sm:$0xf]
      %848 = vset.pattern.permute.xlu0 0
      %849 = vperm.xlu0 %848, %v846
      %v850 = vpop.permute.xlu0 %849
      %v852 = vadd.f32 %v845, %v850
      %v853 = vld [vmem:[#allocation4] sm:$0xf]
      %v854 = vld [vmem:[%s4] sm:$0xf]
      %856 = vset.pattern.permute.xlu0 0
      %857 = vperm.xlu0 %856, %v854
      %v858 = vpop.permute.xlu0 %857
      %v860 = vadd.f32 %v853, %v858
      %v861 = vxor.u32 %v860, 2147483648
      %v862 = vmul.f32 %v861, 1.442695
      %v863 = vpow.pop %v862
      %v864 = vadd.f32 %v863, 1.0
      %v865 = vrcp.pop %v864
      %v866 = vmul.f32 %v864, %v865
      %v867 = vsub.f32 1.0, %v866
      %v868 = vmul.f32 %v865, %v867
      %v869 = vadd.f32 %v865, %v868
      %vm870 = vweird.f32 %v864
      %vm871 = vweird.f32 %v865
      %vm872 = vmor %vm870, %vm871
      %v873 = vsel %vm872, %v865, %v869
      %v874 = vand.u32 2147483647, %v864
      %vm875 = vcmp.eq.f32.partialorder %v874, 8.507059e+37
      %v876 = vand.u32 %v864, 2147483648
      %v877 = vor.u32 1.1754944e-38, %v876
      %v878 = vsel %vm875, %v877, %v873
      %v879 = vmul.f32 1.0, %v878
      %v880 = vmul.f32 %v852, %v879
      %881 = vst [vmem:[%s224] sm:$0xf] %v880
      %v882 = vld [vmem:[%s219 + $0x4] sm:$0xf]
      %883 = vst [vmem:[#allocation2] sm:$0xf] %v882
      %v884 = vld [vmem:[%s219 + $0x4] sm:$0xff]
      %886 = vst [vmem:[#allocation1] ss:$2 sm:$0xff] %v884
      %v887 = vld.sshfl [vmem:[#allocation1] sm:$0xff pattern:$0x75316420]
      %v888 = vld.sshfl [vmem:[#allocation1 + $0x8] sm:$0xff pattern:$0x75316420]
      %889 = vrot.lane.b32.xlu0 %v887, 126
      %v890 = vpop.permute.xlu0 %889
      %891 = vrot.lane.b32.xlu0 %v888, 126
      %v892 = vpop.permute.xlu0 %891
      %v893 = vsel %vm236, %v890, %v892
      %895 = vst [vmem:[#allocation2 + $0x4] sm:$0xf] %v893
      %v896 = vld [vmem:[%s219 + $0x4] sm:$0xff]
      %898 = vst [vmem:[#allocation1] ss:$2 sm:$0xff] %v896
      %v899 = vld.sshfl [vmem:[#allocation1] sm:$0xff pattern:$0x75316420]
      %v900 = vld.sshfl [vmem:[#allocation1 + $0x8] sm:$0xff pattern:$0x75316420]
      %901 = vrot.lane.b32.xlu0 %v899, 124
      %v902 = vpop.permute.xlu0 %901
      %903 = vrot.lane.b32.xlu0 %v900, 124
      %v904 = vpop.permute.xlu0 %903
      %v905 = vsel %vm249, %v902, %v904
      %907 = vst [vmem:[#allocation2 + $0x8] sm:$0xf] %v905
      %v908 = vld [vmem:[%s219 + $0x4] sm:$0xff]
      %910 = vst [vmem:[#allocation1] ss:$2 sm:$0xff] %v908
      %v911 = vld.sshfl [vmem:[#allocation1] sm:$0xff pattern:$0x75316420]
      %v912 = vld.sshfl [vmem:[#allocation1 + $0x8] sm:$0xff pattern:$0x75316420]
      %913 = vrot.lane.b32.xlu0 %v911, 122
      %v914 = vpop.permute.xlu0 %913
      %915 = vrot.lane.b32.xlu0 %v912, 122
      %v916 = vpop.permute.xlu0 %915
      %v917 = vsel %vm262, %v914, %v916
      %919 = vst [vmem:[#allocation2 + $0xc] sm:$0xf] %v917
      %v920 = vld [vmem:[%s219 + $0x4] sm:$0xff]
      %922 = vst [vmem:[#allocation1] ss:$2 sm:$0xff] %v920
      %v923 = vld.sshfl [vmem:[#allocation1] sm:$0xff pattern:$0x75316420]
      %v924 = vld.sshfl [vmem:[#allocation1 + $0x8] sm:$0xff pattern:$0x75316420]
      %925 = vrot.lane.b32.xlu0 %v923, 120
      %v926 = vpop.permute.xlu0 %925
      %927 = vrot.lane.b32.xlu0 %v924, 120
      %v928 = vpop.permute.xlu0 %927
      %v929 = vsel %vm275, %v926, %v928
      %931 = vst [vmem:[#allocation2 + $0x10] sm:$0xf] %v929
      %v932 = vld [vmem:[#allocation2] sm:$0xff]
      %v933 = vld [vmem:[#allocation2 + $0x8] sm:$0xff]
      %v934 = vld [vmem:[#allocation2 + $0x10] sm:$0xf]
      %v935 = vld [vmem:[%s1] sm:$0xf]
      %v937 = vsel %vm283, %v935, 0
      %v940 = vsel %vm287, %v934, 0
      %942 = vmatpush.msra.mxu0 0.0
      %943 = vmatpush.msra.mxu0 0.0
      %944 = vmatpush.msra.mxu0 0.0
      %945 = vmatpush.msra.mxu0 0.0
      %946 = vmatpush.msra.mxu0 0.0
      %947 = vmatpush.msra.mxu0 0.0
      %948 = vmatpush.msra.mxu0 0.0
      %949 = vmatpush.msra.mxu0 0.0
      %950 = vmatpush.msra.mxu0 0.0
      %951 = vmatpush.msra.mxu0 0.0
      %952 = vmatpush.msra.mxu0 0.0
      %953 = vmatpush.msra.mxu0 0.0
      %954 = vmatpush.msra.mxu0 0.0
      %955 = vmatpush.msra.mxu0 %v940
      %956 = vmatpush.msra.mxu0 %v933
      %957 = vmatpush.msra.mxu0 %v932
      %958 = vmatmul.f32.gmra.mxu0 %v937
      %v959 = vpop.f32.mrf.mxu0
      %v960 = vadd.f32 0.0, %v959
      %961 = vdwg.mxu0
      %962 = vst [vmem:[#allocation3] sm:$0xf] %v960
      %v963 = vld [vmem:[%s2] sm:$0xf]
      %v965 = vsel %vm283, %v963, 0
      %967 = vmatpush.msra.mxu0 0.0
      %968 = vmatpush.msra.mxu0 0.0
      %969 = vmatpush.msra.mxu0 0.0
      %970 = vmatpush.msra.mxu0 0.0
      %971 = vmatpush.msra.mxu0 0.0
      %972 = vmatpush.msra.mxu0 0.0
      %973 = vmatpush.msra.mxu0 0.0
      %974 = vmatpush.msra.mxu0 0.0
      %975 = vmatpush.msra.mxu0 0.0
      %976 = vmatpush.msra.mxu0 0.0
      %977 = vmatpush.msra.mxu0 0.0
      %978 = vmatpush.msra.mxu0 0.0
      %979 = vmatpush.msra.mxu0 0.0
      %980 = vmatpush.msra.mxu0 %v940
      %981 = vmatpush.msra.mxu0 %v933
      %982 = vmatpush.msra.mxu0 %v932
      %983 = vmatmul.f32.gmra.mxu0 %v965
      %v984 = vpop.f32.mrf.mxu0
      %v985 = vadd.f32 0.0, %v984
      %986 = vdwg.mxu0
      %987 = vst [vmem:[#allocation4] sm:$0xf] %v985
      %v988 = vld [vmem:[%s219 + $0x4] sm:$0xff]
      %990 = vst [vmem:[#allocation1] ss:$2 sm:$0xff] %v988
      %v991 = vld.sshfl [vmem:[#allocation1] sm:$0xff pattern:$0x75316420]
      %v992 = vld.sshfl [vmem:[#allocation1 + $0x8] sm:$0xff pattern:$0x75316420]
      %993 = vrot.lane.b32.xlu0 %v991, 80
      %v994 = vpop.permute.xlu0 %993
      %995 = vrot.lane.b32.xlu0 %v992, 80
      %v996 = vpop.permute.xlu0 %995
      %v997 = vsel %vm346, %v994, %v996
      %999 = vst [vmem:[#allocation2] sm:$0xf] %v997
      %v1000 = vld [vmem:[%s219 + $0x4] sm:$0xff]
      %1002 = vst [vmem:[#allocation1] ss:$2 sm:$0xff] %v1000
      %v1003 = vld.sshfl [vmem:[#allocation1] sm:$0xff pattern:$0x75316420]
      %v1004 = vld.sshfl [vmem:[#allocation1 + $0x8] sm:$0xff pattern:$0x75316420]
      %1005 = vrot.lane.b32.xlu0 %v1003, 78
      %v1006 = vpop.permute.xlu0 %1005
      %1007 = vrot.lane.b32.xlu0 %v1004, 78
      %v1008 = vpop.permute.xlu0 %1007
      %v1009 = vsel %vm359, %v1006, %v1008
      %1011 = vst [vmem:[#allocation2 + $0x4] sm:$0xf] %v1009
      %v1012 = vld [vmem:[%s219 + $0x4] sm:$0xff]
      %1014 = vst [vmem:[#allocation1] ss:$2 sm:$0xff] %v1012
      %v1015 = vld.sshfl [vmem:[#allocation1] sm:$0xff pattern:$0x75316420]
      %v1016 = vld.sshfl [vmem:[#allocation1 + $0x8] sm:$0xff pattern:$0x75316420]
      %1017 = vrot.lane.b32.xlu0 %v1015, 76
      %v1018 = vpop.permute.xlu0 %1017
      %1019 = vrot.lane.b32.xlu0 %v1016, 76
      %v1020 = vpop.permute.xlu0 %1019
      %v1021 = vsel %vm372, %v1018, %v1020
      %1023 = vst [vmem:[#allocation2 + $0x8] sm:$0xf] %v1021
      %v1024 = vld [vmem:[%s219 + $0x4] sm:$0xff]
      %1026 = vst [vmem:[#allocation1] ss:$2 sm:$0xff] %v1024
      %v1027 = vld.sshfl [vmem:[#allocation1] sm:$0xff pattern:$0x75316420]
      %v1028 = vld.sshfl [vmem:[#allocation1 + $0x8] sm:$0xff pattern:$0x75316420]
      %1029 = vrot.lane.b32.xlu0 %v1027, 74
      %v1030 = vpop.permute.xlu0 %1029
      %1031 = vrot.lane.b32.xlu0 %v1028, 74
      %v1032 = vpop.permute.xlu0 %1031
      %v1033 = vsel %vm385, %v1030, %v1032
      %1035 = vst [vmem:[#allocation2 + $0xc] sm:$0xf] %v1033
      %v1036 = vld [vmem:[%s219 + $0x4] sm:$0xff]
      %1038 = vst [vmem:[#allocation1] ss:$2 sm:$0xff] %v1036
      %v1039 = vld.sshfl [vmem:[#allocation1] sm:$0xff pattern:$0x75316420]
      %v1040 = vld.sshfl [vmem:[#allocation1 + $0x8] sm:$0xff pattern:$0x75316420]
      %1041 = vrot.lane.b32.xlu0 %v1039, 72
      %v1042 = vpop.permute.xlu0 %1041
      %1043 = vrot.lane.b32.xlu0 %v1040, 72
      %v1044 = vpop.permute.xlu0 %1043
      %v1045 = vsel %vm398, %v1042, %v1044
      %1047 = vst [vmem:[#allocation2 + $0x10] sm:$0xf] %v1045
      %v1048 = vld [vmem:[#allocation2] sm:$0xff]
      %v1049 = vld [vmem:[#allocation2 + $0x8] sm:$0xff]
      %v1050 = vld [vmem:[#allocation2 + $0x10] sm:$0xf]
      %v1051 = vld [vmem:[%s405] sm:$0xf]
      %v1053 = vsel %vm283, %v1051, 0
      %v1056 = vsel %vm287, %v1050, 0
      %1058 = vmatpush.msra.mxu0 0.0
      %1059 = vmatpush.msra.mxu0 0.0
      %1060 = vmatpush.msra.mxu0 0.0
      %1061 = vmatpush.msra.mxu0 0.0
      %1062 = vmatpush.msra.mxu0 0.0
      %1063 = vmatpush.msra.mxu0 0.0
      %1064 = vmatpush.msra.mxu0 0.0
      %1065 = vmatpush.msra.mxu0 0.0
      %1066 = vmatpush.msra.mxu0 0.0
      %1067 = vmatpush.msra.mxu0 0.0
      %1068 = vmatpush.msra.mxu0 0.0
      %1069 = vmatpush.msra.mxu0 0.0
      %1070 = vmatpush.msra.mxu0 0.0
      %1071 = vmatpush.msra.mxu0 %v1056
      %1072 = vmatpush.msra.mxu0 %v1049
      %1073 = vmatpush.msra.mxu0 %v1048
      %1074 = vmatmul.f32.gmra.mxu0 %v1053
      %v1075 = vpop.f32.mrf.mxu0
      %v1076 = vadd.f32 0.0, %v1075
      %1077 = vdwg.mxu0
      %v1078 = vld [vmem:[#allocation3] sm:$0xf]
      %v1079 = vadd.f32 %v1078, %v1076
      %1080 = vst [vmem:[#allocation3] sm:$0xf] %v1079
      %v1081 = vld [vmem:[%s436] sm:$0xf]
      %v1083 = vsel %vm283, %v1081, 0
      %1085 = vmatpush.msra.mxu0 0.0
      %1086 = vmatpush.msra.mxu0 0.0
      %1087 = vmatpush.msra.mxu0 0.0
      %1088 = vmatpush.msra.mxu0 0.0
      %1089 = vmatpush.msra.mxu0 0.0
      %1090 = vmatpush.msra.mxu0 0.0
      %1091 = vmatpush.msra.mxu0 0.0
      %1092 = vmatpush.msra.mxu0 0.0
      %1093 = vmatpush.msra.mxu0 0.0
      %1094 = vmatpush.msra.mxu0 0.0
      %1095 = vmatpush.msra.mxu0 0.0
      %1096 = vmatpush.msra.mxu0 0.0
      %1097 = vmatpush.msra.mxu0 0.0
      %1098 = vmatpush.msra.mxu0 %v1056
      %1099 = vmatpush.msra.mxu0 %v1049
      %1100 = vmatpush.msra.mxu0 %v1048
      %1101 = vmatmul.f32.gmra.mxu0 %v1083
      %v1102 = vpop.f32.mrf.mxu0
      %v1103 = vadd.f32 0.0, %v1102
      %1104 = vdwg.mxu0
      %v1105 = vld [vmem:[#allocation4] sm:$0xf]
      %v1106 = vadd.f32 %v1105, %v1103
      %1107 = vst [vmem:[#allocation4] sm:$0xf] %v1106
      %v1108 = vld [vmem:[%s219 + $0x4] sm:$0xff]
      %1110 = vst [vmem:[#allocation1] ss:$2 sm:$0xff] %v1108
      %v1111 = vld.sshfl [vmem:[#allocation1] sm:$0xff pattern:$0x75316420]
      %v1112 = vld.sshfl [vmem:[#allocation1 + $0x8] sm:$0xff pattern:$0x75316420]
      %1113 = vrot.lane.b32.xlu0 %v1111, 32
      %v1114 = vpop.permute.xlu0 %1113
      %1115 = vrot.lane.b32.xlu0 %v1112, 32
      %v1116 = vpop.permute.xlu0 %1115
      %v1117 = vsel %vm473, %v1114, %v1116
      %1119 = vst [vmem:[#allocation2] sm:$0xf] %v1117
      %v1120 = vld [vmem:[%s219 + $0x4] sm:$0xff]
      %1122 = vst [vmem:[#allocation1] ss:$2 sm:$0xff] %v1120
      %v1123 = vld.sshfl [vmem:[#allocation1] sm:$0xff pattern:$0x75316420]
      %v1124 = vld.sshfl [vmem:[#allocation1 + $0x8] sm:$0xff pattern:$0x75316420]
      %1125 = vrot.lane.b32.xlu0 %v1123, 30
      %v1126 = vpop.permute.xlu0 %1125
      %1127 = vrot.lane.b32.xlu0 %v1124, 30
      %v1128 = vpop.permute.xlu0 %1127
      %v1129 = vsel %vm486, %v1126, %v1128
      %1131 = vst [vmem:[#allocation2 + $0x4] sm:$0xf] %v1129
      %v1132 = vld [vmem:[%s219 + $0x4] sm:$0xff]
      %1134 = vst [vmem:[#allocation1] ss:$2 sm:$0xff] %v1132
      %v1135 = vld.sshfl [vmem:[#allocation1] sm:$0xff pattern:$0x75316420]
      %v1136 = vld.sshfl [vmem:[#allocation1 + $0x8] sm:$0xff pattern:$0x75316420]
      %1137 = vrot.lane.b32.xlu0 %v1135, 28
      %v1138 = vpop.permute.xlu0 %1137
      %1139 = vrot.lane.b32.xlu0 %v1136, 28
      %v1140 = vpop.permute.xlu0 %1139
      %v1141 = vsel %vm499, %v1138, %v1140
      %1143 = vst [vmem:[#allocation2 + $0x8] sm:$0xf] %v1141
      %v1144 = vld [vmem:[%s219 + $0x4] sm:$0xff]
      %1146 = vst [vmem:[#allocation1] ss:$2 sm:$0xff] %v1144
      %v1147 = vld.sshfl [vmem:[#allocation1] sm:$0xff pattern:$0x75316420]
      %v1148 = vld.sshfl [vmem:[#allocation1 + $0x8] sm:$0xff pattern:$0x75316420]
      %1149 = vrot.lane.b32.xlu0 %v1147, 26
      %v1150 = vpop.permute.xlu0 %1149
      %1151 = vrot.lane.b32.xlu0 %v1148, 26
      %v1152 = vpop.permute.xlu0 %1151
      %v1153 = vsel %vm512, %v1150, %v1152
      %1155 = vst [vmem:[#allocation2 + $0xc] sm:$0xf] %v1153
      %v1156 = vld [vmem:[%s219 + $0x4] sm:$0xff]
      %1158 = vst [vmem:[#allocation1] ss:$2 sm:$0xff] %v1156
      %v1159 = vld.sshfl [vmem:[#allocation1] sm:$0xff pattern:$0x75316420]
      %v1160 = vld.sshfl [vmem:[#allocation1 + $0x8] sm:$0xff pattern:$0x75316420]
      %1161 = vrot.lane.b32.xlu0 %v1159, 24
      %v1162 = vpop.permute.xlu0 %1161
      %1163 = vrot.lane.b32.xlu0 %v1160, 24
      %v1164 = vpop.permute.xlu0 %1163
      %v1165 = vsel %vm525, %v1162, %v1164
      %1167 = vst [vmem:[#allocation2 + $0x10] sm:$0xf] %v1165
      %v1168 = vld [vmem:[#allocation2] sm:$0xff]
      %v1169 = vld [vmem:[#allocation2 + $0x8] sm:$0xff]
      %v1170 = vld [vmem:[#allocation2 + $0x10] sm:$0xf]
      %v1171 = vld [vmem:[%s532] sm:$0xf]
      %v1173 = vsel %vm283, %v1171, 0
      %v1176 = vsel %vm287, %v1170, 0
      %1178 = vmatpush.msra.mxu0 0.0
      %1179 = vmatpush.msra.mxu0 0.0
      %1180 = vmatpush.msra.mxu0 0.0
      %1181 = vmatpush.msra.mxu0 0.0
      %1182 = vmatpush.msra.mxu0 0.0
      %1183 = vmatpush.msra.mxu0 0.0
      %1184 = vmatpush.msra.mxu0 0.0
      %1185 = vmatpush.msra.mxu0 0.0
      %1186 = vmatpush.msra.mxu0 0.0
      %1187 = vmatpush.msra.mxu0 0.0
      %1188 = vmatpush.msra.mxu0 0.0
      %1189 = vmatpush.msra.mxu0 0.0
      %1190 = vmatpush.msra.mxu0 0.0
      %1191 = vmatpush.msra.mxu0 %v1176
      %1192 = vmatpush.msra.mxu0 %v1169
      %1193 = vmatpush.msra.mxu0 %v1168
      %1194 = vmatmul.f32.gmra.mxu0 %v1173
      %v1195 = vpop.f32.mrf.mxu0
      %v1196 = vadd.f32 0.0, %v1195
      %1197 = vdwg.mxu0
      %v1198 = vld [vmem:[#allocation3] sm:$0xf]
      %v1199 = vadd.f32 %v1198, %v1196
      %1200 = vst [vmem:[#allocation3] sm:$0xf] %v1199
      %v1201 = vld [vmem:[%s563] sm:$0xf]
      %v1203 = vsel %vm283, %v1201, 0
      %1205 = vmatpush.msra.mxu0 0.0
      %1206 = vmatpush.msra.mxu0 0.0
      %1207 = vmatpush.msra.mxu0 0.0
      %1208 = vmatpush.msra.mxu0 0.0
      %1209 = vmatpush.msra.mxu0 0.0
      %1210 = vmatpush.msra.mxu0 0.0
      %1211 = vmatpush.msra.mxu0 0.0
      %1212 = vmatpush.msra.mxu0 0.0
      %1213 = vmatpush.msra.mxu0 0.0
      %1214 = vmatpush.msra.mxu0 0.0
      %1215 = vmatpush.msra.mxu0 0.0
      %1216 = vmatpush.msra.mxu0 0.0
      %1217 = vmatpush.msra.mxu0 0.0
      %1218 = vmatpush.msra.mxu0 %v1176
      %1219 = vmatpush.msra.mxu0 %v1169
      %1220 = vmatpush.msra.mxu0 %v1168
      %1221 = vmatmul.f32.gmra.mxu0 %v1203
      %v1222 = vpop.f32.mrf.mxu0
      %v1223 = vadd.f32 0.0, %v1222
      %1224 = vdwg.mxu0
      %v1225 = vld [vmem:[#allocation4] sm:$0xf]
      %v1226 = vadd.f32 %v1225, %v1223
      %1227 = vst [vmem:[#allocation4] sm:$0xf] %v1226
      %v1228 = vld [vmem:[%s219 + $0x8] sm:$0xff]
      %1230 = vst [vmem:[#allocation1] ss:$2 sm:$0xff] %v1228
      %v1231 = vld.sshfl [vmem:[#allocation1] sm:$0xff pattern:$0x75316420]
      %v1232 = vld.sshfl [vmem:[#allocation1 + $0x8] sm:$0xff pattern:$0x75316420]
      %1233 = vrot.lane.b32.xlu0 %v1231, 112
      %v1234 = vpop.permute.xlu0 %1233
      %1235 = vrot.lane.b32.xlu0 %v1232, 112
      %v1236 = vpop.permute.xlu0 %1235
      %v1237 = vsel %vm600, %v1234, %v1236
      %1239 = vst [vmem:[#allocation2] sm:$0xf] %v1237
      %v1240 = vld [vmem:[%s219 + $0x8] sm:$0xff]
      %1242 = vst [vmem:[#allocation1] ss:$2 sm:$0xff] %v1240
      %v1243 = vld.sshfl [vmem:[#allocation1] sm:$0xff pattern:$0x75316420]
      %v1244 = vld.sshfl [vmem:[#allocation1 + $0x8] sm:$0xff pattern:$0x75316420]
      %1245 = vrot.lane.b32.xlu0 %v1243, 110
      %v1246 = vpop.permute.xlu0 %1245
      %1247 = vrot.lane.b32.xlu0 %v1244, 110
      %v1248 = vpop.permute.xlu0 %1247
      %v1249 = vsel %vm613, %v1246, %v1248
      %1251 = vst [vmem:[#allocation2 + $0x4] sm:$0xf] %v1249
      %v1252 = vld [vmem:[%s219 + $0x8] sm:$0xff]
      %1254 = vst [vmem:[#allocation1] ss:$2 sm:$0xff] %v1252
      %v1255 = vld.sshfl [vmem:[#allocation1] sm:$0xff pattern:$0x75316420]
      %v1256 = vld.sshfl [vmem:[#allocation1 + $0x8] sm:$0xff pattern:$0x75316420]
      %1257 = vrot.lane.b32.xlu0 %v1255, 108
      %v1258 = vpop.permute.xlu0 %1257
      %1259 = vrot.lane.b32.xlu0 %v1256, 108
      %v1260 = vpop.permute.xlu0 %1259
      %v1261 = vsel %vm626, %v1258, %v1260
      %1263 = vst [vmem:[#allocation2 + $0x8] sm:$0xf] %v1261
      %v1264 = vld [vmem:[%s219 + $0x8] sm:$0xff]
      %1266 = vst [vmem:[#allocation1] ss:$2 sm:$0xff] %v1264
      %v1267 = vld.sshfl [vmem:[#allocation1] sm:$0xff pattern:$0x75316420]
      %v1268 = vld.sshfl [vmem:[#allocation1 + $0x8] sm:$0xff pattern:$0x75316420]
      %1269 = vrot.lane.b32.xlu0 %v1267, 106
      %v1270 = vpop.permute.xlu0 %1269
      %1271 = vrot.lane.b32.xlu0 %v1268, 106
      %v1272 = vpop.permute.xlu0 %1271
      %v1273 = vsel %vm639, %v1270, %v1272
      %1275 = vst [vmem:[#allocation2 + $0xc] sm:$0xf] %v1273
      %v1276 = vld [vmem:[%s219 + $0x8] sm:$0xff]
      %1278 = vst [vmem:[#allocation1] ss:$2 sm:$0xff] %v1276
      %v1279 = vld.sshfl [vmem:[#allocation1] sm:$0xff pattern:$0x75316420]
      %v1280 = vld.sshfl [vmem:[#allocation1 + $0x8] sm:$0xff pattern:$0x75316420]
      %1281 = vrot.lane.b32.xlu0 %v1279, 104
      %v1282 = vpop.permute.xlu0 %1281
      %1283 = vrot.lane.b32.xlu0 %v1280, 104
      %v1284 = vpop.permute.xlu0 %1283
      %v1285 = vsel %vm652, %v1282, %v1284
      %1287 = vst [vmem:[#allocation2 + $0x10] sm:$0xf] %v1285
      %v1288 = vld [vmem:[#allocation2] sm:$0xff]
      %v1289 = vld [vmem:[#allocation2 + $0x8] sm:$0xff]
      %v1290 = vld [vmem:[#allocation2 + $0x10] sm:$0xf]
      %v1291 = vld [vmem:[%s659] sm:$0xf]
      %v1293 = vsel %vm283, %v1291, 0
      %v1296 = vsel %vm287, %v1290, 0
      %1298 = vmatpush.msra.mxu0 0.0
      %1299 = vmatpush.msra.mxu0 0.0
      %1300 = vmatpush.msra.mxu0 0.0
      %1301 = vmatpush.msra.mxu0 0.0
      %1302 = vmatpush.msra.mxu0 0.0
      %1303 = vmatpush.msra.mxu0 0.0
      %1304 = vmatpush.msra.mxu0 0.0
      %1305 = vmatpush.msra.mxu0 0.0
      %1306 = vmatpush.msra.mxu0 0.0
      %1307 = vmatpush.msra.mxu0 0.0
      %1308 = vmatpush.msra.mxu0 0.0
      %1309 = vmatpush.msra.mxu0 0.0
      %1310 = vmatpush.msra.mxu0 0.0
      %1311 = vmatpush.msra.mxu0 %v1296
      %1312 = vmatpush.msra.mxu0 %v1289
      %1313 = vmatpush.msra.mxu0 %v1288
      %1314 = vmatmul.f32.gmra.mxu0 %v1293
      %v1315 = vpop.f32.mrf.mxu0
      %v1316 = vadd.f32 0.0, %v1315
      %1317 = vdwg.mxu0
      %v1318 = vld [vmem:[#allocation3] sm:$0xf]
      %v1319 = vadd.f32 %v1318, %v1316
      %1320 = vst [vmem:[#allocation3] sm:$0xf] %v1319
      %v1321 = vld [vmem:[%s690] sm:$0xf]
      %v1323 = vsel %vm283, %v1321, 0
      %1325 = vmatpush.msra.mxu0 0.0
      %1326 = vmatpush.msra.mxu0 0.0
      %1327 = vmatpush.msra.mxu0 0.0
      %1328 = vmatpush.msra.mxu0 0.0
      %1329 = vmatpush.msra.mxu0 0.0
      %1330 = vmatpush.msra.mxu0 0.0
      %1331 = vmatpush.msra.mxu0 0.0
      %1332 = vmatpush.msra.mxu0 0.0
      %1333 = vmatpush.msra.mxu0 0.0
      %1334 = vmatpush.msra.mxu0 0.0
      %1335 = vmatpush.msra.mxu0 0.0
      %1336 = vmatpush.msra.mxu0 0.0
      %1337 = vmatpush.msra.mxu0 0.0
      %1338 = vmatpush.msra.mxu0 %v1296
      %1339 = vmatpush.msra.mxu0 %v1289
      %1340 = vmatpush.msra.mxu0 %v1288
      %1341 = vmatmul.f32.gmra.mxu0 %v1323
      %v1342 = vpop.f32.mrf.mxu0
      %v1343 = vadd.f32 0.0, %v1342
      %1344 = vdwg.mxu0
      %v1345 = vld [vmem:[#allocation4] sm:$0xf]
      %v1346 = vadd.f32 %v1345, %v1343
      %1347 = vst [vmem:[#allocation4] sm:$0xf] %v1346
      %v1348 = vld [vmem:[%s219 + $0x8] sm:$0xff]
      %1350 = vst [vmem:[#allocation1] ss:$2 sm:$0xff] %v1348
      %v1351 = vld.sshfl [vmem:[#allocation1] sm:$0xff pattern:$0x75316420]
      %v1352 = vld.sshfl [vmem:[#allocation1 + $0x8] sm:$0xff pattern:$0x75316420]
      %1353 = vrot.lane.b32.xlu0 %v1351, 64
      %v1354 = vpop.permute.xlu0 %1353
      %1355 = vrot.lane.b32.xlu0 %v1352, 64
      %v1356 = vpop.permute.xlu0 %1355
      %v1357 = vsel %vm727, %v1354, %v1356
      %1359 = vst [vmem:[#allocation2] sm:$0xf] %v1357
      %v1360 = vld [vmem:[%s219 + $0x8] sm:$0xff]
      %1362 = vst [vmem:[#allocation1] ss:$2 sm:$0xff] %v1360
      %v1363 = vld.sshfl [vmem:[#allocation1] sm:$0xff pattern:$0x75316420]
      %v1364 = vld.sshfl [vmem:[#allocation1 + $0x8] sm:$0xff pattern:$0x75316420]
      %1365 = vrot.lane.b32.xlu0 %v1363, 62
      %v1366 = vpop.permute.xlu0 %1365
      %1367 = vrot.lane.b32.xlu0 %v1364, 62
      %v1368 = vpop.permute.xlu0 %1367
      %v1369 = vsel %vm740, %v1366, %v1368
      %1371 = vst [vmem:[#allocation2 + $0x4] sm:$0xf] %v1369
      %v1372 = vld [vmem:[%s219 + $0x8] sm:$0xff]
      %1374 = vst [vmem:[#allocation1] ss:$2 sm:$0xff] %v1372
      %v1375 = vld.sshfl [vmem:[#allocation1] sm:$0xff pattern:$0x75316420]
      %v1376 = vld.sshfl [vmem:[#allocation1 + $0x8] sm:$0xff pattern:$0x75316420]
      %1377 = vrot.lane.b32.xlu0 %v1375, 60
      %v1378 = vpop.permute.xlu0 %1377
      %1379 = vrot.lane.b32.xlu0 %v1376, 60
      %v1380 = vpop.permute.xlu0 %1379
      %v1381 = vsel %vm753, %v1378, %v1380
      %1383 = vst [vmem:[#allocation2 + $0x8] sm:$0xf] %v1381
      %v1384 = vld [vmem:[%s219 + $0x8] sm:$0xff]
      %1386 = vst [vmem:[#allocation1] ss:$2 sm:$0xff] %v1384
      %v1387 = vld.sshfl [vmem:[#allocation1] sm:$0xff pattern:$0x75316420]
      %v1388 = vld.sshfl [vmem:[#allocation1 + $0x8] sm:$0xff pattern:$0x75316420]
      %1389 = vrot.lane.b32.xlu0 %v1387, 58
      %v1390 = vpop.permute.xlu0 %1389
      %1391 = vrot.lane.b32.xlu0 %v1388, 58
      %v1392 = vpop.permute.xlu0 %1391
      %v1393 = vsel %vm766, %v1390, %v1392
      %1395 = vst [vmem:[#allocation2 + $0xc] sm:$0xf] %v1393
      %v1396 = vld [vmem:[%s219 + $0x8] sm:$0xff]
      %1398 = vst [vmem:[#allocation1] ss:$2 sm:$0xff] %v1396
      %v1399 = vld.sshfl [vmem:[#allocation1] sm:$0xff pattern:$0x75316420]
      %v1400 = vld.sshfl [vmem:[#allocation1 + $0x8] sm:$0xff pattern:$0x75316420]
      %1401 = vrot.lane.b32.xlu0 %v1399, 56
      %v1402 = vpop.permute.xlu0 %1401
      %1403 = vrot.lane.b32.xlu0 %v1400, 56
      %v1404 = vpop.permute.xlu0 %1403
      %v1405 = vsel %vm779, %v1402, %v1404
      %1407 = vst [vmem:[#allocation2 + $0x10] sm:$0xf] %v1405
      %v1408 = vld [vmem:[#allocation2] sm:$0xff]
      %v1409 = vld [vmem:[#allocation2 + $0x8] sm:$0xff]
      %v1410 = vld [vmem:[#allocation2 + $0x10] sm:$0xf]
      %v1411 = vld [vmem:[%s786] sm:$0xf]
      %v1413 = vsel %vm283, %v1411, 0
      %v1416 = vsel %vm287, %v1410, 0
      %1418 = vmatpush.msra.mxu0 0.0
      %1419 = vmatpush.msra.mxu0 0.0
      %1420 = vmatpush.msra.mxu0 0.0
      %1421 = vmatpush.msra.mxu0 0.0
      %1422 = vmatpush.msra.mxu0 0.0
      %1423 = vmatpush.msra.mxu0 0.0
      %1424 = vmatpush.msra.mxu0 0.0
      %1425 = vmatpush.msra.mxu0 0.0
      %1426 = vmatpush.msra.mxu0 0.0
      %1427 = vmatpush.msra.mxu0 0.0
      %1428 = vmatpush.msra.mxu0 0.0
      %1429 = vmatpush.msra.mxu0 0.0
      %1430 = vmatpush.msra.mxu0 0.0
      %1431 = vmatpush.msra.mxu0 %v1416
      %1432 = vmatpush.msra.mxu0 %v1409
      %1433 = vmatpush.msra.mxu0 %v1408
      %1434 = vmatmul.f32.gmra.mxu0 %v1413
      %v1435 = vpop.f32.mrf.mxu0
      %v1436 = vadd.f32 0.0, %v1435
      %1437 = vdwg.mxu0
      %v1438 = vld [vmem:[#allocation3] sm:$0xf]
      %v1439 = vadd.f32 %v1438, %v1436
      %1440 = vst [vmem:[#allocation3] sm:$0xf] %v1439
      %v1441 = vld [vmem:[%s817] sm:$0xf]
      %v1443 = vsel %vm283, %v1441, 0
      %1445 = vmatpush.msra.mxu0 0.0
      %1446 = vmatpush.msra.mxu0 0.0
      %1447 = vmatpush.msra.mxu0 0.0
      %1448 = vmatpush.msra.mxu0 0.0
      %1449 = vmatpush.msra.mxu0 0.0
      %1450 = vmatpush.msra.mxu0 0.0
      %1451 = vmatpush.msra.mxu0 0.0
      %1452 = vmatpush.msra.mxu0 0.0
      %1453 = vmatpush.msra.mxu0 0.0
      %1454 = vmatpush.msra.mxu0 0.0
      %1455 = vmatpush.msra.mxu0 0.0
      %1456 = vmatpush.msra.mxu0 0.0
      %1457 = vmatpush.msra.mxu0 0.0
      %1458 = vmatpush.msra.mxu0 %v1416
      %1459 = vmatpush.msra.mxu0 %v1409
      %1460 = vmatpush.msra.mxu0 %v1408
      %1461 = vmatmul.f32.gmra.mxu0 %v1443
      %v1462 = vpop.f32.mrf.mxu0
      %v1463 = vadd.f32 0.0, %v1462
      %1464 = vdwg.mxu0
      %v1465 = vld [vmem:[#allocation4] sm:$0xf]
      %v1466 = vadd.f32 %v1465, %v1463
      %1467 = vst [vmem:[#allocation4] sm:$0xf] %v1466
      %v1468 = vld [vmem:[#allocation3] sm:$0xf]
      %v1469 = vld [vmem:[%s3] sm:$0xf]
      %1471 = vset.pattern.permute.xlu0 0
      %1472 = vperm.xlu0 %1471, %v1469
      %v1473 = vpop.permute.xlu0 %1472
      %v1475 = vadd.f32 %v1468, %v1473
      %v1476 = vld [vmem:[#allocation4] sm:$0xf]
      %v1477 = vld [vmem:[%s4] sm:$0xf]
      %1479 = vset.pattern.permute.xlu0 0
      %1480 = vperm.xlu0 %1479, %v1477
      %v1481 = vpop.permute.xlu0 %1480
      %v1483 = vadd.f32 %v1476, %v1481
      %v1484 = vxor.u32 %v1483, 2147483648
      %v1485 = vmul.f32 %v1484, 1.442695
      %v1486 = vpow.pop %v1485
      %v1487 = vadd.f32 %v1486, 1.0
      %v1488 = vrcp.pop %v1487
      %v1489 = vmul.f32 %v1487, %v1488
      %v1490 = vsub.f32 1.0, %v1489
      %v1491 = vmul.f32 %v1488, %v1490
      %v1492 = vadd.f32 %v1488, %v1491
      %vm1493 = vweird.f32 %v1487
      %vm1494 = vweird.f32 %v1488
      %vm1495 = vmor %vm1493, %vm1494
      %v1496 = vsel %vm1495, %v1488, %v1492
      %v1497 = vand.u32 2147483647, %v1487
      %vm1498 = vcmp.eq.f32.partialorder %v1497, 8.507059e+37
      %v1499 = vand.u32 %v1487, 2147483648
      %v1500 = vor.u32 1.1754944e-38, %v1499
      %v1501 = vsel %vm1498, %v1500, %v1496
      %v1502 = vmul.f32 1.0, %v1501
      %v1503 = vmul.f32 %v1475, %v1502
      %1504 = vst [vmem:[%s224 + $0x4] sm:$0xf] %v1503
      %v1505 = vld [vmem:[%s219 + $0x8] sm:$0xf]
      %1506 = vst [vmem:[#allocation2] sm:$0xf] %v1505
      %v1507 = vld [vmem:[%s219 + $0x8] sm:$0xff]
      %1509 = vst [vmem:[#allocation1] ss:$2 sm:$0xff] %v1507
      %v1510 = vld.sshfl [vmem:[#allocation1] sm:$0xff pattern:$0x75316420]
      %v1511 = vld.sshfl [vmem:[#allocation1 + $0x8] sm:$0xff pattern:$0x75316420]
      %1512 = vrot.lane.b32.xlu0 %v1510, 126
      %v1513 = vpop.permute.xlu0 %1512
      %1514 = vrot.lane.b32.xlu0 %v1511, 126
      %v1515 = vpop.permute.xlu0 %1514
      %v1516 = vsel %vm236, %v1513, %v1515
      %1518 = vst [vmem:[#allocation2 + $0x4] sm:$0xf] %v1516
      %v1519 = vld [vmem:[%s219 + $0x8] sm:$0xff]
      %1521 = vst [vmem:[#allocation1] ss:$2 sm:$0xff] %v1519
      %v1522 = vld.sshfl [vmem:[#allocation1] sm:$0xff pattern:$0x75316420]
      %v1523 = vld.sshfl [vmem:[#allocation1 + $0x8] sm:$0xff pattern:$0x75316420]
      %1524 = vrot.lane.b32.xlu0 %v1522, 124
      %v1525 = vpop.permute.xlu0 %1524
      %1526 = vrot.lane.b32.xlu0 %v1523, 124
      %v1527 = vpop.permute.xlu0 %1526
      %v1528 = vsel %vm249, %v1525, %v1527
      %1530 = vst [vmem:[#allocation2 + $0x8] sm:$0xf] %v1528
      %v1531 = vld [vmem:[%s219 + $0x8] sm:$0xff]
      %1533 = vst [vmem:[#allocation1] ss:$2 sm:$0xff] %v1531
      %v1534 = vld.sshfl [vmem:[#allocation1] sm:$0xff pattern:$0x75316420]
      %v1535 = vld.sshfl [vmem:[#allocation1 + $0x8] sm:$0xff pattern:$0x75316420]
      %1536 = vrot.lane.b32.xlu0 %v1534, 122
      %v1537 = vpop.permute.xlu0 %1536
      %1538 = vrot.lane.b32.xlu0 %v1535, 122
      %v1539 = vpop.permute.xlu0 %1538
      %v1540 = vsel %vm262, %v1537, %v1539
      %1542 = vst [vmem:[#allocation2 + $0xc] sm:$0xf] %v1540
      %v1543 = vld [vmem:[%s219 + $0x8] sm:$0xff]
      %1545 = vst [vmem:[#allocation1] ss:$2 sm:$0xff] %v1543
      %v1546 = vld.sshfl [vmem:[#allocation1] sm:$0xff pattern:$0x75316420]
      %v1547 = vld.sshfl [vmem:[#allocation1 + $0x8] sm:$0xff pattern:$0x75316420]
      %1548 = vrot.lane.b32.xlu0 %v1546, 120
      %v1549 = vpop.permute.xlu0 %1548
      %1550 = vrot.lane.b32.xlu0 %v1547, 120
      %v1551 = vpop.permute.xlu0 %1550
      %v1552 = vsel %vm275, %v1549, %v1551
      %1554 = vst [vmem:[#allocation2 + $0x10] sm:$0xf] %v1552
      %v1555 = vld [vmem:[#allocation2] sm:$0xff]
      %v1556 = vld [vmem:[#allocation2 + $0x8] sm:$0xff]
      %v1557 = vld [vmem:[#allocation2 + $0x10] sm:$0xf]
      %v1558 = vld [vmem:[%s1] sm:$0xf]
      %v1560 = vsel %vm283, %v1558, 0
      %v1563 = vsel %vm287, %v1557, 0
      %1565 = vmatpush.msra.mxu0 0.0
      %1566 = vmatpush.msra.mxu0 0.0
      %1567 = vmatpush.msra.mxu0 0.0
      %1568 = vmatpush.msra.mxu0 0.0
      %1569 = vmatpush.msra.mxu0 0.0
      %1570 = vmatpush.msra.mxu0 0.0
      %1571 = vmatpush.msra.mxu0 0.0
      %1572 = vmatpush.msra.mxu0 0.0
      %1573 = vmatpush.msra.mxu0 0.0
      %1574 = vmatpush.msra.mxu0 0.0
      %1575 = vmatpush.msra.mxu0 0.0
      %1576 = vmatpush.msra.mxu0 0.0
      %1577 = vmatpush.msra.mxu0 0.0
      %1578 = vmatpush.msra.mxu0 %v1563
      %1579 = vmatpush.msra.mxu0 %v1556
      %1580 = vmatpush.msra.mxu0 %v1555
      %1581 = vmatmul.f32.gmra.mxu0 %v1560
      %v1582 = vpop.f32.mrf.mxu0
      %v1583 = vadd.f32 0.0, %v1582
      %1584 = vdwg.mxu0
      %1585 = vst [vmem:[#allocation3] sm:$0xf] %v1583
      %v1586 = vld [vmem:[%s2] sm:$0xf]
      %v1588 = vsel %vm283, %v1586, 0
      %1590 = vmatpush.msra.mxu0 0.0
      %1591 = vmatpush.msra.mxu0 0.0
      %1592 = vmatpush.msra.mxu0 0.0
      %1593 = vmatpush.msra.mxu0 0.0
      %1594 = vmatpush.msra.mxu0 0.0
      %1595 = vmatpush.msra.mxu0 0.0
      %1596 = vmatpush.msra.mxu0 0.0
      %1597 = vmatpush.msra.mxu0 0.0
      %1598 = vmatpush.msra.mxu0 0.0
      %1599 = vmatpush.msra.mxu0 0.0
      %1600 = vmatpush.msra.mxu0 0.0
      %1601 = vmatpush.msra.mxu0 0.0
      %1602 = vmatpush.msra.mxu0 0.0
      %1603 = vmatpush.msra.mxu0 %v1563
      %1604 = vmatpush.msra.mxu0 %v1556
      %1605 = vmatpush.msra.mxu0 %v1555
      %1606 = vmatmul.f32.gmra.mxu0 %v1588
      %v1607 = vpop.f32.mrf.mxu0
      %v1608 = vadd.f32 0.0, %v1607
      %1609 = vdwg.mxu0
      %1610 = vst [vmem:[#allocation4] sm:$0xf] %v1608
      %v1611 = vld [vmem:[%s219 + $0x8] sm:$0xff]
      %1613 = vst [vmem:[#allocation1] ss:$2 sm:$0xff] %v1611
      %v1614 = vld.sshfl [vmem:[#allocation1] sm:$0xff pattern:$0x75316420]
      %v1615 = vld.sshfl [vmem:[#allocation1 + $0x8] sm:$0xff pattern:$0x75316420]
      %1616 = vrot.lane.b32.xlu0 %v1614, 80
      %v1617 = vpop.permute.xlu0 %1616
      %1618 = vrot.lane.b32.xlu0 %v1615, 80
      %v1619 = vpop.permute.xlu0 %1618
      %v1620 = vsel %vm346, %v1617, %v1619
      %1622 = vst [vmem:[#allocation2] sm:$0xf] %v1620
      %v1623 = vld [vmem:[%s219 + $0x8] sm:$0xff]
      %1625 = vst [vmem:[#allocation1] ss:$2 sm:$0xff] %v1623
      %v1626 = vld.sshfl [vmem:[#allocation1] sm:$0xff pattern:$0x75316420]
      %v1627 = vld.sshfl [vmem:[#allocation1 + $0x8] sm:$0xff pattern:$0x75316420]
      %1628 = vrot.lane.b32.xlu0 %v1626, 78
      %v1629 = vpop.permute.xlu0 %1628
      %1630 = vrot.lane.b32.xlu0 %v1627, 78
      %v1631 = vpop.permute.xlu0 %1630
      %v1632 = vsel %vm359, %v1629, %v1631
      %1634 = vst [vmem:[#allocation2 + $0x4] sm:$0xf] %v1632
      %v1635 = vld [vmem:[%s219 + $0x8] sm:$0xff]
      %1637 = vst [vmem:[#allocation1] ss:$2 sm:$0xff] %v1635
      %v1638 = vld.sshfl [vmem:[#allocation1] sm:$0xff pattern:$0x75316420]
      %v1639 = vld.sshfl [vmem:[#allocation1 + $0x8] sm:$0xff pattern:$0x75316420]
      %1640 = vrot.lane.b32.xlu0 %v1638, 76
      %v1641 = vpop.permute.xlu0 %1640
      %1642 = vrot.lane.b32.xlu0 %v1639, 76
      %v1643 = vpop.permute.xlu0 %1642
      %v1644 = vsel %vm372, %v1641, %v1643
      %1646 = vst [vmem:[#allocation2 + $0x8] sm:$0xf] %v1644
      %v1647 = vld [vmem:[%s219 + $0x8] sm:$0xff]
      %1649 = vst [vmem:[#allocation1] ss:$2 sm:$0xff] %v1647
      %v1650 = vld.sshfl [vmem:[#allocation1] sm:$0xff pattern:$0x75316420]
      %v1651 = vld.sshfl [vmem:[#allocation1 + $0x8] sm:$0xff pattern:$0x75316420]
      %1652 = vrot.lane.b32.xlu0 %v1650, 74
      %v1653 = vpop.permute.xlu0 %1652
      %1654 = vrot.lane.b32.xlu0 %v1651, 74
      %v1655 = vpop.permute.xlu0 %1654
      %v1656 = vsel %vm385, %v1653, %v1655
      %1658 = vst [vmem:[#allocation2 + $0xc] sm:$0xf] %v1656
      %v1659 = vld [vmem:[%s219 + $0x8] sm:$0xff]
      %1661 = vst [vmem:[#allocation1] ss:$2 sm:$0xff] %v1659
      %v1662 = vld.sshfl [vmem:[#allocation1] sm:$0xff pattern:$0x75316420]
      %v1663 = vld.sshfl [vmem:[#allocation1 + $0x8] sm:$0xff pattern:$0x75316420]
      %1664 = vrot.lane.b32.xlu0 %v1662, 72
      %v1665 = vpop.permute.xlu0 %1664
      %1666 = vrot.lane.b32.xlu0 %v1663, 72
      %v1667 = vpop.permute.xlu0 %1666
      %v1668 = vsel %vm398, %v1665, %v1667
      %1670 = vst [vmem:[#allocation2 + $0x10] sm:$0xf] %v1668
      %v1671 = vld [vmem:[#allocation2] sm:$0xff]
      %v1672 = vld [vmem:[#allocation2 + $0x8] sm:$0xff]
      %v1673 = vld [vmem:[#allocation2 + $0x10] sm:$0xf]
      %v1674 = vld [vmem:[%s405] sm:$0xf]
      %v1676 = vsel %vm283, %v1674, 0
      %v1679 = vsel %vm287, %v1673, 0
      %1681 = vmatpush.msra.mxu0 0.0
      %1682 = vmatpush.msra.mxu0 0.0
      %1683 = vmatpush.msra.mxu0 0.0
      %1684 = vmatpush.msra.mxu0 0.0
      %1685 = vmatpush.msra.mxu0 0.0
      %1686 = vmatpush.msra.mxu0 0.0
      %1687 = vmatpush.msra.mxu0 0.0
      %1688 = vmatpush.msra.mxu0 0.0
      %1689 = vmatpush.msra.mxu0 0.0
      %1690 = vmatpush.msra.mxu0 0.0
      %1691 = vmatpush.msra.mxu0 0.0
      %1692 = vmatpush.msra.mxu0 0.0
      %1693 = vmatpush.msra.mxu0 0.0
      %1694 = vmatpush.msra.mxu0 %v1679
      %1695 = vmatpush.msra.mxu0 %v1672
      %1696 = vmatpush.msra.mxu0 %v1671
      %1697 = vmatmul.f32.gmra.mxu0 %v1676
      %v1698 = vpop.f32.mrf.mxu0
      %v1699 = vadd.f32 0.0, %v1698
      %1700 = vdwg.mxu0
      %v1701 = vld [vmem:[#allocation3] sm:$0xf]
      %v1702 = vadd.f32 %v1701, %v1699
      %1703 = vst [vmem:[#allocation3] sm:$0xf] %v1702
      %v1704 = vld [vmem:[%s436] sm:$0xf]
      %v1706 = vsel %vm283, %v1704, 0
      %1708 = vmatpush.msra.mxu0 0.0
      %1709 = vmatpush.msra.mxu0 0.0
      %1710 = vmatpush.msra.mxu0 0.0
      %1711 = vmatpush.msra.mxu0 0.0
      %1712 = vmatpush.msra.mxu0 0.0
      %1713 = vmatpush.msra.mxu0 0.0
      %1714 = vmatpush.msra.mxu0 0.0
      %1715 = vmatpush.msra.mxu0 0.0
      %1716 = vmatpush.msra.mxu0 0.0
      %1717 = vmatpush.msra.mxu0 0.0
      %1718 = vmatpush.msra.mxu0 0.0
      %1719 = vmatpush.msra.mxu0 0.0
      %1720 = vmatpush.msra.mxu0 0.0
      %1721 = vmatpush.msra.mxu0 %v1679
      %1722 = vmatpush.msra.mxu0 %v1672
      %1723 = vmatpush.msra.mxu0 %v1671
      %1724 = vmatmul.f32.gmra.mxu0 %v1706
      %v1725 = vpop.f32.mrf.mxu0
      %v1726 = vadd.f32 0.0, %v1725
      %1727 = vdwg.mxu0
      %v1728 = vld [vmem:[#allocation4] sm:$0xf]
      %v1729 = vadd.f32 %v1728, %v1726
      %1730 = vst [vmem:[#allocation4] sm:$0xf] %v1729
      %v1731 = vld [vmem:[%s219 + $0x8] sm:$0xff]
      %1733 = vst [vmem:[#allocation1] ss:$2 sm:$0xff] %v1731
      %v1734 = vld.sshfl [vmem:[#allocation1] sm:$0xff pattern:$0x75316420]
      %v1735 = vld.sshfl [vmem:[#allocation1 + $0x8] sm:$0xff pattern:$0x75316420]
      %1736 = vrot.lane.b32.xlu0 %v1734, 32
      %v1737 = vpop.permute.xlu0 %1736
      %1738 = vrot.lane.b32.xlu0 %v1735, 32
      %v1739 = vpop.permute.xlu0 %1738
      %v1740 = vsel %vm473, %v1737, %v1739
      %1742 = vst [vmem:[#allocation2] sm:$0xf] %v1740
      %v1743 = vld [vmem:[%s219 + $0x8] sm:$0xff]
      %1745 = vst [vmem:[#allocation1] ss:$2 sm:$0xff] %v1743
      %v1746 = vld.sshfl [vmem:[#allocation1] sm:$0xff pattern:$0x75316420]
      %v1747 = vld.sshfl [vmem:[#allocation1 + $0x8] sm:$0xff pattern:$0x75316420]
      %1748 = vrot.lane.b32.xlu0 %v1746, 30
      %v1749 = vpop.permute.xlu0 %1748
      %1750 = vrot.lane.b32.xlu0 %v1747, 30
      %v1751 = vpop.permute.xlu0 %1750
      %v1752 = vsel %vm486, %v1749, %v1751
      %1754 = vst [vmem:[#allocation2 + $0x4] sm:$0xf] %v1752
      %v1755 = vld [vmem:[%s219 + $0x8] sm:$0xff]
      %1757 = vst [vmem:[#allocation1] ss:$2 sm:$0xff] %v1755
      %v1758 = vld.sshfl [vmem:[#allocation1] sm:$0xff pattern:$0x75316420]
      %v1759 = vld.sshfl [vmem:[#allocation1 + $0x8] sm:$0xff pattern:$0x75316420]
      %1760 = vrot.lane.b32.xlu0 %v1758, 28
      %v1761 = vpop.permute.xlu0 %1760
      %1762 = vrot.lane.b32.xlu0 %v1759, 28
      %v1763 = vpop.permute.xlu0 %1762
      %v1764 = vsel %vm499, %v1761, %v1763
      %1766 = vst [vmem:[#allocation2 + $0x8] sm:$0xf] %v1764
      %v1767 = vld [vmem:[%s219 + $0x8] sm:$0xff]
      %1769 = vst [vmem:[#allocation1] ss:$2 sm:$0xff] %v1767
      %v1770 = vld.sshfl [vmem:[#allocation1] sm:$0xff pattern:$0x75316420]
      %v1771 = vld.sshfl [vmem:[#allocation1 + $0x8] sm:$0xff pattern:$0x75316420]
      %1772 = vrot.lane.b32.xlu0 %v1770, 26
      %v1773 = vpop.permute.xlu0 %1772
      %1774 = vrot.lane.b32.xlu0 %v1771, 26
      %v1775 = vpop.permute.xlu0 %1774
      %v1776 = vsel %vm512, %v1773, %v1775
      %1778 = vst [vmem:[#allocation2 + $0xc] sm:$0xf] %v1776
      %v1779 = vld [vmem:[%s219 + $0x8] sm:$0xff]
      %1781 = vst [vmem:[#allocation1] ss:$2 sm:$0xff] %v1779
      %v1782 = vld.sshfl [vmem:[#allocation1] sm:$0xff pattern:$0x75316420]
      %v1783 = vld.sshfl [vmem:[#allocation1 + $0x8] sm:$0xff pattern:$0x75316420]
      %1784 = vrot.lane.b32.xlu0 %v1782, 24
      %v1785 = vpop.permute.xlu0 %1784
      %1786 = vrot.lane.b32.xlu0 %v1783, 24
      %v1787 = vpop.permute.xlu0 %1786
      %v1788 = vsel %vm525, %v1785, %v1787
      %1790 = vst [vmem:[#allocation2 + $0x10] sm:$0xf] %v1788
      %v1791 = vld [vmem:[#allocation2] sm:$0xff]
      %v1792 = vld [vmem:[#allocation2 + $0x8] sm:$0xff]
      %v1793 = vld [vmem:[#allocation2 + $0x10] sm:$0xf]
      %v1794 = vld [vmem:[%s532] sm:$0xf]
      %v1796 = vsel %vm283, %v1794, 0
      %v1799 = vsel %vm287, %v1793, 0
      %1801 = vmatpush.msra.mxu0 0.0
      %1802 = vmatpush.msra.mxu0 0.0
      %1803 = vmatpush.msra.mxu0 0.0
      %1804 = vmatpush.msra.mxu0 0.0
      %1805 = vmatpush.msra.mxu0 0.0
      %1806 = vmatpush.msra.mxu0 0.0
      %1807 = vmatpush.msra.mxu0 0.0
      %1808 = vmatpush.msra.mxu0 0.0
      %1809 = vmatpush.msra.mxu0 0.0
      %1810 = vmatpush.msra.mxu0 0.0
      %1811 = vmatpush.msra.mxu0 0.0
      %1812 = vmatpush.msra.mxu0 0.0
      %1813 = vmatpush.msra.mxu0 0.0
      %1814 = vmatpush.msra.mxu0 %v1799
      %1815 = vmatpush.msra.mxu0 %v1792
      %1816 = vmatpush.msra.mxu0 %v1791
      %1817 = vmatmul.f32.gmra.mxu0 %v1796
      %v1818 = vpop.f32.mrf.mxu0
      %v1819 = vadd.f32 0.0, %v1818
      %1820 = vdwg.mxu0
      %v1821 = vld [vmem:[#allocation3] sm:$0xf]
      %v1822 = vadd.f32 %v1821, %v1819
      %1823 = vst [vmem:[#allocation3] sm:$0xf] %v1822
      %v1824 = vld [vmem:[%s563] sm:$0xf]
      %v1826 = vsel %vm283, %v1824, 0
      %1828 = vmatpush.msra.mxu0 0.0
      %1829 = vmatpush.msra.mxu0 0.0
      %1830 = vmatpush.msra.mxu0 0.0
      %1831 = vmatpush.msra.mxu0 0.0
      %1832 = vmatpush.msra.mxu0 0.0
      %1833 = vmatpush.msra.mxu0 0.0
      %1834 = vmatpush.msra.mxu0 0.0
      %1835 = vmatpush.msra.mxu0 0.0
      %1836 = vmatpush.msra.mxu0 0.0
      %1837 = vmatpush.msra.mxu0 0.0
      %1838 = vmatpush.msra.mxu0 0.0
      %1839 = vmatpush.msra.mxu0 0.0
      %1840 = vmatpush.msra.mxu0 0.0
      %1841 = vmatpush.msra.mxu0 %v1799
      %1842 = vmatpush.msra.mxu0 %v1792
      %1843 = vmatpush.msra.mxu0 %v1791
      %1844 = vmatmul.f32.gmra.mxu0 %v1826
      %v1845 = vpop.f32.mrf.mxu0
      %v1846 = vadd.f32 0.0, %v1845
      %1847 = vdwg.mxu0
      %v1848 = vld [vmem:[#allocation4] sm:$0xf]
      %v1849 = vadd.f32 %v1848, %v1846
      %1850 = vst [vmem:[#allocation4] sm:$0xf] %v1849
      %v1851 = vld [vmem:[%s219 + $0xc] sm:$0xff]
      %1853 = vst [vmem:[#allocation1] ss:$2 sm:$0xff] %v1851
      %v1854 = vld.sshfl [vmem:[#allocation1] sm:$0xff pattern:$0x75316420]
      %v1855 = vld.sshfl [vmem:[#allocation1 + $0x8] sm:$0xff pattern:$0x75316420]
      %1856 = vrot.lane.b32.xlu0 %v1854, 112
      %v1857 = vpop.permute.xlu0 %1856
      %1858 = vrot.lane.b32.xlu0 %v1855, 112
      %v1859 = vpop.permute.xlu0 %1858
      %v1860 = vsel %vm600, %v1857, %v1859
      %1862 = vst [vmem:[#allocation2] sm:$0xf] %v1860
      %v1863 = vld [vmem:[%s219 + $0xc] sm:$0xff]
      %1865 = vst [vmem:[#allocation1] ss:$2 sm:$0xff] %v1863
      %v1866 = vld.sshfl [vmem:[#allocation1] sm:$0xff pattern:$0x75316420]
      %v1867 = vld.sshfl [vmem:[#allocation1 + $0x8] sm:$0xff pattern:$0x75316420]
      %1868 = vrot.lane.b32.xlu0 %v1866, 110
      %v1869 = vpop.permute.xlu0 %1868
      %1870 = vrot.lane.b32.xlu0 %v1867, 110
      %v1871 = vpop.permute.xlu0 %1870
      %v1872 = vsel %vm613, %v1869, %v1871
      %1874 = vst [vmem:[#allocation2 + $0x4] sm:$0xf] %v1872
      %v1875 = vld [vmem:[%s219 + $0xc] sm:$0xff]
      %1877 = vst [vmem:[#allocation1] ss:$2 sm:$0xff] %v1875
      %v1878 = vld.sshfl [vmem:[#allocation1] sm:$0xff pattern:$0x75316420]
      %v1879 = vld.sshfl [vmem:[#allocation1 + $0x8] sm:$0xff pattern:$0x75316420]
      %1880 = vrot.lane.b32.xlu0 %v1878, 108
      %v1881 = vpop.permute.xlu0 %1880
      %1882 = vrot.lane.b32.xlu0 %v1879, 108
      %v1883 = vpop.permute.xlu0 %1882
      %v1884 = vsel %vm626, %v1881, %v1883
      %1886 = vst [vmem:[#allocation2 + $0x8] sm:$0xf] %v1884
      %v1887 = vld [vmem:[%s219 + $0xc] sm:$0xff]
      %1889 = vst [vmem:[#allocation1] ss:$2 sm:$0xff] %v1887
      %v1890 = vld.sshfl [vmem:[#allocation1] sm:$0xff pattern:$0x75316420]
      %v1891 = vld.sshfl [vmem:[#allocation1 + $0x8] sm:$0xff pattern:$0x75316420]
      %1892 = vrot.lane.b32.xlu0 %v1890, 106
      %v1893 = vpop.permute.xlu0 %1892
      %1894 = vrot.lane.b32.xlu0 %v1891, 106
      %v1895 = vpop.permute.xlu0 %1894
      %v1896 = vsel %vm639, %v1893, %v1895
      %1898 = vst [vmem:[#allocation2 + $0xc] sm:$0xf] %v1896
      %v1899 = vld [vmem:[%s219 + $0xc] sm:$0xff]
      %1901 = vst [vmem:[#allocation1] ss:$2 sm:$0xff] %v1899
      %v1902 = vld.sshfl [vmem:[#allocation1] sm:$0xff pattern:$0x75316420]
      %v1903 = vld.sshfl [vmem:[#allocation1 + $0x8] sm:$0xff pattern:$0x75316420]
      %1904 = vrot.lane.b32.xlu0 %v1902, 104
      %v1905 = vpop.permute.xlu0 %1904
      %1906 = vrot.lane.b32.xlu0 %v1903, 104
      %v1907 = vpop.permute.xlu0 %1906
      %v1908 = vsel %vm652, %v1905, %v1907
      %1910 = vst [vmem:[#allocation2 + $0x10] sm:$0xf] %v1908
      %v1911 = vld [vmem:[#allocation2] sm:$0xff]
      %v1912 = vld [vmem:[#allocation2 + $0x8] sm:$0xff]
      %v1913 = vld [vmem:[#allocation2 + $0x10] sm:$0xf]
      %v1914 = vld [vmem:[%s659] sm:$0xf]
      %v1916 = vsel %vm283, %v1914, 0
      %v1919 = vsel %vm287, %v1913, 0
      %1921 = vmatpush.msra.mxu0 0.0
      %1922 = vmatpush.msra.mxu0 0.0
      %1923 = vmatpush.msra.mxu0 0.0
      %1924 = vmatpush.msra.mxu0 0.0
      %1925 = vmatpush.msra.mxu0 0.0
      %1926 = vmatpush.msra.mxu0 0.0
      %1927 = vmatpush.msra.mxu0 0.0
      %1928 = vmatpush.msra.mxu0 0.0
      %1929 = vmatpush.msra.mxu0 0.0
      %1930 = vmatpush.msra.mxu0 0.0
      %1931 = vmatpush.msra.mxu0 0.0
      %1932 = vmatpush.msra.mxu0 0.0
      %1933 = vmatpush.msra.mxu0 0.0
      %1934 = vmatpush.msra.mxu0 %v1919
      %1935 = vmatpush.msra.mxu0 %v1912
      %1936 = vmatpush.msra.mxu0 %v1911
      %1937 = vmatmul.f32.gmra.mxu0 %v1916
      %v1938 = vpop.f32.mrf.mxu0
      %v1939 = vadd.f32 0.0, %v1938
      %1940 = vdwg.mxu0
      %v1941 = vld [vmem:[#allocation3] sm:$0xf]
      %v1942 = vadd.f32 %v1941, %v1939
      %1943 = vst [vmem:[#allocation3] sm:$0xf] %v1942
      %v1944 = vld [vmem:[%s690] sm:$0xf]
      %v1946 = vsel %vm283, %v1944, 0
      %1948 = vmatpush.msra.mxu0 0.0
      %1949 = vmatpush.msra.mxu0 0.0
      %1950 = vmatpush.msra.mxu0 0.0
      %1951 = vmatpush.msra.mxu0 0.0
      %1952 = vmatpush.msra.mxu0 0.0
      %1953 = vmatpush.msra.mxu0 0.0
      %1954 = vmatpush.msra.mxu0 0.0
      %1955 = vmatpush.msra.mxu0 0.0
      %1956 = vmatpush.msra.mxu0 0.0
      %1957 = vmatpush.msra.mxu0 0.0
      %1958 = vmatpush.msra.mxu0 0.0
      %1959 = vmatpush.msra.mxu0 0.0
      %1960 = vmatpush.msra.mxu0 0.0
      %1961 = vmatpush.msra.mxu0 %v1919
      %1962 = vmatpush.msra.mxu0 %v1912
      %1963 = vmatpush.msra.mxu0 %v1911
      %1964 = vmatmul.f32.gmra.mxu0 %v1946
      %v1965 = vpop.f32.mrf.mxu0
      %v1966 = vadd.f32 0.0, %v1965
      %1967 = vdwg.mxu0
      %v1968 = vld [vmem:[#allocation4] sm:$0xf]
      %v1969 = vadd.f32 %v1968, %v1966
      %1970 = vst [vmem:[#allocation4] sm:$0xf] %v1969
      %v1971 = vld [vmem:[%s219 + $0xc] sm:$0xff]
      %1973 = vst [vmem:[#allocation1] ss:$2 sm:$0xff] %v1971
      %v1974 = vld.sshfl [vmem:[#allocation1] sm:$0xff pattern:$0x75316420]
      %v1975 = vld.sshfl [vmem:[#allocation1 + $0x8] sm:$0xff pattern:$0x75316420]
      %1976 = vrot.lane.b32.xlu0 %v1974, 64
      %v1977 = vpop.permute.xlu0 %1976
      %1978 = vrot.lane.b32.xlu0 %v1975, 64
      %v1979 = vpop.permute.xlu0 %1978
      %v1980 = vsel %vm727, %v1977, %v1979
      %1982 = vst [vmem:[#allocation2] sm:$0xf] %v1980
      %v1983 = vld [vmem:[%s219 + $0xc] sm:$0xff]
      %1985 = vst [vmem:[#allocation1] ss:$2 sm:$0xff] %v1983
      %v1986 = vld.sshfl [vmem:[#allocation1] sm:$0xff pattern:$0x75316420]
      %v1987 = vld.sshfl [vmem:[#allocation1 + $0x8] sm:$0xff pattern:$0x75316420]
      %1988 = vrot.lane.b32.xlu0 %v1986, 62
      %v1989 = vpop.permute.xlu0 %1988
      %1990 = vrot.lane.b32.xlu0 %v1987, 62
      %v1991 = vpop.permute.xlu0 %1990
      %v1992 = vsel %vm740, %v1989, %v1991
      %1994 = vst [vmem:[#allocation2 + $0x4] sm:$0xf] %v1992
      %v1995 = vld [vmem:[%s219 + $0xc] sm:$0xff]
      %1997 = vst [vmem:[#allocation1] ss:$2 sm:$0xff] %v1995
      %v1998 = vld.sshfl [vmem:[#allocation1] sm:$0xff pattern:$0x75316420]
      %v1999 = vld.sshfl [vmem:[#allocation1 + $0x8] sm:$0xff pattern:$0x75316420]
      %2000 = vrot.lane.b32.xlu0 %v1998, 60
      %v2001 = vpop.permute.xlu0 %2000
      %2002 = vrot.lane.b32.xlu0 %v1999, 60
      %v2003 = vpop.permute.xlu0 %2002
      %v2004 = vsel %vm753, %v2001, %v2003
      %2006 = vst [vmem:[#allocation2 + $0x8] sm:$0xf] %v2004
      %v2007 = vld [vmem:[%s219 + $0xc] sm:$0xff]
      %2009 = vst [vmem:[#allocation1] ss:$2 sm:$0xff] %v2007
      %v2010 = vld.sshfl [vmem:[#allocation1] sm:$0xff pattern:$0x75316420]
      %v2011 = vld.sshfl [vmem:[#allocation1 + $0x8] sm:$0xff pattern:$0x75316420]
      %2012 = vrot.lane.b32.xlu0 %v2010, 58
      %v2013 = vpop.permute.xlu0 %2012
      %2014 = vrot.lane.b32.xlu0 %v2011, 58
      %v2015 = vpop.permute.xlu0 %2014
      %v2016 = vsel %vm766, %v2013, %v2015
      %2018 = vst [vmem:[#allocation2 + $0xc] sm:$0xf] %v2016
      %v2019 = vld [vmem:[%s219 + $0xc] sm:$0xff]
      %2021 = vst [vmem:[#allocation1] ss:$2 sm:$0xff] %v2019
      %v2022 = vld.sshfl [vmem:[#allocation1] sm:$0xff pattern:$0x75316420]
      %v2023 = vld.sshfl [vmem:[#allocation1 + $0x8] sm:$0xff pattern:$0x75316420]
      %2024 = vrot.lane.b32.xlu0 %v2022, 56
      %v2025 = vpop.permute.xlu0 %2024
      %2026 = vrot.lane.b32.xlu0 %v2023, 56
      %v2027 = vpop.permute.xlu0 %2026
      %v2028 = vsel %vm779, %v2025, %v2027
      %2030 = vst [vmem:[#allocation2 + $0x10] sm:$0xf] %v2028
      %v2031 = vld [vmem:[#allocation2] sm:$0xff]
      %v2032 = vld [vmem:[#allocation2 + $0x8] sm:$0xff]
      %v2033 = vld [vmem:[#allocation2 + $0x10] sm:$0xf]
      %v2034 = vld [vmem:[%s786] sm:$0xf]
      %v2036 = vsel %vm283, %v2034, 0
      %v2039 = vsel %vm287, %v2033, 0
      %2041 = vmatpush.msra.mxu0 0.0
      %2042 = vmatpush.msra.mxu0 0.0
      %2043 = vmatpush.msra.mxu0 0.0
      %2044 = vmatpush.msra.mxu0 0.0
      %2045 = vmatpush.msra.mxu0 0.0
      %2046 = vmatpush.msra.mxu0 0.0
      %2047 = vmatpush.msra.mxu0 0.0
      %2048 = vmatpush.msra.mxu0 0.0
      %2049 = vmatpush.msra.mxu0 0.0
      %2050 = vmatpush.msra.mxu0 0.0
      %2051 = vmatpush.msra.mxu0 0.0
      %2052 = vmatpush.msra.mxu0 0.0
      %2053 = vmatpush.msra.mxu0 0.0
      %2054 = vmatpush.msra.mxu0 %v2039
      %2055 = vmatpush.msra.mxu0 %v2032
      %2056 = vmatpush.msra.mxu0 %v2031
      %2057 = vmatmul.f32.gmra.mxu0 %v2036
      %v2058 = vpop.f32.mrf.mxu0
      %v2059 = vadd.f32 0.0, %v2058
      %2060 = vdwg.mxu0
      %v2061 = vld [vmem:[#allocation3] sm:$0xf]
      %v2062 = vadd.f32 %v2061, %v2059
      %2063 = vst [vmem:[#allocation3] sm:$0xf] %v2062
      %v2064 = vld [vmem:[%s817] sm:$0xf]
      %v2066 = vsel %vm283, %v2064, 0
      %2068 = vmatpush.msra.mxu0 0.0
      %2069 = vmatpush.msra.mxu0 0.0
      %2070 = vmatpush.msra.mxu0 0.0
      %2071 = vmatpush.msra.mxu0 0.0
      %2072 = vmatpush.msra.mxu0 0.0
      %2073 = vmatpush.msra.mxu0 0.0
      %2074 = vmatpush.msra.mxu0 0.0
      %2075 = vmatpush.msra.mxu0 0.0
      %2076 = vmatpush.msra.mxu0 0.0
      %2077 = vmatpush.msra.mxu0 0.0
      %2078 = vmatpush.msra.mxu0 0.0
      %2079 = vmatpush.msra.mxu0 0.0
      %2080 = vmatpush.msra.mxu0 0.0
      %2081 = vmatpush.msra.mxu0 %v2039
      %2082 = vmatpush.msra.mxu0 %v2032
      %2083 = vmatpush.msra.mxu0 %v2031
      %2084 = vmatmul.f32.gmra.mxu0 %v2066
      %v2085 = vpop.f32.mrf.mxu0
      %v2086 = vadd.f32 0.0, %v2085
      %2087 = vdwg.mxu0
      %v2088 = vld [vmem:[#allocation4] sm:$0xf]
      %v2089 = vadd.f32 %v2088, %v2086
      %2090 = vst [vmem:[#allocation4] sm:$0xf] %v2089
      %v2091 = vld [vmem:[#allocation3] sm:$0xf]
      %v2092 = vld [vmem:[%s3] sm:$0xf]
      %2094 = vset.pattern.permute.xlu0 0
      %2095 = vperm.xlu0 %2094, %v2092
      %v2096 = vpop.permute.xlu0 %2095
      %v2098 = vadd.f32 %v2091, %v2096
      %v2099 = vld [vmem:[#allocation4] sm:$0xf]
      %v2100 = vld [vmem:[%s4] sm:$0xf]
      %2102 = vset.pattern.permute.xlu0 0
      %2103 = vperm.xlu0 %2102, %v2100
      %v2104 = vpop.permute.xlu0 %2103
      %v2106 = vadd.f32 %v2099, %v2104
      %v2107 = vxor.u32 %v2106, 2147483648
      %v2108 = vmul.f32 %v2107, 1.442695
      %v2109 = vpow.pop %v2108
      %v2110 = vadd.f32 %v2109, 1.0
      %v2111 = vrcp.pop %v2110
      %v2112 = vmul.f32 %v2110, %v2111
      %v2113 = vsub.f32 1.0, %v2112
      %v2114 = vmul.f32 %v2111, %v2113
      %v2115 = vadd.f32 %v2111, %v2114
      %vm2116 = vweird.f32 %v2110
      %vm2117 = vweird.f32 %v2111
      %vm2118 = vmor %vm2116, %vm2117
      %v2119 = vsel %vm2118, %v2111, %v2115
      %v2120 = vand.u32 2147483647, %v2110
      %vm2121 = vcmp.eq.f32.partialorder %v2120, 8.507059e+37
      %v2122 = vand.u32 %v2110, 2147483648
      %v2123 = vor.u32 1.1754944e-38, %v2122
      %v2124 = vsel %vm2121, %v2123, %v2119
      %v2125 = vmul.f32 1.0, %v2124
      %v2126 = vmul.f32 %v2098, %v2125
      %2127 = vst [vmem:[%s224 + $0x8] sm:$0xf] %v2126
      %p2128 = scmp.lt.s32.totalorder %s16, 1
      %s2129 = scalar_select %p2128, %s16, 1
      %s2130 = smul.addr %s2129, 3
      %s2131 = smul.addr %s2130, 4
      %s2132 = scalar_lea.vmem %s5, %s2131
      // Predicated region
      $region41: #{covd_forward.3} parent=39 // pred_check
        %p2133 = pneg %p144
      $region42: #{covd_forward.3} parent=39 // pred_check_branch
        %2135 = sbr.rel (%p2133) target = $region44
      $region43: #{covd_forward.3} parent=39 // pred_region
        _
      $region44: #{covd_forward.3} parent=39 // pred_fallthru
        _
    $region40: #{covd_forward.3} parent=5 // pred_fallthru
      _
    %p2136 = scmp.le.s32.totalorder 2, %s11
    // Predicated region
    $region45: #{covd_forward.3} parent=5 // pred_check
      %p2137 = pneg %p2136
    $region46: #{covd_forward.3} parent=5 // pred_check_branch
      %2139 = sbr.rel (%p2137) target = $region48
    $region47: #{covd_forward.3} parent=5 // pred_region
      %s2140 = ssub.s32 %s11, 2
      // Predicated region
      $region49: #{covd_forward.3} parent=47 // pred_check
        %p2141 = pneg %p150
      $region50: #{covd_forward.3} parent=47 // pred_check_branch
        %2143 = sbr.rel (%p2141) target = $region52
      $region51: #{covd_forward.3} parent=47 // pred_region
        %p2144 = scmp.lt.s32.totalorder %s17, 1
        %s2145 = scalar_select %p2144, %s17, 1
        %s2146 = smul.addr %s2145, 3
        %s2147 = smul.addr %s2146, 4
        %s2148 = scalar_lea.vmem %s5, %s2147
      $region52: #{covd_forward.3} parent=47 // pred_fallthru
        _
    $region48: #{covd_forward.3} parent=5 // pred_fallthru
      _
  $region6: #{covd_forward.3} parent=0 // loop_footer
    %s15 = sadd.s32 1, %s11
  $region7: #{covd_forward.3} parent=0 // loop_footer_branch
    %10 = sbr.rel target = $region3
  $region8: #{covd_forward.3} parent=0 // loop_exit
    _

</llo_original>
